<compile_context>
chip_gen: v7x
topology: tpu7x:2x2x1
jax: 0.10.0
libtpu: 0.0.40
codegen_flags: <defaults>
</compile_context>

<pallas_src>
import functools

import jax
import jax.numpy as jnp
from jax.experimental import pallas as pl
from jax.experimental.pallas import tpu as pltpu

# ------------------------- problem sizes (small) -----------------------------
IN_DIM = 8      # cfg.train.in_dim  (nx, latent z/w dim)
OUT_DIM = 16    # cfg.train.out_dim (x dim produced by MappingNet)
HID = 256       # MappingNet hidden width (fixed at 256 in the module)
RHO = 0.1       # cfg.model.rho

N_BATCH = 2
N_SAMPLE = 128  # module uses 1000; kept small for this synthetic run
N_ELITE = 16    # module uses 101
N_ITER = 2      # module uses 5 (train) / 1 (eval)
TEMP = 10.0

_LANE = 128
_TILE_CAP = 2048   # per-tile VMEM ~3 MB of temporaries at 2048 -> far under budget


def _round_up(x, m):
    return ((x + m - 1) // m) * m


@functools.lru_cache(maxsize=1)
def _multi_tensorcore():
    """True only on chips whose TensorCores share one Pallas grid via the
    'parallel' dimension semantics (v7x: 2 TC/chip; v4/v5p megacore)."""
    try:
        kind = jax.devices()[0].device_kind.lower()
    except Exception:
        return False
    if "lite" in kind or "v5e" in kind or "v6e" in kind:
        return False
    return any(t in kind for t in ("v7", "7x", "v4", "v5p"))


def _tiling(R):
    """Pick (R_pad, tile): tile multiple of 128, R_pad % tile == 0.

    Single-TC chips (v5e/v6e): one grid step whenever R fits the cap — no
    per-step overhead and maximal MXU N-fill on the dominant fc2 matmul.
    Multi-TC chips (v7x): 2-way 'parallel' split, but only when each half is
    still >= 256 lanes wide (full 256-wide MXU N-fill per core).
    """
    R_pad = _round_up(max(R, _LANE), _LANE)
    if (_multi_tensorcore() and R_pad >= 512 and R_pad % 256 == 0
            and R_pad // 2 <= _TILE_CAP):
        return R_pad, R_pad // 2
    if R_pad <= _TILE_CAP:
        return R_pad, R_pad
    R_pad = _round_up(R_pad, _TILE_CAP)
    return R_pad, _TILE_CAP


# ------------------------------ Pallas kernels --------------------------------
def _elu(x):
    # exp only on the non-positive branch (avoids inf on large positives).
    return jnp.where(x > 0, x, jnp.exp(jnp.minimum(x, 0.0)) - 1.0)


def _dcem_core(wt_ref, ygt_ref, w1_ref, b1_ref, w2_ref, b2_ref,
               w3_ref, b3_ref, wgp_ref, bgp_ref, rho):
    """Shared forward math. All tensors are (feature, TILE_R) — transposed."""
    w_f32 = wt_ref[...]                                  # (nx, TR) f32
    w_bf = w_f32.astype(jnp.bfloat16)

    # MappingNet: fc1 -> ELU -> fc2 -> ELU -> fc3 -> sigmoid  (weights are W^T,
    # bf16 on the MXU, f32 accumulation; biases are (out, 1) f32 columns).
    h = _elu(jnp.dot(w1_ref[...], w_bf,
                     preferred_element_type=jnp.float32) + b1_ref[...])
    h = _elu(jnp.dot(w2_ref[...], h.astype(jnp.bfloat16),
                     preferred_element_type=jnp.float32) + b2_ref[...])
    x = jax.nn.sigmoid(jnp.dot(w3_ref[...], h.astype(jnp.bfloat16),
                               preferred_element_type=jnp.float32) + b3_ref[...])

    # TODO(synk): model_gp.predict is an external GP surrogate; approximated
    # here by a deterministic linear mean predictor (OUT_DIM -> IN_DIM).
    y_pred = jnp.dot(wgp_ref[...], x.astype(jnp.bfloat16),
                     preferred_element_type=jnp.float32) + bgp_ref[...]

    # re_func_chem energy: nx on sublanes, R on lanes -> fully packed vregs.
    y_F = y_pred - ygt_ref[...]                                       # (nx, TR)
    ss = jnp.sum(w_f32 * w_f32, axis=0, keepdims=True)                # (1, TR)
    inv_norm = jax.lax.rsqrt(ss + 1e-12)                              # EUP rsqrt
    d1 = jnp.sum(y_F * w_f32, axis=0, keepdims=True) * inv_norm       # (1, TR)
    resid = y_F - (d1 * inv_norm) * w_f32
    y_dis = d1 + rho * jnp.sqrt(jnp.sum(resid * resid, axis=0, keepdims=True))
    return y_dis, x, y_pred


def _dcem_energy_kernel(wt_ref, ygt_ref, w1_ref, b1_ref, w2_ref, b2_ref,
                        w3_ref, b3_ref, wgp_ref, bgp_ref, ydis_ref, *, rho):
    y_dis, _, _ = _dcem_core(wt_ref, ygt_ref, w1_ref, b1_ref, w2_ref, b2_ref,
                             w3_ref, b3_ref, wgp_ref, bgp_ref, rho)
    ydis_ref[...] = y_dis


def _dcem_full_kernel(wt_ref, ygt_ref, w1_ref, b1_ref, w2_ref, b2_ref,
                      w3_ref, b3_ref, wgp_ref, bgp_ref,
                      ydis_ref, xt_ref, ypredt_ref, *, rho):
    y_dis, x, y_pred = _dcem_core(wt_ref, ygt_ref, w1_ref, b1_ref, w2_ref,
                                  b2_ref, w3_ref, b3_ref, wgp_ref, bgp_ref, rho)
    ydis_ref[...] = y_dis
    xt_ref[...] = x
    ypredt_ref[...] = y_pred


# ------------------------------ kernel wrapper --------------------------------
def _pallas_energy(w_t, ygt_t, params, *, want_aux, rho=RHO):
    """w_t, ygt_t: (nx, R) f32. Returns y_dis (R,) [and x_t, y_pred_t]."""
    W1t, b1, W2t, b2, W3t, b3, Wgpt, bgp = params
    nx, R = w_t.shape
    R_pad, tile = _tiling(R)
    if R_pad != R:  # only hit on the tiny final call; the hot loop is aligned.
        w_t = jnp.pad(w_t, ((0, 0), (0, R_pad - R)))
        ygt_t = jnp.pad(ygt_t, ((0, 0), (0, R_pad - R)))
    grid = (R_pad // tile,)

    def row_spec(d):
        return pl.BlockSpec((d, tile), lambda i: (0, i))

    def full_spec(a):
        return pl.BlockSpec(a.shape, lambda i: (0, 0))

    in_specs = [row_spec(nx), row_spec(nx)] + [
        full_spec(p) for p in (W1t, b1, W2t, b2, W3t, b3, Wgpt, bgp)]

    if want_aux:
        kernel = functools.partial(_dcem_full_kernel, rho=rho)
        out_shape = (jax.ShapeDtypeStruct((1, R_pad), jnp.float32),
                     jax.ShapeDtypeStruct((OUT_DIM, R_pad), jnp.float32),
                     jax.ShapeDtypeStruct((nx, R_pad), jnp.float32))
        out_specs = (row_spec(1), row_spec(OUT_DIM), row_spec(nx))
    else:
        kernel = functools.partial(_dcem_energy_kernel, rho=rho)
        out_shape = jax.ShapeDtypeStruct((1, R_pad), jnp.float32)
        out_specs = row_spec(1)

    out = pl.pallas_call(
        kernel,
        out_shape=out_shape,
        grid_spec=pltpu.PrefetchScalarGridSpec(
            num_scalar_prefetch=0,
            grid=grid,
            in_specs=in_specs,
            out_specs=out_specs),
        compiler_params=pltpu.CompilerParams(
            dimension_semantics=("parallel",)),
    )(w_t, ygt_t, W1t, b1, W2t, b2, W3t, b3, Wgpt, bgp)

    if want_aux:
        y_dis, x_t, ypred_t = out
        return y_dis[0, :R], x_t[:, :R], ypred_t[:, :R]
    return out[0, :R]


def re_func_chem(w, y_gt, params, rho=RHO):
    """Mirrors DCEM.re_func_chem. w: (..., nx); y_gt: (nx,) or (n_batch, nx)."""
    nx = w.shape[-1]
    lead = w.shape[:-1]
    if y_gt.ndim <= 1:
        y_gt = jnp.broadcast_to(y_gt.reshape(1, -1), (w.shape[0], nx))
    ygt_full = jnp.broadcast_to(
        y_gt.reshape((w.shape[0],) + (1,) * (w.ndim - 2) + (nx,)), w.shape)

    w_t = w.reshape(-1, nx).T.astype(jnp.float32)        # (nx, R)
    ygt_t = ygt_full.reshape(-1, nx).T.astype(jnp.float32)

    y_dis, x_t, ypred_t = _pallas_energy(w_t, ygt_t, params,
                                         want_aux=True, rho=rho)
    y_dis = y_dis.reshape(lead)
    x = x_t.T.reshape(lead + (OUT_DIM,))
    y_pred = ypred_t.T.reshape(lead + (nx,))
    return y_dis, x, y_pred


# ---------------------------- CEM optimization loop --------------------------
def cem_loop(params, y_gt, key, *, n_batch, nx, n_sample, n_elite, n_iter,
             temp, rho=RHO):
    # TODO(synk): the original `dcem()` (Amos & Yarats) uses a differentiable
    # LML soft-top-k and input normalization; approximated here with a hard
    # top-k elite + temperature-softmax reweighting.

    # Draw a lane-aligned number of samples so the hot loop needs NO pad copy;
    # energies are sliced back to the first n_sample columns for elite choice.
    n_draw = _round_up(n_sample, _LANE)
    R = n_batch * n_draw

    # y_gt broadcast built ONCE (loop-invariant), already in the kernel's
    # transposed batch-major (nx, R) layout.
    ygt_t = jnp.broadcast_to(
        y_gt.astype(jnp.float32).T[:, :, None], (nx, n_batch, n_draw)
    ).reshape(nx, R)

    def body(_, carry):
        # mu_t / sigma_t stay in the kernel's (nx, B) layout for the whole
        # loop: samples are drawn directly as (nx, B, n_draw), so feeding the
        # kernel is a free reshape (no per-iteration HBM transpose).
        mu_t, sigma_t, key = carry
        key, sub = jax.random.split(key)
        eps = jax.random.normal(sub, (nx, n_batch, n_draw), jnp.float32)
        w_t3 = mu_t[:, :, None] + sigma_t[:, :, None] * eps   # (nx, B, n_draw)

        # energy-only kernel: x / y_pred are never written back in the loop
        y_dis = _pallas_energy(w_t3.reshape(nx, R), ygt_t, params,
                               want_aux=False, rho=rho)
        y_dis = y_dis.reshape(n_batch, n_draw)[:, :n_sample]

        neg_e, elite_idx = jax.lax.top_k(-y_dis, n_elite)      # lowest energies
        elite = jnp.take_along_axis(w_t3, elite_idx[None, :, :], axis=2)
        wgt = jax.nn.softmax(temp * neg_e, axis=-1)[None, :, :]  # (1,B,n_elite)
        mu_new = jnp.sum(wgt * elite, axis=2)                    # (nx, B)
        var = jnp.sum(wgt * (elite - mu_new[:, :, None]) ** 2, axis=2)
        sigma_new = jnp.sqrt(var + 1e-6)
        return mu_new, sigma_new, key

    mu0 = jnp.zeros((nx, n_batch), jnp.float32)
    sigma0 = jnp.ones((nx, n_batch), jnp.float32)
    mu_t, _, _ = jax.lax.fori_loop(0, n_iter, body, (mu0, sigma0, key))
    mu = mu_t.T                                                  # (B, nx)
    return mu, mu  # (z_pred, w_pred)


def dcem_forward(params, y_gt, key, mode="train"):
    n_iter = N_ITER if mode not in ("eval",) else 1
    _, w_pred = cem_loop(params, y_gt, key,
                         n_batch=y_gt.shape[0], nx=IN_DIM,
                         n_sample=N_SAMPLE, n_elite=N_ELITE,
                         n_iter=n_iter, temp=TEMP)
    _, x_pred, y_pred = re_func_chem(w_pred[:, None, :], y_gt, params)
    return jnp.squeeze(y_pred), w_pred, x_pred


# --------------------------- deterministic params ----------------------------
def _xavier(key, shape):
    fan_in, fan_out = shape
    limit = jnp.sqrt(6.0 / (fan_in + fan_out))
    return jax.random.uniform(key, shape, jnp.float32, -limit, limit)


def init_params(key):
    """Weights stored transposed (out, in) in bf16 for the MXU; biases are
    (out, 1) f32 columns (features live on the sublane axis in the kernel)."""
    k1, k2, k3, k4 = jax.random.split(key, 4)
    W1t = _xavier(k1, (IN_DIM, HID)).T.astype(jnp.bfloat16)     # (HID, nx)
    W2t = _xavier(k2, (HID, HID)).T.astype(jnp.bfloat16)        # (HID, HID)
    W3t = _xavier(k3, (HID, OUT_DIM)).T.astype(jnp.bfloat16)    # (OUT, HID)
    Wgpt = _xavier(k4, (OUT_DIM, IN_DIM)).T.astype(jnp.bfloat16)  # (nx, OUT)
    b1 = jnp.zeros((HID, 1), jnp.float32)
    b2 = jnp.zeros((HID, 1), jnp.float32)
    b3 = jnp.zeros((OUT_DIM, 1), jnp.float32)
    bgp = jnp.zeros((IN_DIM, 1), jnp.float32)
    return (W1t, b1, W2t, b2, W3t, b3, Wgpt, bgp)


# ------------------------------------ main ------------------------------------
if __name__ == "__main__":
    root = jax.random.PRNGKey(0)
    k_param, k_ygt, k_run = jax.random.split(root, 3)

    params = init_params(k_param)
    y_gt = jax.random.uniform(k_ygt, (N_BATCH, IN_DIM), jnp.float32)

    fwd = jax.jit(dcem_forward, static_argnames=("mode",))
    y_pred, w_pred, x_pred = fwd(params, y_gt, k_run, mode="train")
    jax.block_until_ready((y_pred, w_pred, x_pred))

    assert y_pred.shape == (N_BATCH, IN_DIM)
    assert w_pred.shape == (N_BATCH, IN_DIM)
    assert x_pred.shape == (N_BATCH, 1, OUT_DIM)
    assert jnp.all(jnp.isfinite(y_pred)) and jnp.all(jnp.isfinite(w_pred))
    assert jnp.all(jnp.isfinite(x_pred))
    print("KERNEL_OK")
</pallas_src>

<mosaic_0001>
module attributes {stable_mosaic.version = 11 : i64} {
  func.func @_dcem_energy_kernel(%arg0: i32, %arg1: memref<8x256xf32, #tpu.memory_space<vmem>>, %arg2: memref<8x256xf32, #tpu.memory_space<vmem>>, %arg3: memref<256x8xbf16, #tpu.memory_space<vmem>>, %arg4: memref<256x1xf32, #tpu.memory_space<vmem>>, %arg5: memref<256x256xbf16, #tpu.memory_space<vmem>>, %arg6: memref<256x1xf32, #tpu.memory_space<vmem>>, %arg7: memref<16x256xbf16, #tpu.memory_space<vmem>>, %arg8: memref<16x1xf32, #tpu.memory_space<vmem>>, %arg9: memref<8x16xbf16, #tpu.memory_space<vmem>>, %arg10: memref<8x1xf32, #tpu.memory_space<vmem>>, %arg11: memref<1x256xf32, #tpu.memory_space<vmem>>) attributes {dimension_semantics = [#tpu.dimension_semantics<parallel>], iteration_bounds = array<i64: 1>, scalar_prefetch = 0 : i64, scratch_operands = 0 : i64, tpu.core_type = #tpu.core_type<tc>, window_params = [{transform_indices = @transform_0, window_bounds = array<i64: 8, 256>}, {transform_indices = @transform_1, window_bounds = array<i64: 8, 256>}, {pipeline_mode = #tpu.pipeline_mode<synchronous>, transform_indices = @transform_2, window_bounds = array<i64: 256, 8>}, {pipeline_mode = #tpu.pipeline_mode<synchronous>, transform_indices = @transform_3, window_bounds = array<i64: 256, 1>}, {pipeline_mode = #tpu.pipeline_mode<synchronous>, transform_indices = @transform_4, window_bounds = array<i64: 256, 256>}, {pipeline_mode = #tpu.pipeline_mode<synchronous>, transform_indices = @transform_5, window_bounds = array<i64: 256, 1>}, {pipeline_mode = #tpu.pipeline_mode<synchronous>, transform_indices = @transform_6, window_bounds = array<i64: 16, 256>}, {pipeline_mode = #tpu.pipeline_mode<synchronous>, transform_indices = @transform_7, window_bounds = array<i64: 16, 1>}, {pipeline_mode = #tpu.pipeline_mode<synchronous>, transform_indices = @transform_8, window_bounds = array<i64: 8, 16>}, {pipeline_mode = #tpu.pipeline_mode<synchronous>, transform_indices = @transform_9, window_bounds = array<i64: 8, 1>}, {transform_indices = @transform_10, window_bounds = array<i64: 1, 256>}]} {
    %c0 = arith.constant 0 : index
    %c0_0 = arith.constant 0 : index
    %0 = vector.load %arg1[%c0, %c0_0] : memref<8x256xf32, #tpu.memory_space<vmem>>, vector<8x256xf32>
    %1 = arith.truncf %0 : vector<8x256xf32> to vector<8x256xbf16>
    %c0_1 = arith.constant 0 : index
    %c0_2 = arith.constant 0 : index
    %2 = vector.load %arg3[%c0_1, %c0_2] : memref<256x8xbf16, #tpu.memory_space<vmem>>, vector<256x8xbf16>
    %cst = arith.constant dense<0.000000e+00> : vector<256x256xf32>
    %3 = tpu.matmul %2, %1, %cst {dimension_numbers = #tpu.dot_dimension_numbers<[1], [0], [0], [1], [0, 0, 1, 1], [], []>} : vector<256x8xbf16>, vector<8x256xbf16>, vector<256x256xf32> -> vector<256x256xf32>
    %c0_3 = arith.constant 0 : index
    %c0_4 = arith.constant 0 : index
    %4 = vector.load %arg4[%c0_3, %c0_4] : memref<256x1xf32, #tpu.memory_space<vmem>>, vector<256x1xf32>
    %5 = vector.broadcast %4 : vector<256x1xf32> to vector<256x256xf32>
    %6 = arith.addf %3, %5 : vector<256x256xf32>
    %cst_5 = arith.constant 0.000000e+00 : f32
    %7 = vector.broadcast %cst_5 : f32 to vector<256x256xf32>
    %8 = arith.cmpf ogt, %6, %7 : vector<256x256xf32>
    %cst_6 = arith.constant 0.000000e+00 : f32
    %9 = vector.broadcast %cst_6 : f32 to vector<256x256xf32>
    %10 = arith.minimumf %6, %9 : vector<256x256xf32>
    %11 = math.exp %10 : vector<256x256xf32>
    %cst_7 = arith.constant 1.000000e+00 : f32
    %12 = vector.broadcast %cst_7 : f32 to vector<256x256xf32>
    %13 = arith.subf %11, %12 : vector<256x256xf32>
    %14 = arith.select %8, %6, %13 : vector<256x256xi1>, vector<256x256xf32>
    %c0_8 = arith.constant 0 : index
    %c0_9 = arith.constant 0 : index
    %15 = vector.load %arg5[%c0_8, %c0_9] : memref<256x256xbf16, #tpu.memory_space<vmem>>, vector<256x256xbf16>
    %16 = arith.truncf %14 : vector<256x256xf32> to vector<256x256xbf16>
    %cst_10 = arith.constant dense<0.000000e+00> : vector<256x256xf32>
    %17 = tpu.matmul %15, %16, %cst_10 {dimension_numbers = #tpu.dot_dimension_numbers<[1], [0], [0], [1], [0, 0, 1, 1], [], []>} : vector<256x256xbf16>, vector<256x256xbf16>, vector<256x256xf32> -> vector<256x256xf32>
    %c0_11 = arith.constant 0 : index
    %c0_12 = arith.constant 0 : index
    %18 = vector.load %arg6[%c0_11, %c0_12] : memref<256x1xf32, #tpu.memory_space<vmem>>, vector<256x1xf32>
    %19 = vector.broadcast %18 : vector<256x1xf32> to vector<256x256xf32>
    %20 = arith.addf %17, %19 : vector<256x256xf32>
    %cst_13 = arith.constant 0.000000e+00 : f32
    %21 = vector.broadcast %cst_13 : f32 to vector<256x256xf32>
    %22 = arith.cmpf ogt, %20, %21 : vector<256x256xf32>
    %cst_14 = arith.constant 0.000000e+00 : f32
    %23 = vector.broadcast %cst_14 : f32 to vector<256x256xf32>
    %24 = arith.minimumf %20, %23 : vector<256x256xf32>
    %25 = math.exp %24 : vector<256x256xf32>
    %cst_15 = arith.constant 1.000000e+00 : f32
    %26 = vector.broadcast %cst_15 : f32 to vector<256x256xf32>
    %27 = arith.subf %25, %26 : vector<256x256xf32>
    %28 = arith.select %22, %20, %27 : vector<256x256xi1>, vector<256x256xf32>
    %c0_16 = arith.constant 0 : index
    %c0_17 = arith.constant 0 : index
    %29 = vector.load %arg7[%c0_16, %c0_17] : memref<16x256xbf16, #tpu.memory_space<vmem>>, vector<16x256xbf16>
    %30 = arith.truncf %28 : vector<256x256xf32> to vector<256x256xbf16>
    %cst_18 = arith.constant dense<0.000000e+00> : vector<16x256xf32>
    %31 = tpu.matmul %29, %30, %cst_18 {dimension_numbers = #tpu.dot_dimension_numbers<[1], [0], [0], [1], [0, 0, 1, 1], [], []>} : vector<16x256xbf16>, vector<256x256xbf16>, vector<16x256xf32> -> vector<16x256xf32>
    %c0_19 = arith.constant 0 : index
    %c0_20 = arith.constant 0 : index
    %32 = vector.load %arg8[%c0_19, %c0_20] : memref<16x1xf32, #tpu.memory_space<vmem>>, vector<16x1xf32>
    %33 = vector.broadcast %32 : vector<16x1xf32> to vector<16x256xf32>
    %34 = arith.addf %31, %33 : vector<16x256xf32>
    %35 = arith.negf %34 : vector<16x256xf32>
    %36 = math.exp %35 : vector<16x256xf32>
    %cst_21 = arith.constant 1.000000e+00 : f32
    %37 = vector.broadcast %cst_21 : f32 to vector<16x256xf32>
    %38 = arith.addf %37, %36 : vector<16x256xf32>
    %39 = arith.divf %37, %38 : vector<16x256xf32>
    %c0_22 = arith.constant 0 : index
    %c0_23 = arith.constant 0 : index
    %40 = vector.load %arg9[%c0_22, %c0_23] : memref<8x16xbf16, #tpu.memory_space<vmem>>, vector<8x16xbf16>
    %41 = arith.truncf %39 : vector<16x256xf32> to vector<16x256xbf16>
    %cst_24 = arith.constant dense<0.000000e+00> : vector<8x256xf32>
    %42 = tpu.matmul %40, %41, %cst_24 {dimension_numbers = #tpu.dot_dimension_numbers<[1], [0], [0], [1], [0, 0, 1, 1], [], []>} : vector<8x16xbf16>, vector<16x256xbf16>, vector<8x256xf32> -> vector<8x256xf32>
    %c0_25 = arith.constant 0 : index
    %c0_26 = arith.constant 0 : index
    %43 = vector.load %arg10[%c0_25, %c0_26] : memref<8x1xf32, #tpu.memory_space<vmem>>, vector<8x1xf32>
    %44 = vector.broadcast %43 : vector<8x1xf32> to vector<8x256xf32>
    %45 = arith.addf %42, %44 : vector<8x256xf32>
    %c0_27 = arith.constant 0 : index
    %c0_28 = arith.constant 0 : index
    %46 = vector.load %arg2[%c0_27, %c0_28] : memref<8x256xf32, #tpu.memory_space<vmem>>, vector<8x256xf32>
    %47 = arith.subf %45, %46 : vector<8x256xf32>
    %48 = arith.mulf %0, %0 : vector<8x256xf32>
    %cst_29 = arith.constant dense<0.000000e+00> : vector<256xf32>
    %49 = vector.multi_reduction <add>, %48, %cst_29 [0] : vector<8x256xf32> to vector<256xf32>
    %50 = vector.shape_cast %49 : vector<256xf32> to vector<1x256xf32>
    %cst_30 = arith.constant 9.99999996E-13 : f32
    %51 = vector.broadcast %cst_30 : f32 to vector<1x256xf32>
    %52 = arith.addf %50, %51 : vector<1x256xf32>
    %53 = math.rsqrt %52 : vector<1x256xf32>
    %54 = arith.mulf %47, %0 : vector<8x256xf32>
    %cst_31 = arith.constant dense<0.000000e+00> : vector<256xf32>
    %55 = vector.multi_reduction <add>, %54, %cst_31 [0] : vector<8x256xf32> to vector<256xf32>
    %56 = vector.shape_cast %55 : vector<256xf32> to vector<1x256xf32>
    %57 = arith.mulf %56, %53 : vector<1x256xf32>
    %58 = arith.mulf %57, %53 : vector<1x256xf32>
    %59 = vector.broadcast %58 : vector<1x256xf32> to vector<8x256xf32>
    %60 = arith.mulf %59, %0 : vector<8x256xf32>
    %61 = arith.subf %47, %60 : vector<8x256xf32>
    %62 = arith.mulf %61, %61 : vector<8x256xf32>
    %cst_32 = arith.constant dense<0.000000e+00> : vector<256xf32>
    %63 = vector.multi_reduction <add>, %62, %cst_32 [0] : vector<8x256xf32> to vector<256xf32>
    %64 = vector.shape_cast %63 : vector<256xf32> to vector<1x256xf32>
    %65 = math.sqrt %64 : vector<1x256xf32>
    %cst_33 = arith.constant 1.000000e-01 : f32
    %66 = vector.broadcast %cst_33 : f32 to vector<1x256xf32>
    %67 = arith.mulf %66, %65 : vector<1x256xf32>
    %68 = arith.addf %57, %67 : vector<1x256xf32>
    %c0_34 = arith.constant 0 : index
    %c0_35 = arith.constant 0 : index
    %69 = vector.load %arg11[%c0_34, %c0_35] : memref<1x256xf32, #tpu.memory_space<vmem>>, vector<1x256xf32>
    tpu.vector_store %arg11[%c0_34, %c0_35], %68 {strides = array<i32>} : memref<1x256xf32, #tpu.memory_space<vmem>>, vector<1x256xf32>,
    return
  }
  func.func @transform_0(%arg0: i32) -> (i32, i32) {
    %c0_i32 = arith.constant 0 : i32
    %c0_i32_0 = arith.constant 0 : i32
    return %c0_i32, %arg0 : i32, i32
  }
  func.func @transform_1(%arg0: i32) -> (i32, i32) {
    %c0_i32 = arith.constant 0 : i32
    %c0_i32_0 = arith.constant 0 : i32
    return %c0_i32, %arg0 : i32, i32
  }
  func.func @transform_2(%arg0: i32) -> (i32, i32) {
    %c0_i32 = arith.constant 0 : i32
    %c0_i32_0 = arith.constant 0 : i32
    %c0_i32_1 = arith.constant 0 : i32
    return %c0_i32, %c0_i32_0 : i32, i32
  }
  func.func @transform_3(%arg0: i32) -> (i32, i32) {
    %c0_i32 = arith.constant 0 : i32
    %c0_i32_0 = arith.constant 0 : i32
    %c0_i32_1 = arith.constant 0 : i32
    return %c0_i32, %c0_i32_0 : i32, i32
  }
  func.func @transform_4(%arg0: i32) -> (i32, i32) {
    %c0_i32 = arith.constant 0 : i32
    %c0_i32_0 = arith.constant 0 : i32
    %c0_i32_1 = arith.constant 0 : i32
    return %c0_i32, %c0_i32_0 : i32, i32
  }
  func.func @transform_5(%arg0: i32) -> (i32, i32) {
    %c0_i32 = arith.constant 0 : i32
    %c0_i32_0 = arith.constant 0 : i32
    %c0_i32_1 = arith.constant 0 : i32
    return %c0_i32, %c0_i32_0 : i32, i32
  }
  func.func @transform_6(%arg0: i32) -> (i32, i32) {
    %c0_i32 = arith.constant 0 : i32
    %c0_i32_0 = arith.constant 0 : i32
    %c0_i32_1 = arith.constant 0 : i32
    return %c0_i32, %c0_i32_0 : i32, i32
  }
  func.func @transform_7(%arg0: i32) -> (i32, i32) {
    %c0_i32 = arith.constant 0 : i32
    %c0_i32_0 = arith.constant 0 : i32
    %c0_i32_1 = arith.constant 0 : i32
    return %c0_i32, %c0_i32_0 : i32, i32
  }
  func.func @transform_8(%arg0: i32) -> (i32, i32) {
    %c0_i32 = arith.constant 0 : i32
    %c0_i32_0 = arith.constant 0 : i32
    %c0_i32_1 = arith.constant 0 : i32
    return %c0_i32, %c0_i32_0 : i32, i32
  }
  func.func @transform_9(%arg0: i32) -> (i32, i32) {
    %c0_i32 = arith.constant 0 : i32
    %c0_i32_0 = arith.constant 0 : i32
    %c0_i32_1 = arith.constant 0 : i32
    return %c0_i32, %c0_i32_0 : i32, i32
  }
  func.func @transform_10(%arg0: i32) -> (i32, i32) {
    %c0_i32 = arith.constant 0 : i32
    %c0_i32_0 = arith.constant 0 : i32
    return %c0_i32, %arg0 : i32, i32
  }
}

module attributes {stable_mosaic.version = 11 : i64} {
  func.func @_dcem_full_kernel(%arg0: i32, %arg1: memref<8x128xf32, #tpu.memory_space<vmem>>, %arg2: memref<8x128xf32, #tpu.memory_space<vmem>>, %arg3: memref<256x8xbf16, #tpu.memory_space<vmem>>, %arg4: memref<256x1xf32, #tpu.memory_space<vmem>>, %arg5: memref<256x256xbf16, #tpu.memory_space<vmem>>, %arg6: memref<256x1xf32, #tpu.memory_space<vmem>>, %arg7: memref<16x256xbf16, #tpu.memory_space<vmem>>, %arg8: memref<16x1xf32, #tpu.memory_space<vmem>>, %arg9: memref<8x16xbf16, #tpu.memory_space<vmem>>, %arg10: memref<8x1xf32, #tpu.memory_space<vmem>>, %arg11: memref<1x128xf32, #tpu.memory_space<vmem>>, %arg12: memref<16x128xf32, #tpu.memory_space<vmem>>, %arg13: memref<8x128xf32, #tpu.memory_space<vmem>>) attributes {dimension_semantics = [#tpu.dimension_semantics<parallel>], iteration_bounds = array<i64: 1>, scalar_prefetch = 0 : i64, scratch_operands = 0 : i64, tpu.core_type = #tpu.core_type<tc>, window_params = [{transform_indices = @transform_0, window_bounds = array<i64: 8, 128>}, {transform_indices = @transform_1, window_bounds = array<i64: 8, 128>}, {pipeline_mode = #tpu.pipeline_mode<synchronous>, transform_indices = @transform_2, window_bounds = array<i64: 256, 8>}, {pipeline_mode = #tpu.pipeline_mode<synchronous>, transform_indices = @transform_3, window_bounds = array<i64: 256, 1>}, {pipeline_mode = #tpu.pipeline_mode<synchronous>, transform_indices = @transform_4, window_bounds = array<i64: 256, 256>}, {pipeline_mode = #tpu.pipeline_mode<synchronous>, transform_indices = @transform_5, window_bounds = array<i64: 256, 1>}, {pipeline_mode = #tpu.pipeline_mode<synchronous>, transform_indices = @transform_6, window_bounds = array<i64: 16, 256>}, {pipeline_mode = #tpu.pipeline_mode<synchronous>, transform_indices = @transform_7, window_bounds = array<i64: 16, 1>}, {pipeline_mode = #tpu.pipeline_mode<synchronous>, transform_indices = @transform_8, window_bounds = array<i64: 8, 16>}, {pipeline_mode = #tpu.pipeline_mode<synchronous>, transform_indices = @transform_9, window_bounds = array<i64: 8, 1>}, {transform_indices = @transform_10, window_bounds = array<i64: 1, 128>}, {transform_indices = @transform_11, window_bounds = array<i64: 16, 128>}, {transform_indices = @transform_12, window_bounds = array<i64: 8, 128>}]} {
    %c0 = arith.constant 0 : index
    %c0_0 = arith.constant 0 : index
    %0 = vector.load %arg1[%c0, %c0_0] : memref<8x128xf32, #tpu.memory_space<vmem>>, vector<8x128xf32>
    %1 = arith.truncf %0 : vector<8x128xf32> to vector<8x128xbf16>
    %c0_1 = arith.constant 0 : index
    %c0_2 = arith.constant 0 : index
    %2 = vector.load %arg3[%c0_1, %c0_2] : memref<256x8xbf16, #tpu.memory_space<vmem>>, vector<256x8xbf16>
    %cst = arith.constant dense<0.000000e+00> : vector<256x128xf32>
    %3 = tpu.matmul %2, %1, %cst {dimension_numbers = #tpu.dot_dimension_numbers<[1], [0], [0], [1], [0, 0, 1, 1], [], []>} : vector<256x8xbf16>, vector<8x128xbf16>, vector<256x128xf32> -> vector<256x128xf32>
    %c0_3 = arith.constant 0 : index
    %c0_4 = arith.constant 0 : index
    %4 = vector.load %arg4[%c0_3, %c0_4] : memref<256x1xf32, #tpu.memory_space<vmem>>, vector<256x1xf32>
    %5 = vector.broadcast %4 : vector<256x1xf32> to vector<256x128xf32>
    %6 = arith.addf %3, %5 : vector<256x128xf32>
    %cst_5 = arith.constant 0.000000e+00 : f32
    %7 = vector.broadcast %cst_5 : f32 to vector<256x128xf32>
    %8 = arith.cmpf ogt, %6, %7 : vector<256x128xf32>
    %cst_6 = arith.constant 0.000000e+00 : f32
    %9 = vector.broadcast %cst_6 : f32 to vector<256x128xf32>
    %10 = arith.minimumf %6, %9 : vector<256x128xf32>
    %11 = math.exp %10 : vector<256x128xf32>
    %cst_7 = arith.constant 1.000000e+00 : f32
    %12 = vector.broadcast %cst_7 : f32 to vector<256x128xf32>
    %13 = arith.subf %11, %12 : vector<256x128xf32>
    %14 = arith.select %8, %6, %13 : vector<256x128xi1>, vector<256x128xf32>
    %c0_8 = arith.constant 0 : index
    %c0_9 = arith.constant 0 : index
    %15 = vector.load %arg5[%c0_8, %c0_9] : memref<256x256xbf16, #tpu.memory_space<vmem>>, vector<256x256xbf16>
    %16 = arith.truncf %14 : vector<256x128xf32> to vector<256x128xbf16>
    %cst_10 = arith.constant dense<0.000000e+00> : vector<256x128xf32>
    %17 = tpu.matmul %15, %16, %cst_10 {dimension_numbers = #tpu.dot_dimension_numbers<[1], [0], [0], [1], [0, 0, 1, 1], [], []>} : vector<256x256xbf16>, vector<256x128xbf16>, vector<256x128xf32> -> vector<256x128xf32>
    %c0_11 = arith.constant 0 : index
    %c0_12 = arith.constant 0 : index
    %18 = vector.load %arg6[%c0_11, %c0_12] : memref<256x1xf32, #tpu.memory_space<vmem>>, vector<256x1xf32>
    %19 = vector.broadcast %18 : vector<256x1xf32> to vector<256x128xf32>
    %20 = arith.addf %17, %19 : vector<256x128xf32>
    %cst_13 = arith.constant 0.000000e+00 : f32
    %21 = vector.broadcast %cst_13 : f32 to vector<256x128xf32>
    %22 = arith.cmpf ogt, %20, %21 : vector<256x128xf32>
    %cst_14 = arith.constant 0.000000e+00 : f32
    %23 = vector.broadcast %cst_14 : f32 to vector<256x128xf32>
    %24 = arith.minimumf %20, %23 : vector<256x128xf32>
    %25 = math.exp %24 : vector<256x128xf32>
    %cst_15 = arith.constant 1.000000e+00 : f32
    %26 = vector.broadcast %cst_15 : f32 to vector<256x128xf32>
    %27 = arith.subf %25, %26 : vector<256x128xf32>
    %28 = arith.select %22, %20, %27 : vector<256x128xi1>, vector<256x128xf32>
    %c0_16 = arith.constant 0 : index
    %c0_17 = arith.constant 0 : index
    %29 = vector.load %arg7[%c0_16, %c0_17] : memref<16x256xbf16, #tpu.memory_space<vmem>>, vector<16x256xbf16>
    %30 = arith.truncf %28 : vector<256x128xf32> to vector<256x128xbf16>
    %cst_18 = arith.constant dense<0.000000e+00> : vector<16x128xf32>
    %31 = tpu.matmul %29, %30, %cst_18 {dimension_numbers = #tpu.dot_dimension_numbers<[1], [0], [0], [1], [0, 0, 1, 1], [], []>} : vector<16x256xbf16>, vector<256x128xbf16>, vector<16x128xf32> -> vector<16x128xf32>
    %c0_19 = arith.constant 0 : index
    %c0_20 = arith.constant 0 : index
    %32 = vector.load %arg8[%c0_19, %c0_20] : memref<16x1xf32, #tpu.memory_space<vmem>>, vector<16x1xf32>
    %33 = vector.broadcast %32 : vector<16x1xf32> to vector<16x128xf32>
    %34 = arith.addf %31, %33 : vector<16x128xf32>
    %35 = arith.negf %34 : vector<16x128xf32>
    %36 = math.exp %35 : vector<16x128xf32>
    %cst_21 = arith.constant 1.000000e+00 : f32
    %37 = vector.broadcast %cst_21 : f32 to vector<16x128xf32>
    %38 = arith.addf %37, %36 : vector<16x128xf32>
    %39 = arith.divf %37, %38 : vector<16x128xf32>
    %c0_22 = arith.constant 0 : index
    %c0_23 = arith.constant 0 : index
    %40 = vector.load %arg9[%c0_22, %c0_23] : memref<8x16xbf16, #tpu.memory_space<vmem>>, vector<8x16xbf16>
    %41 = arith.truncf %39 : vector<16x128xf32> to vector<16x128xbf16>
    %cst_24 = arith.constant dense<0.000000e+00> : vector<8x128xf32>
    %42 = tpu.matmul %40, %41, %cst_24 {dimension_numbers = #tpu.dot_dimension_numbers<[1], [0], [0], [1], [0, 0, 1, 1], [], []>} : vector<8x16xbf16>, vector<16x128xbf16>, vector<8x128xf32> -> vector<8x128xf32>
    %c0_25 = arith.constant 0 : index
    %c0_26 = arith.constant 0 : index
    %43 = vector.load %arg10[%c0_25, %c0_26] : memref<8x1xf32, #tpu.memory_space<vmem>>, vector<8x1xf32>
    %44 = vector.broadcast %43 : vector<8x1xf32> to vector<8x128xf32>
    %45 = arith.addf %42, %44 : vector<8x128xf32>
    %c0_27 = arith.constant 0 : index
    %c0_28 = arith.constant 0 : index
    %46 = vector.load %arg2[%c0_27, %c0_28] : memref<8x128xf32, #tpu.memory_space<vmem>>, vector<8x128xf32>
    %47 = arith.subf %45, %46 : vector<8x128xf32>
    %48 = arith.mulf %0, %0 : vector<8x128xf32>
    %cst_29 = arith.constant dense<0.000000e+00> : vector<128xf32>
    %49 = vector.multi_reduction <add>, %48, %cst_29 [0] : vector<8x128xf32> to vector<128xf32>
    %50 = vector.shape_cast %49 : vector<128xf32> to vector<1x128xf32>
    %cst_30 = arith.constant 9.99999996E-13 : f32
    %51 = vector.broadcast %cst_30 : f32 to vector<1x128xf32>
    %52 = arith.addf %50, %51 : vector<1x128xf32>
    %53 = math.rsqrt %52 : vector<1x128xf32>
    %54 = arith.mulf %47, %0 : vector<8x128xf32>
    %cst_31 = arith.constant dense<0.000000e+00> : vector<128xf32>
    %55 = vector.multi_reduction <add>, %54, %cst_31 [0] : vector<8x128xf32> to vector<128xf32>
    %56 = vector.shape_cast %55 : vector<128xf32> to vector<1x128xf32>
    %57 = arith.mulf %56, %53 : vector<1x128xf32>
    %58 = arith.mulf %57, %53 : vector<1x128xf32>
    %59 = vector.broadcast %58 : vector<1x128xf32> to vector<8x128xf32>
    %60 = arith.mulf %59, %0 : vector<8x128xf32>
    %61 = arith.subf %47, %60 : vector<8x128xf32>
    %62 = arith.mulf %61, %61 : vector<8x128xf32>
    %cst_32 = arith.constant dense<0.000000e+00> : vector<128xf32>
    %63 = vector.multi_reduction <add>, %62, %cst_32 [0] : vector<8x128xf32> to vector<128xf32>
    %64 = vector.shape_cast %63 : vector<128xf32> to vector<1x128xf32>
    %65 = math.sqrt %64 : vector<1x128xf32>
    %cst_33 = arith.constant 1.000000e-01 : f32
    %66 = vector.broadcast %cst_33 : f32 to vector<1x128xf32>
    %67 = arith.mulf %66, %65 : vector<1x128xf32>
    %68 = arith.addf %57, %67 : vector<1x128xf32>
    %c0_34 = arith.constant 0 : index
    %c0_35 = arith.constant 0 : index
    %69 = vector.load %arg11[%c0_34, %c0_35] : memref<1x128xf32, #tpu.memory_space<vmem>>, vector<1x128xf32>
    tpu.vector_store %arg11[%c0_34, %c0_35], %68 {strides = array<i32>} : memref<1x128xf32, #tpu.memory_space<vmem>>, vector<1x128xf32>,
    %c0_36 = arith.constant 0 : index
    %c0_37 = arith.constant 0 : index
    %70 = vector.load %arg12[%c0_36, %c0_37] : memref<16x128xf32, #tpu.memory_space<vmem>>, vector<16x128xf32>
    tpu.vector_store %arg12[%c0_36, %c0_37], %39 {strides = array<i32>} : memref<16x128xf32, #tpu.memory_space<vmem>>, vector<16x128xf32>,
    %c0_38 = arith.constant 0 : index
    %c0_39 = arith.constant 0 : index
    %71 = vector.load %arg13[%c0_38, %c0_39] : memref<8x128xf32, #tpu.memory_space<vmem>>, vector<8x128xf32>
    tpu.vector_store %arg13[%c0_38, %c0_39], %45 {strides = array<i32>} : memref<8x128xf32, #tpu.memory_space<vmem>>, vector<8x128xf32>,
    return
  }
  func.func @transform_0(%arg0: i32) -> (i32, i32) {
    %c0_i32 = arith.constant 0 : i32
    %c0_i32_0 = arith.constant 0 : i32
    return %c0_i32, %arg0 : i32, i32
  }
  func.func @transform_1(%arg0: i32) -> (i32, i32) {
    %c0_i32 = arith.constant 0 : i32
    %c0_i32_0 = arith.constant 0 : i32
    return %c0_i32, %arg0 : i32, i32
  }
  func.func @transform_2(%arg0: i32) -> (i32, i32) {
    %c0_i32 = arith.constant 0 : i32
    %c0_i32_0 = arith.constant 0 : i32
    %c0_i32_1 = arith.constant 0 : i32
    return %c0_i32, %c0_i32_0 : i32, i32
  }
  func.func @transform_3(%arg0: i32) -> (i32, i32) {
    %c0_i32 = arith.constant 0 : i32
    %c0_i32_0 = arith.constant 0 : i32
    %c0_i32_1 = arith.constant 0 : i32
    return %c0_i32, %c0_i32_0 : i32, i32
  }
  func.func @transform_4(%arg0: i32) -> (i32, i32) {
    %c0_i32 = arith.constant 0 : i32
    %c0_i32_0 = arith.constant 0 : i32
    %c0_i32_1 = arith.constant 0 : i32
    return %c0_i32, %c0_i32_0 : i32, i32
  }
  func.func @transform_5(%arg0: i32) -> (i32, i32) {
    %c0_i32 = arith.constant 0 : i32
    %c0_i32_0 = arith.constant 0 : i32
    %c0_i32_1 = arith.constant 0 : i32
    return %c0_i32, %c0_i32_0 : i32, i32
  }
  func.func @transform_6(%arg0: i32) -> (i32, i32) {
    %c0_i32 = arith.constant 0 : i32
    %c0_i32_0 = arith.constant 0 : i32
    %c0_i32_1 = arith.constant 0 : i32
    return %c0_i32, %c0_i32_0 : i32, i32
  }
  func.func @transform_7(%arg0: i32) -> (i32, i32) {
    %c0_i32 = arith.constant 0 : i32
    %c0_i32_0 = arith.constant 0 : i32
    %c0_i32_1 = arith.constant 0 : i32
    return %c0_i32, %c0_i32_0 : i32, i32
  }
  func.func @transform_8(%arg0: i32) -> (i32, i32) {
    %c0_i32 = arith.constant 0 : i32
    %c0_i32_0 = arith.constant 0 : i32
    %c0_i32_1 = arith.constant 0 : i32
    return %c0_i32, %c0_i32_0 : i32, i32
  }
  func.func @transform_9(%arg0: i32) -> (i32, i32) {
    %c0_i32 = arith.constant 0 : i32
    %c0_i32_0 = arith.constant 0 : i32
    %c0_i32_1 = arith.constant 0 : i32
    return %c0_i32, %c0_i32_0 : i32, i32
  }
  func.func @transform_10(%arg0: i32) -> (i32, i32) {
    %c0_i32 = arith.constant 0 : i32
    %c0_i32_0 = arith.constant 0 : i32
    return %c0_i32, %arg0 : i32, i32
  }
  func.func @transform_11(%arg0: i32) -> (i32, i32) {
    %c0_i32 = arith.constant 0 : i32
    %c0_i32_0 = arith.constant 0 : i32
    return %c0_i32, %arg0 : i32, i32
  }
  func.func @transform_12(%arg0: i32) -> (i32, i32) {
    %c0_i32 = arith.constant 0 : i32
    %c0_i32_0 = arith.constant 0 : i32
    return %c0_i32, %arg0 : i32, i32
  }
}

</mosaic_0001>

<llo_original>
// kernel: custom-call.2
$region0: #{custom-call.2}
  %s0 = inlined_call_operand.vmem [shape: f32[8,2], index: 0, kind: output, shape index: {}]

// kernel: neg.8
$region0: #{neg.8}
  #allocation0 [shape = 's32[1]{0}', space=sflag, size = 0x4, scoped, tag = 'scoped memory for neg.8']
  %s0 = inlined_call_operand.vmem [shape: f32[1,256], index: 0, kind: input, shape index: {}]
  %s1 = inlined_call_operand.vmem [shape: f32[1,256], index: 1, kind: output, shape index: {}]
  %v2 = vld [vmem:[%s0] sm:$0x1]
  %3 = xla_tuple %v2
  %4 = xla_tuple %3
  %v5 = vxor.u32 %v2, 2147483648
  %6 = xla_tuple %v5
  %7 = vst [vmem:[%s1] sm:$0x1] %v5
  %s8 = scalar_lea.vmem %s0, 1
  %v9 = vld [vmem:[%s8] sm:$0x1]
  %10 = xla_tuple %v9
  %11 = xla_tuple %10
  %v12 = vxor.u32 %v9, 2147483648
  %13 = xla_tuple %v12
  %s14 = scalar_lea.vmem %s1, 1
  %15 = vst [vmem:[%s14] sm:$0x1] %v12

// kernel: closed_call.11
$region0: #{closed_call.11}
  #allocation0 [shape = 'u32[]', space=smem, size = 0x4, offset = 0x4, fixed_abs, tag = 'smem constant byte address 0x4 - core index']
  #allocation1 [shape = 'u32[144,128]{1,0:T(1,128)}', space=vmem, size = 0x12000, scoped, tag = 'internal scratch']
  %s0 = inlined_call_operand.vmem [shape: f32[8,256], index: 0, kind: input, shape index: {}]
  %s1 = inlined_call_operand.vmem [shape: f32[8,256], index: 1, kind: input, shape index: {}]
  %s2 = inlined_call_operand.vmem [shape: bf16[256,8], index: 2, kind: input, shape index: {}]
  %s3 = inlined_call_operand.vmem [shape: f32[256,1], index: 3, kind: input, shape index: {}]
  %s4 = inlined_call_operand.vmem [shape: bf16[256,256], index: 4, kind: input, shape index: {}]
  %s5 = inlined_call_operand.vmem [shape: f32[256,1], index: 5, kind: input, shape index: {}]
  %s6 = inlined_call_operand.vmem [shape: bf16[16,256], index: 6, kind: input, shape index: {}]
  %s7 = inlined_call_operand.vmem [shape: f32[16,1], index: 7, kind: input, shape index: {}]
  %s8 = inlined_call_operand.vmem [shape: bf16[8,16], index: 8, kind: input, shape index: {}]
  %s9 = inlined_call_operand.vmem [shape: f32[8,1], index: 9, kind: input, shape index: {}]
  %s10 = inlined_call_operand.vmem [shape: f32[1,256], index: 10, kind: output, shape index: {}]
  %s11 = sld [smem:[#allocation0]]
  $region50: #{closed_call.11} parent=0
    _
  %s13 = ssub.s32 1, %s11
  %s14 = scalar_select 0, %s13, %s11
  // Predicated region
  $region2: #{closed_call.11} parent=0 // pred_check
    _
  $region3: #{closed_call.11} parent=0 // pred_check_branch
    %16 = sbr.rel (0) target = $region5
  $region4: #{closed_call.11} parent=0 // pred_region
    _
  $region5: #{closed_call.11} parent=0 // pred_fallthru
    _
  // Predicated region
  $region6: #{closed_call.11} parent=0 // pred_check
    _
  $region7: #{closed_call.11} parent=0 // pred_check_branch
    %18 = sbr.rel (0) target = $region9
  $region8: #{closed_call.11} parent=0 // pred_region
    _
  $region9: #{closed_call.11} parent=0 // pred_fallthru
    _
  // Predicated region
  $region10: #{closed_call.11} parent=0 // pred_check
    _
  $region11: #{closed_call.11} parent=0 // pred_check_branch
    %20 = sbr.rel (0) target = $region13
  $region12: #{closed_call.11} parent=0 // pred_region
    _
  $region13: #{closed_call.11} parent=0 // pred_fallthru
    _
  // Predicated region
  $region14: #{closed_call.11} parent=0 // pred_check
    _
  $region15: #{closed_call.11} parent=0 // pred_check_branch
    %22 = sbr.rel (0) target = $region17
  $region16: #{closed_call.11} parent=0 // pred_region
    _
  $region17: #{closed_call.11} parent=0 // pred_fallthru
    _
  // Predicated region
  $region18: #{closed_call.11} parent=0 // pred_check
    _
  $region19: #{closed_call.11} parent=0 // pred_check_branch
    %24 = sbr.rel (0) target = $region21
  $region20: #{closed_call.11} parent=0 // pred_region
    _
  $region21: #{closed_call.11} parent=0 // pred_fallthru
    _
  // Predicated region
  $region22: #{closed_call.11} parent=0 // pred_check
    _
  $region23: #{closed_call.11} parent=0 // pred_check_branch
    %26 = sbr.rel (0) target = $region25
  $region24: #{closed_call.11} parent=0 // pred_region
    _
  $region25: #{closed_call.11} parent=0 // pred_fallthru
    _
  // Predicated region
  $region26: #{closed_call.11} parent=0 // pred_check
    _
  $region27: #{closed_call.11} parent=0 // pred_check_branch
    %28 = sbr.rel (0) target = $region29
  $region28: #{closed_call.11} parent=0 // pred_region
    _
  $region29: #{closed_call.11} parent=0 // pred_fallthru
    _
  // Predicated region
  $region30: #{closed_call.11} parent=0 // pred_check
    _
  $region31: #{closed_call.11} parent=0 // pred_check_branch
    %30 = sbr.rel (0) target = $region33
  $region32: #{closed_call.11} parent=0 // pred_region
    _
  $region33: #{closed_call.11} parent=0 // pred_fallthru
    _
  // Predicated region
  $region34: #{closed_call.11} parent=0 // pred_check
    _
  $region35: #{closed_call.11} parent=0 // pred_check_branch
    %32 = sbr.rel (0) target = $region37
  $region36: #{closed_call.11} parent=0 // pred_region
    _
  $region37: #{closed_call.11} parent=0 // pred_fallthru
    _
  // Predicated region
  $region38: #{closed_call.11} parent=0 // pred_check
    _
  $region39: #{closed_call.11} parent=0 // pred_check_branch
    %34 = sbr.rel (0) target = $region41
  $region40: #{closed_call.11} parent=0 // pred_region
    _
  $region41: #{closed_call.11} parent=0 // pred_fallthru
    _
  %v36 = vld [vmem:[%s0] sm:$0xff]
  %v37 = vld [vmem:[%s0 + $0x8] sm:$0xff]
  %v38 = vpack.c.bf16 %v36, %v36
  %v39 = vpack.c.bf16 %v37, %v37
  %v40 = vld [vmem:[%s2] sm:$0xf]
  %v41 = vld [vmem:[%s2 + $0x4] sm:$0xf]
  %v42 = vld [vmem:[%s2 + $0x8] sm:$0xf]
  %v43 = vld [vmem:[%s2 + $0xc] sm:$0xf]
  %v44 = vld [vmem:[%s2 + $0x10] sm:$0xf]
  %v45 = vld [vmem:[%s2 + $0x14] sm:$0xf]
  %v46 = vld [vmem:[%s2 + $0x18] sm:$0xf]
  %v47 = vld [vmem:[%s2 + $0x1c] sm:$0xf]
  %v48 = vld [vmem:[%s2 + $0x20] sm:$0xf]
  %v49 = vld [vmem:[%s2 + $0x24] sm:$0xf]
  %v50 = vld [vmem:[%s2 + $0x28] sm:$0xf]
  %v51 = vld [vmem:[%s2 + $0x2c] sm:$0xf]
  %v52 = vld [vmem:[%s2 + $0x30] sm:$0xf]
  %v53 = vld [vmem:[%s2 + $0x34] sm:$0xf]
  %v54 = vld [vmem:[%s2 + $0x38] sm:$0xf]
  %v55 = vld [vmem:[%s2 + $0x3c] sm:$0xf]
  %v56 = vld [vmem:[%s2 + $0x40] sm:$0xf]
  %v57 = vld [vmem:[%s2 + $0x44] sm:$0xf]
  %v58 = vld [vmem:[%s2 + $0x48] sm:$0xf]
  %v59 = vld [vmem:[%s2 + $0x4c] sm:$0xf]
  %v60 = vld [vmem:[%s2 + $0x50] sm:$0xf]
  %v61 = vld [vmem:[%s2 + $0x54] sm:$0xf]
  %v62 = vld [vmem:[%s2 + $0x58] sm:$0xf]
  %v63 = vld [vmem:[%s2 + $0x5c] sm:$0xf]
  %v64 = vld [vmem:[%s2 + $0x60] sm:$0xf]
  %v65 = vld [vmem:[%s2 + $0x64] sm:$0xf]
  %v66 = vld [vmem:[%s2 + $0x68] sm:$0xf]
  %v67 = vld [vmem:[%s2 + $0x6c] sm:$0xf]
  %v68 = vld [vmem:[%s2 + $0x70] sm:$0xf]
  %v69 = vld [vmem:[%s2 + $0x74] sm:$0xf]
  %v70 = vld [vmem:[%s2 + $0x78] sm:$0xf]
  %v71 = vld [vmem:[%s2 + $0x7c] sm:$0xf]
  %v72 = vld [vmem:[%s3] sm:$0xff]
  %v73 = vld [vmem:[%s3 + $0x8] sm:$0xff]
  %v74 = vld [vmem:[%s3 + $0x10] sm:$0xff]
  %v75 = vld [vmem:[%s3 + $0x18] sm:$0xff]
  %v76 = vld [vmem:[%s3 + $0x20] sm:$0xff]
  %v77 = vld [vmem:[%s3 + $0x28] sm:$0xff]
  %v78 = vld [vmem:[%s3 + $0x30] sm:$0xff]
  %v79 = vld [vmem:[%s3 + $0x38] sm:$0xff]
  %v80 = vld [vmem:[%s3 + $0x40] sm:$0xff]
  %v81 = vld [vmem:[%s3 + $0x48] sm:$0xff]
  %v82 = vld [vmem:[%s3 + $0x50] sm:$0xff]
  %v83 = vld [vmem:[%s3 + $0x58] sm:$0xff]
  %v84 = vld [vmem:[%s3 + $0x60] sm:$0xff]
  %v85 = vld [vmem:[%s3 + $0x68] sm:$0xff]
  %v86 = vld [vmem:[%s3 + $0x70] sm:$0xff]
  %v87 = vld [vmem:[%s3 + $0x78] sm:$0xff]
  %v88 = vld [vmem:[%s3 + $0x80] sm:$0xff]
  %v89 = vld [vmem:[%s3 + $0x88] sm:$0xff]
  %v90 = vld [vmem:[%s3 + $0x90] sm:$0xff]
  %v91 = vld [vmem:[%s3 + $0x98] sm:$0xff]
  %v92 = vld [vmem:[%s3 + $0xa0] sm:$0xff]
  %v93 = vld [vmem:[%s3 + $0xa8] sm:$0xff]
  %v94 = vld [vmem:[%s3 + $0xb0] sm:$0xff]
  %v95 = vld [vmem:[%s3 + $0xb8] sm:$0xff]
  %v96 = vld [vmem:[%s3 + $0xc0] sm:$0xff]
  %v97 = vld [vmem:[%s3 + $0xc8] sm:$0xff]
  %v98 = vld [vmem:[%s3 + $0xd0] sm:$0xff]
  %v99 = vld [vmem:[%s3 + $0xd8] sm:$0xff]
  %v100 = vld [vmem:[%s3 + $0xe0] sm:$0xff]
  %v101 = vld [vmem:[%s3 + $0xe8] sm:$0xff]
  %v102 = vld [vmem:[%s3 + $0xf0] sm:$0xff]
  %v103 = vld [vmem:[%s3 + $0xf8] sm:$0xff]
  %105 = vset.pattern.permute.xlu0 0
  %106 = vperm.xlu0 %105, %v72
  %v107 = vpop.permute.xlu0 %106
  %110 = vset.pattern.permute.xlu0 0
  %111 = vperm.xlu0 %110, %v73
  %v112 = vpop.permute.xlu0 %111
  %115 = vset.pattern.permute.xlu0 0
  %116 = vperm.xlu0 %115, %v74
  %v117 = vpop.permute.xlu0 %116
  %120 = vset.pattern.permute.xlu0 0
  %121 = vperm.xlu0 %120, %v75
  %v122 = vpop.permute.xlu0 %121
  %125 = vset.pattern.permute.xlu0 0
  %126 = vperm.xlu0 %125, %v76
  %v127 = vpop.permute.xlu0 %126
  %130 = vset.pattern.permute.xlu0 0
  %131 = vperm.xlu0 %130, %v77
  %v132 = vpop.permute.xlu0 %131
  %135 = vset.pattern.permute.xlu0 0
  %136 = vperm.xlu0 %135, %v78
  %v137 = vpop.permute.xlu0 %136
  %140 = vset.pattern.permute.xlu0 0
  %141 = vperm.xlu0 %140, %v79
  %v142 = vpop.permute.xlu0 %141
  %145 = vset.pattern.permute.xlu0 0
  %146 = vperm.xlu0 %145, %v80
  %v147 = vpop.permute.xlu0 %146
  %150 = vset.pattern.permute.xlu0 0
  %151 = vperm.xlu0 %150, %v81
  %v152 = vpop.permute.xlu0 %151
  %155 = vset.pattern.permute.xlu0 0
  %156 = vperm.xlu0 %155, %v82
  %v157 = vpop.permute.xlu0 %156
  %160 = vset.pattern.permute.xlu0 0
  %161 = vperm.xlu0 %160, %v83
  %v162 = vpop.permute.xlu0 %161
  %165 = vset.pattern.permute.xlu0 0
  %166 = vperm.xlu0 %165, %v84
  %v167 = vpop.permute.xlu0 %166
  %170 = vset.pattern.permute.xlu0 0
  %171 = vperm.xlu0 %170, %v85
  %v172 = vpop.permute.xlu0 %171
  %175 = vset.pattern.permute.xlu0 0
  %176 = vperm.xlu0 %175, %v86
  %v177 = vpop.permute.xlu0 %176
  %180 = vset.pattern.permute.xlu0 0
  %181 = vperm.xlu0 %180, %v87
  %v182 = vpop.permute.xlu0 %181
  %185 = vset.pattern.permute.xlu0 0
  %186 = vperm.xlu0 %185, %v88
  %v187 = vpop.permute.xlu0 %186
  %190 = vset.pattern.permute.xlu0 0
  %191 = vperm.xlu0 %190, %v89
  %v192 = vpop.permute.xlu0 %191
  %195 = vset.pattern.permute.xlu0 0
  %196 = vperm.xlu0 %195, %v90
  %v197 = vpop.permute.xlu0 %196
  %200 = vset.pattern.permute.xlu0 0
  %201 = vperm.xlu0 %200, %v91
  %v202 = vpop.permute.xlu0 %201
  %205 = vset.pattern.permute.xlu0 0
  %206 = vperm.xlu0 %205, %v92
  %v207 = vpop.permute.xlu0 %206
  %210 = vset.pattern.permute.xlu0 0
  %211 = vperm.xlu0 %210, %v93
  %v212 = vpop.permute.xlu0 %211
  %215 = vset.pattern.permute.xlu0 0
  %216 = vperm.xlu0 %215, %v94
  %v217 = vpop.permute.xlu0 %216
  %220 = vset.pattern.permute.xlu0 0
  %221 = vperm.xlu0 %220, %v95
  %v222 = vpop.permute.xlu0 %221
  %225 = vset.pattern.permute.xlu0 0
  %226 = vperm.xlu0 %225, %v96
  %v227 = vpop.permute.xlu0 %226
  %230 = vset.pattern.permute.xlu0 0
  %231 = vperm.xlu0 %230, %v97
  %v232 = vpop.permute.xlu0 %231
  %235 = vset.pattern.permute.xlu0 0
  %236 = vperm.xlu0 %235, %v98
  %v237 = vpop.permute.xlu0 %236
  %240 = vset.pattern.permute.xlu0 0
  %241 = vperm.xlu0 %240, %v99
  %v242 = vpop.permute.xlu0 %241
  %245 = vset.pattern.permute.xlu0 0
  %246 = vperm.xlu0 %245, %v100
  %v247 = vpop.permute.xlu0 %246
  %250 = vset.pattern.permute.xlu0 0
  %251 = vperm.xlu0 %250, %v101
  %v252 = vpop.permute.xlu0 %251
  %255 = vset.pattern.permute.xlu0 0
  %256 = vperm.xlu0 %255, %v102
  %v257 = vpop.permute.xlu0 %256
  %260 = vset.pattern.permute.xlu0 0
  %261 = vperm.xlu0 %260, %v103
  %v262 = vpop.permute.xlu0 %261
  %v296 = vunpack.c.l.b16 %v40
  %v297 = vunpack.c.l.b16 %v41
  %v298 = vunpack.c.l.b16 %v42
  %v299 = vunpack.c.l.b16 %v43
  %v300 = vunpack.c.l.b16 %v44
  %v301 = vunpack.c.l.b16 %v45
  %v302 = vunpack.c.l.b16 %v46
  %v303 = vunpack.c.l.b16 %v47
  %v304 = vunpack.c.l.b16 %v48
  %v305 = vunpack.c.l.b16 %v49
  %v306 = vunpack.c.l.b16 %v50
  %v307 = vunpack.c.l.b16 %v51
  %v308 = vunpack.c.l.b16 %v52
  %v309 = vunpack.c.l.b16 %v53
  %v310 = vunpack.c.l.b16 %v54
  %v311 = vunpack.c.l.b16 %v55
  %v312 = vunpack.c.l.b16 %v56
  %v313 = vunpack.c.l.b16 %v57
  %v314 = vunpack.c.l.b16 %v58
  %v315 = vunpack.c.l.b16 %v59
  %v316 = vunpack.c.l.b16 %v60
  %v317 = vunpack.c.l.b16 %v61
  %v318 = vunpack.c.l.b16 %v62
  %v319 = vunpack.c.l.b16 %v63
  %v320 = vunpack.c.l.b16 %v64
  %v321 = vunpack.c.l.b16 %v65
  %v322 = vunpack.c.l.b16 %v66
  %v323 = vunpack.c.l.b16 %v67
  %v324 = vunpack.c.l.b16 %v68
  %v325 = vunpack.c.l.b16 %v69
  %v326 = vunpack.c.l.b16 %v70
  %v327 = vunpack.c.l.b16 %v71
  %v328 = vpack.c.b16 %v297, %v296
  %v329 = vpack.c.b16 %v299, %v298
  %v330 = vpack.c.b16 %v301, %v300
  %v331 = vpack.c.b16 %v303, %v302
  %v332 = vpack.c.b16 %v305, %v304
  %v333 = vpack.c.b16 %v307, %v306
  %v334 = vpack.c.b16 %v309, %v308
  %v335 = vpack.c.b16 %v311, %v310
  %v336 = vpack.c.b16 %v313, %v312
  %v337 = vpack.c.b16 %v315, %v314
  %v338 = vpack.c.b16 %v317, %v316
  %v339 = vpack.c.b16 %v319, %v318
  %v340 = vpack.c.b16 %v321, %v320
  %v341 = vpack.c.b16 %v323, %v322
  %v342 = vpack.c.b16 %v325, %v324
  %v343 = vpack.c.b16 %v327, %v326
  %vm344 = vcmask 64512
  %v346 = vsel %vm344, %v328, 0
  %v349 = vsel %vm344, %v329, 0
  %v352 = vsel %vm344, %v330, 0
  %v355 = vsel %vm344, %v331, 0
  %v358 = vsel %vm344, %v332, 0
  %v361 = vsel %vm344, %v333, 0
  %v364 = vsel %vm344, %v334, 0
  %v367 = vsel %vm344, %v335, 0
  %v370 = vsel %vm344, %v336, 0
  %v373 = vsel %vm344, %v337, 0
  %v376 = vsel %vm344, %v338, 0
  %v379 = vsel %vm344, %v339, 0
  %v382 = vsel %vm344, %v340, 0
  %v385 = vsel %vm344, %v341, 0
  %v388 = vsel %vm344, %v342, 0
  %v391 = vsel %vm344, %v343, 0
  %vm393 = vcmask 1043456
  %v395 = vsel %vm393, %v38, 0
  %v398 = vsel %vm393, %v39, 0
  %400 = vmatprep.subr.bf16.mxu0 %v398
  %401 = vmatpush1.bf16.msra.mxu0 %v395
  %402 = vmatprep.subr.bf16.mxu0 0
  %403 = vmatpush1.bf16.msra.mxu0 0
  %404 = vmatprep.subr.bf16.mxu0 0
  %405 = vmatpush1.bf16.msra.mxu0 0
  %406 = vmatprep.subr.bf16.mxu0 0
  %407 = vmatpush1.bf16.msra.mxu0 0
  %408 = vmatprep.subr.bf16.mxu0 0
  %409 = vmatpush1.bf16.msra.mxu0 0
  %410 = vmatprep.subr.bf16.mxu0 0
  %411 = vmatpush1.bf16.msra.mxu0 0
  %412 = vmatprep.subr.bf16.mxu0 0
  %413 = vmatpush1.bf16.msra.mxu0 0
  %414 = vmatprep.subr.bf16.mxu0 0
  %415 = vmatpush1.bf16.msra.mxu0 0
  %416 = vmatprep.subr.bf16.mxu0 0
  %417 = vmatpush1.bf16.msra.mxu0 0
  %418 = vmatprep.subr.bf16.mxu0 0
  %419 = vmatpush1.bf16.msra.mxu0 0
  %420 = vmatprep.subr.bf16.mxu0 0
  %421 = vmatpush1.bf16.msra.mxu0 0
  %422 = vmatprep.subr.bf16.mxu0 0
  %423 = vmatpush1.bf16.msra.mxu0 0
  %424 = vmatprep.subr.bf16.mxu0 0
  %425 = vmatpush1.bf16.msra.mxu0 0
  %426 = vmatprep.subr.bf16.mxu0 0
  %427 = vmatpush1.bf16.msra.mxu0 0
  %428 = vmatprep.subr.bf16.mxu0 0
  %429 = vmatpush1.bf16.msra.mxu0 0
  %430 = vmatprep.subr.bf16.mxu0 0
  %431 = vmatpush1.bf16.msra.mxu0 0
  %432 = vmatprep.mubr.bf16.mxu0 0
  %433 = vmatmul.mubr.bf16.gmra.mrb[0].mxu0 %v346
  %v434 = vpop.f32.mrb[0].mxu0
  %v435 = vadd.f32 %v107, %v434
  %v436 = vpop.f32.mrb[0].mxu0
  %v437 = vadd.f32 %v107, %v436
  %v438 = vpop.f32.mrb[0].mxu0
  %v439 = vadd.f32 %v112, %v438
  %v440 = vpop.f32.mrb[0].mxu0
  %v441 = vadd.f32 %v112, %v440
  %442 = vmatprep.mubr.bf16.mxu0 0
  %443 = vmatmul.mubr.bf16.gmra.mrb[0].mxu0 %v349
  %v444 = vpop.f32.mrb[0].mxu0
  %v445 = vadd.f32 %v117, %v444
  %v446 = vpop.f32.mrb[0].mxu0
  %v447 = vadd.f32 %v117, %v446
  %v448 = vpop.f32.mrb[0].mxu0
  %v449 = vadd.f32 %v122, %v448
  %v450 = vpop.f32.mrb[0].mxu0
  %v451 = vadd.f32 %v122, %v450
  %452 = vmatprep.mubr.bf16.mxu0 0
  %453 = vmatmul.mubr.bf16.gmra.mrb[0].mxu0 %v352
  %v454 = vpop.f32.mrb[0].mxu0
  %v455 = vadd.f32 %v127, %v454
  %v456 = vpop.f32.mrb[0].mxu0
  %v457 = vadd.f32 %v127, %v456
  %v458 = vpop.f32.mrb[0].mxu0
  %v459 = vadd.f32 %v132, %v458
  %v460 = vpop.f32.mrb[0].mxu0
  %v461 = vadd.f32 %v132, %v460
  %462 = vmatprep.mubr.bf16.mxu0 0
  %463 = vmatmul.mubr.bf16.gmra.mrb[0].mxu0 %v355
  %v464 = vpop.f32.mrb[0].mxu0
  %v465 = vadd.f32 %v137, %v464
  %v466 = vpop.f32.mrb[0].mxu0
  %v467 = vadd.f32 %v137, %v466
  %v468 = vpop.f32.mrb[0].mxu0
  %v469 = vadd.f32 %v142, %v468
  %v470 = vpop.f32.mrb[0].mxu0
  %v471 = vadd.f32 %v142, %v470
  %472 = vmatprep.mubr.bf16.mxu0 0
  %473 = vmatmul.mubr.bf16.gmra.mrb[0].mxu0 %v358
  %v474 = vpop.f32.mrb[0].mxu0
  %v475 = vadd.f32 %v147, %v474
  %v476 = vpop.f32.mrb[0].mxu0
  %v477 = vadd.f32 %v147, %v476
  %v478 = vpop.f32.mrb[0].mxu0
  %v479 = vadd.f32 %v152, %v478
  %v480 = vpop.f32.mrb[0].mxu0
  %v481 = vadd.f32 %v152, %v480
  %482 = vmatprep.mubr.bf16.mxu0 0
  %483 = vmatmul.mubr.bf16.gmra.mrb[0].mxu0 %v361
  %v484 = vpop.f32.mrb[0].mxu0
  %v485 = vadd.f32 %v157, %v484
  %v486 = vpop.f32.mrb[0].mxu0
  %v487 = vadd.f32 %v157, %v486
  %v488 = vpop.f32.mrb[0].mxu0
  %v489 = vadd.f32 %v162, %v488
  %v490 = vpop.f32.mrb[0].mxu0
  %v491 = vadd.f32 %v162, %v490
  %492 = vmatprep.mubr.bf16.mxu0 0
  %493 = vmatmul.mubr.bf16.gmra.mrb[0].mxu0 %v364
  %v494 = vpop.f32.mrb[0].mxu0
  %v495 = vadd.f32 %v167, %v494
  %v496 = vpop.f32.mrb[0].mxu0
  %v497 = vadd.f32 %v167, %v496
  %v498 = vpop.f32.mrb[0].mxu0
  %v499 = vadd.f32 %v172, %v498
  %v500 = vpop.f32.mrb[0].mxu0
  %v501 = vadd.f32 %v172, %v500
  %502 = vmatprep.mubr.bf16.mxu0 0
  %503 = vmatmul.mubr.bf16.gmra.mrb[0].mxu0 %v367
  %v504 = vpop.f32.mrb[0].mxu0
  %v505 = vadd.f32 %v177, %v504
  %v506 = vpop.f32.mrb[0].mxu0
  %v507 = vadd.f32 %v177, %v506
  %v508 = vpop.f32.mrb[0].mxu0
  %v509 = vadd.f32 %v182, %v508
  %v510 = vpop.f32.mrb[0].mxu0
  %v511 = vadd.f32 %v182, %v510
  %512 = vmatprep.mubr.bf16.mxu0 0
  %513 = vmatmul.mubr.bf16.gmra.mrb[0].mxu0 %v370
  %v514 = vpop.f32.mrb[0].mxu0
  %v515 = vadd.f32 %v187, %v514
  %v516 = vpop.f32.mrb[0].mxu0
  %v517 = vadd.f32 %v187, %v516
  %v518 = vpop.f32.mrb[0].mxu0
  %v519 = vadd.f32 %v192, %v518
  %v520 = vpop.f32.mrb[0].mxu0
  %v521 = vadd.f32 %v192, %v520
  %522 = vmatprep.mubr.bf16.mxu0 0
  %523 = vmatmul.mubr.bf16.gmra.mrb[0].mxu0 %v373
  %v524 = vpop.f32.mrb[0].mxu0
  %v525 = vadd.f32 %v197, %v524
  %v526 = vpop.f32.mrb[0].mxu0
  %v527 = vadd.f32 %v197, %v526
  %v528 = vpop.f32.mrb[0].mxu0
  %v529 = vadd.f32 %v202, %v528
  %v530 = vpop.f32.mrb[0].mxu0
  %v531 = vadd.f32 %v202, %v530
  %532 = vmatprep.mubr.bf16.mxu0 0
  %533 = vmatmul.mubr.bf16.gmra.mrb[0].mxu0 %v376
  %v534 = vpop.f32.mrb[0].mxu0
  %v535 = vadd.f32 %v207, %v534
  %v536 = vpop.f32.mrb[0].mxu0
  %v537 = vadd.f32 %v207, %v536
  %v538 = vpop.f32.mrb[0].mxu0
  %v539 = vadd.f32 %v212, %v538
  %v540 = vpop.f32.mrb[0].mxu0
  %v541 = vadd.f32 %v212, %v540
  %542 = vmatprep.mubr.bf16.mxu0 0
  %543 = vmatmul.mubr.bf16.gmra.mrb[0].mxu0 %v379
  %v544 = vpop.f32.mrb[0].mxu0
  %v545 = vadd.f32 %v217, %v544
  %v546 = vpop.f32.mrb[0].mxu0
  %v547 = vadd.f32 %v217, %v546
  %v548 = vpop.f32.mrb[0].mxu0
  %v549 = vadd.f32 %v222, %v548
  %v550 = vpop.f32.mrb[0].mxu0
  %v551 = vadd.f32 %v222, %v550
  %552 = vmatprep.mubr.bf16.mxu0 0
  %553 = vmatmul.mubr.bf16.gmra.mrb[0].mxu0 %v382
  %v554 = vpop.f32.mrb[0].mxu0
  %v555 = vadd.f32 %v227, %v554
  %v556 = vpop.f32.mrb[0].mxu0
  %v557 = vadd.f32 %v227, %v556
  %v558 = vpop.f32.mrb[0].mxu0
  %v559 = vadd.f32 %v232, %v558
  %v560 = vpop.f32.mrb[0].mxu0
  %v561 = vadd.f32 %v232, %v560
  %562 = vmatprep.mubr.bf16.mxu0 0
  %563 = vmatmul.mubr.bf16.gmra.mrb[0].mxu0 %v385
  %v564 = vpop.f32.mrb[0].mxu0
  %v565 = vadd.f32 %v237, %v564
  %v566 = vpop.f32.mrb[0].mxu0
  %v567 = vadd.f32 %v237, %v566
  %v568 = vpop.f32.mrb[0].mxu0
  %v569 = vadd.f32 %v242, %v568
  %v570 = vpop.f32.mrb[0].mxu0
  %v571 = vadd.f32 %v242, %v570
  %572 = vmatprep.mubr.bf16.mxu0 0
  %573 = vmatmul.mubr.bf16.gmra.mrb[0].mxu0 %v388
  %v574 = vpop.f32.mrb[0].mxu0
  %v575 = vadd.f32 %v247, %v574
  %v576 = vpop.f32.mrb[0].mxu0
  %v577 = vadd.f32 %v247, %v576
  %v578 = vpop.f32.mrb[0].mxu0
  %v579 = vadd.f32 %v252, %v578
  %v580 = vpop.f32.mrb[0].mxu0
  %v581 = vadd.f32 %v252, %v580
  %582 = vmatprep.mubr.bf16.mxu0 0
  %583 = vmatmul.mubr.bf16.gmra.mrb[0].mxu0 %v391
  %v584 = vpop.f32.mrb[0].mxu0
  %v585 = vadd.f32 %v257, %v584
  %v586 = vpop.f32.mrb[0].mxu0
  %v587 = vadd.f32 %v257, %v586
  %v588 = vpop.f32.mrb[0].mxu0
  %v589 = vadd.f32 %v262, %v588
  %v590 = vpop.f32.mrb[0].mxu0
  %v591 = vadd.f32 %v262, %v590
  %592 = vdwg.mxu0
  %vm593 = vcmp.gt.f32.partialorder %v435, 0.0
  %vm594 = vcmp.gt.f32.partialorder %v437, 0.0
  %vm595 = vcmp.gt.f32.partialorder %v439, 0.0
  %vm596 = vcmp.gt.f32.partialorder %v441, 0.0
  %vm597 = vcmp.gt.f32.partialorder %v445, 0.0
  %vm598 = vcmp.gt.f32.partialorder %v447, 0.0
  %vm599 = vcmp.gt.f32.partialorder %v449, 0.0
  %vm600 = vcmp.gt.f32.partialorder %v451, 0.0
  %vm601 = vcmp.gt.f32.partialorder %v455, 0.0
  %vm602 = vcmp.gt.f32.partialorder %v457, 0.0
  %vm603 = vcmp.gt.f32.partialorder %v459, 0.0
  %vm604 = vcmp.gt.f32.partialorder %v461, 0.0
  %vm605 = vcmp.gt.f32.partialorder %v465, 0.0
  %vm606 = vcmp.gt.f32.partialorder %v467, 0.0
  %vm607 = vcmp.gt.f32.partialorder %v469, 0.0
  %vm608 = vcmp.gt.f32.partialorder %v471, 0.0
  %vm609 = vcmp.gt.f32.partialorder %v475, 0.0
  %vm610 = vcmp.gt.f32.partialorder %v477, 0.0
  %vm611 = vcmp.gt.f32.partialorder %v479, 0.0
  %vm612 = vcmp.gt.f32.partialorder %v481, 0.0
  %vm613 = vcmp.gt.f32.partialorder %v485, 0.0
  %vm614 = vcmp.gt.f32.partialorder %v487, 0.0
  %vm615 = vcmp.gt.f32.partialorder %v489, 0.0
  %vm616 = vcmp.gt.f32.partialorder %v491, 0.0
  %vm617 = vcmp.gt.f32.partialorder %v495, 0.0
  %vm618 = vcmp.gt.f32.partialorder %v497, 0.0
  %vm619 = vcmp.gt.f32.partialorder %v499, 0.0
  %vm620 = vcmp.gt.f32.partialorder %v501, 0.0
  %vm621 = vcmp.gt.f32.partialorder %v505, 0.0
  %vm622 = vcmp.gt.f32.partialorder %v507, 0.0
  %vm623 = vcmp.gt.f32.partialorder %v509, 0.0
  %vm624 = vcmp.gt.f32.partialorder %v511, 0.0
  %vm625 = vcmp.gt.f32.partialorder %v515, 0.0
  %vm626 = vcmp.gt.f32.partialorder %v517, 0.0
  %vm627 = vcmp.gt.f32.partialorder %v519, 0.0
  %vm628 = vcmp.gt.f32.partialorder %v521, 0.0
  %vm629 = vcmp.gt.f32.partialorder %v525, 0.0
  %vm630 = vcmp.gt.f32.partialorder %v527, 0.0
  %vm631 = vcmp.gt.f32.partialorder %v529, 0.0
  %vm632 = vcmp.gt.f32.partialorder %v531, 0.0
  %vm633 = vcmp.gt.f32.partialorder %v535, 0.0
  %vm634 = vcmp.gt.f32.partialorder %v537, 0.0
  %vm635 = vcmp.gt.f32.partialorder %v539, 0.0
  %vm636 = vcmp.gt.f32.partialorder %v541, 0.0
  %vm637 = vcmp.gt.f32.partialorder %v545, 0.0
  %vm638 = vcmp.gt.f32.partialorder %v547, 0.0
  %vm639 = vcmp.gt.f32.partialorder %v549, 0.0
  %vm640 = vcmp.gt.f32.partialorder %v551, 0.0
  %vm641 = vcmp.gt.f32.partialorder %v555, 0.0
  %vm642 = vcmp.gt.f32.partialorder %v557, 0.0
  %vm643 = vcmp.gt.f32.partialorder %v559, 0.0
  %vm644 = vcmp.gt.f32.partialorder %v561, 0.0
  %vm645 = vcmp.gt.f32.partialorder %v565, 0.0
  %vm646 = vcmp.gt.f32.partialorder %v567, 0.0
  %vm647 = vcmp.gt.f32.partialorder %v569, 0.0
  %vm648 = vcmp.gt.f32.partialorder %v571, 0.0
  %vm649 = vcmp.gt.f32.partialorder %v575, 0.0
  %vm650 = vcmp.gt.f32.partialorder %v577, 0.0
  %vm651 = vcmp.gt.f32.partialorder %v579, 0.0
  %vm652 = vcmp.gt.f32.partialorder %v581, 0.0
  %vm653 = vcmp.gt.f32.partialorder %v585, 0.0
  %vm654 = vcmp.gt.f32.partialorder %v587, 0.0
  %vm655 = vcmp.gt.f32.partialorder %v589, 0.0
  %vm656 = vcmp.gt.f32.partialorder %v591, 0.0
  %v657 = vmin.f32 %v435, 0.0
  %v658 = vmin.f32 %v437, 0.0
  %v659 = vmin.f32 %v439, 0.0
  %v660 = vmin.f32 %v441, 0.0
  %v661 = vmin.f32 %v445, 0.0
  %v662 = vmin.f32 %v447, 0.0
  %v663 = vmin.f32 %v449, 0.0
  %v664 = vmin.f32 %v451, 0.0
  %v665 = vmin.f32 %v455, 0.0
  %v666 = vmin.f32 %v457, 0.0
  %v667 = vmin.f32 %v459, 0.0
  %v668 = vmin.f32 %v461, 0.0
  %v669 = vmin.f32 %v465, 0.0
  %v670 = vmin.f32 %v467, 0.0
  %v671 = vmin.f32 %v469, 0.0
  %v672 = vmin.f32 %v471, 0.0
  %v673 = vmin.f32 %v475, 0.0
  %v674 = vmin.f32 %v477, 0.0
  %v675 = vmin.f32 %v479, 0.0
  %v676 = vmin.f32 %v481, 0.0
  %v677 = vmin.f32 %v485, 0.0
  %v678 = vmin.f32 %v487, 0.0
  %v679 = vmin.f32 %v489, 0.0
  %v680 = vmin.f32 %v491, 0.0
  %v681 = vmin.f32 %v495, 0.0
  %v682 = vmin.f32 %v497, 0.0
  %v683 = vmin.f32 %v499, 0.0
  %v684 = vmin.f32 %v501, 0.0
  %v685 = vmin.f32 %v505, 0.0
  %v686 = vmin.f32 %v507, 0.0
  %v687 = vmin.f32 %v509, 0.0
  %v688 = vmin.f32 %v511, 0.0
  %v689 = vmin.f32 %v515, 0.0
  %v690 = vmin.f32 %v517, 0.0
  %v691 = vmin.f32 %v519, 0.0
  %v692 = vmin.f32 %v521, 0.0
  %v693 = vmin.f32 %v525, 0.0
  %v694 = vmin.f32 %v527, 0.0
  %v695 = vmin.f32 %v529, 0.0
  %v696 = vmin.f32 %v531, 0.0
  %v697 = vmin.f32 %v535, 0.0
  %v698 = vmin.f32 %v537, 0.0
  %v699 = vmin.f32 %v539, 0.0
  %v700 = vmin.f32 %v541, 0.0
  %v701 = vmin.f32 %v545, 0.0
  %v702 = vmin.f32 %v547, 0.0
  %v703 = vmin.f32 %v549, 0.0
  %v704 = vmin.f32 %v551, 0.0
  %v705 = vmin.f32 %v555, 0.0
  %v706 = vmin.f32 %v557, 0.0
  %v707 = vmin.f32 %v559, 0.0
  %v708 = vmin.f32 %v561, 0.0
  %v709 = vmin.f32 %v565, 0.0
  %v710 = vmin.f32 %v567, 0.0
  %v711 = vmin.f32 %v569, 0.0
  %v712 = vmin.f32 %v571, 0.0
  %v713 = vmin.f32 %v575, 0.0
  %v714 = vmin.f32 %v577, 0.0
  %v715 = vmin.f32 %v579, 0.0
  %v716 = vmin.f32 %v581, 0.0
  %v717 = vmin.f32 %v585, 0.0
  %v718 = vmin.f32 %v587, 0.0
  %v719 = vmin.f32 %v589, 0.0
  %v720 = vmin.f32 %v591, 0.0
  %v721 = vmul.f32 %v657, 1.442695
  %v722 = vpow.pop %v721
  %v723 = vmul.f32 %v658, 1.442695
  %v724 = vpow.pop %v723
  %v725 = vmul.f32 %v659, 1.442695
  %v726 = vpow.pop %v725
  %v727 = vmul.f32 %v660, 1.442695
  %v728 = vpow.pop %v727
  %v729 = vmul.f32 %v661, 1.442695
  %v730 = vpow.pop %v729
  %v731 = vmul.f32 %v662, 1.442695
  %v732 = vpow.pop %v731
  %v733 = vmul.f32 %v663, 1.442695
  %v734 = vpow.pop %v733
  %v735 = vmul.f32 %v664, 1.442695
  %v736 = vpow.pop %v735
  %v737 = vmul.f32 %v665, 1.442695
  %v738 = vpow.pop %v737
  %v739 = vmul.f32 %v666, 1.442695
  %v740 = vpow.pop %v739
  %v741 = vmul.f32 %v667, 1.442695
  %v742 = vpow.pop %v741
  %v743 = vmul.f32 %v668, 1.442695
  %v744 = vpow.pop %v743
  %v745 = vmul.f32 %v669, 1.442695
  %v746 = vpow.pop %v745
  %v747 = vmul.f32 %v670, 1.442695
  %v748 = vpow.pop %v747
  %v749 = vmul.f32 %v671, 1.442695
  %v750 = vpow.pop %v749
  %v751 = vmul.f32 %v672, 1.442695
  %v752 = vpow.pop %v751
  %v753 = vmul.f32 %v673, 1.442695
  %v754 = vpow.pop %v753
  %v755 = vmul.f32 %v674, 1.442695
  %v756 = vpow.pop %v755
  %v757 = vmul.f32 %v675, 1.442695
  %v758 = vpow.pop %v757
  %v759 = vmul.f32 %v676, 1.442695
  %v760 = vpow.pop %v759
  %v761 = vmul.f32 %v677, 1.442695
  %v762 = vpow.pop %v761
  %v763 = vmul.f32 %v678, 1.442695
  %v764 = vpow.pop %v763
  %v765 = vmul.f32 %v679, 1.442695
  %v766 = vpow.pop %v765
  %v767 = vmul.f32 %v680, 1.442695
  %v768 = vpow.pop %v767
  %v769 = vmul.f32 %v681, 1.442695
  %v770 = vpow.pop %v769
  %v771 = vmul.f32 %v682, 1.442695
  %v772 = vpow.pop %v771
  %v773 = vmul.f32 %v683, 1.442695
  %v774 = vpow.pop %v773
  %v775 = vmul.f32 %v684, 1.442695
  %v776 = vpow.pop %v775
  %v777 = vmul.f32 %v685, 1.442695
  %v778 = vpow.pop %v777
  %v779 = vmul.f32 %v686, 1.442695
  %v780 = vpow.pop %v779
  %v781 = vmul.f32 %v687, 1.442695
  %v782 = vpow.pop %v781
  %v783 = vmul.f32 %v688, 1.442695
  %v784 = vpow.pop %v783
  %v785 = vmul.f32 %v689, 1.442695
  %v786 = vpow.pop %v785
  %v787 = vmul.f32 %v690, 1.442695
  %v788 = vpow.pop %v787
  %v789 = vmul.f32 %v691, 1.442695
  %v790 = vpow.pop %v789
  %v791 = vmul.f32 %v692, 1.442695
  %v792 = vpow.pop %v791
  %v793 = vmul.f32 %v693, 1.442695
  %v794 = vpow.pop %v793
  %v795 = vmul.f32 %v694, 1.442695
  %v796 = vpow.pop %v795
  %v797 = vmul.f32 %v695, 1.442695
  %v798 = vpow.pop %v797
  %v799 = vmul.f32 %v696, 1.442695
  %v800 = vpow.pop %v799
  %v801 = vmul.f32 %v697, 1.442695
  %v802 = vpow.pop %v801
  %v803 = vmul.f32 %v698, 1.442695
  %v804 = vpow.pop %v803
  %v805 = vmul.f32 %v699, 1.442695
  %v806 = vpow.pop %v805
  %v807 = vmul.f32 %v700, 1.442695
  %v808 = vpow.pop %v807
  %v809 = vmul.f32 %v701, 1.442695
  %v810 = vpow.pop %v809
  %v811 = vmul.f32 %v702, 1.442695
  %v812 = vpow.pop %v811
  %v813 = vmul.f32 %v703, 1.442695
  %v814 = vpow.pop %v813
  %v815 = vmul.f32 %v704, 1.442695
  %v816 = vpow.pop %v815
  %v817 = vmul.f32 %v705, 1.442695
  %v818 = vpow.pop %v817
  %v819 = vmul.f32 %v706, 1.442695
  %v820 = vpow.pop %v819
  %v821 = vmul.f32 %v707, 1.442695
  %v822 = vpow.pop %v821
  %v823 = vmul.f32 %v708, 1.442695
  %v824 = vpow.pop %v823
  %v825 = vmul.f32 %v709, 1.442695
  %v826 = vpow.pop %v825
  %v827 = vmul.f32 %v710, 1.442695
  %v828 = vpow.pop %v827
  %v829 = vmul.f32 %v711, 1.442695
  %v830 = vpow.pop %v829
  %v831 = vmul.f32 %v712, 1.442695
  %v832 = vpow.pop %v831
  %v833 = vmul.f32 %v713, 1.442695
  %v834 = vpow.pop %v833
  %v835 = vmul.f32 %v714, 1.442695
  %v836 = vpow.pop %v835
  %v837 = vmul.f32 %v715, 1.442695
  %v838 = vpow.pop %v837
  %v839 = vmul.f32 %v716, 1.442695
  %v840 = vpow.pop %v839
  %v841 = vmul.f32 %v717, 1.442695
  %v842 = vpow.pop %v841
  %v843 = vmul.f32 %v718, 1.442695
  %v844 = vpow.pop %v843
  %v845 = vmul.f32 %v719, 1.442695
  %v846 = vpow.pop %v845
  %v847 = vmul.f32 %v720, 1.442695
  %v848 = vpow.pop %v847
  %v849 = vsub.f32 %v722, 1.0
  %v850 = vsub.f32 %v724, 1.0
  %v851 = vsub.f32 %v726, 1.0
  %v852 = vsub.f32 %v728, 1.0
  %v853 = vsub.f32 %v730, 1.0
  %v854 = vsub.f32 %v732, 1.0
  %v855 = vsub.f32 %v734, 1.0
  %v856 = vsub.f32 %v736, 1.0
  %v857 = vsub.f32 %v738, 1.0
  %v858 = vsub.f32 %v740, 1.0
  %v859 = vsub.f32 %v742, 1.0
  %v860 = vsub.f32 %v744, 1.0
  %v861 = vsub.f32 %v746, 1.0
  %v862 = vsub.f32 %v748, 1.0
  %v863 = vsub.f32 %v750, 1.0
  %v864 = vsub.f32 %v752, 1.0
  %v865 = vsub.f32 %v754, 1.0
  %v866 = vsub.f32 %v756, 1.0
  %v867 = vsub.f32 %v758, 1.0
  %v868 = vsub.f32 %v760, 1.0
  %v869 = vsub.f32 %v762, 1.0
  %v870 = vsub.f32 %v764, 1.0
  %v871 = vsub.f32 %v766, 1.0
  %v872 = vsub.f32 %v768, 1.0
  %v873 = vsub.f32 %v770, 1.0
  %v874 = vsub.f32 %v772, 1.0
  %v875 = vsub.f32 %v774, 1.0
  %v876 = vsub.f32 %v776, 1.0
  %v877 = vsub.f32 %v778, 1.0
  %v878 = vsub.f32 %v780, 1.0
  %v879 = vsub.f32 %v782, 1.0
  %v880 = vsub.f32 %v784, 1.0
  %v881 = vsub.f32 %v786, 1.0
  %v882 = vsub.f32 %v788, 1.0
  %v883 = vsub.f32 %v790, 1.0
  %v884 = vsub.f32 %v792, 1.0
  %v885 = vsub.f32 %v794, 1.0
  %v886 = vsub.f32 %v796, 1.0
  %v887 = vsub.f32 %v798, 1.0
  %v888 = vsub.f32 %v800, 1.0
  %v889 = vsub.f32 %v802, 1.0
  %v890 = vsub.f32 %v804, 1.0
  %v891 = vsub.f32 %v806, 1.0
  %v892 = vsub.f32 %v808, 1.0
  %v893 = vsub.f32 %v810, 1.0
  %v894 = vsub.f32 %v812, 1.0
  %v895 = vsub.f32 %v814, 1.0
  %v896 = vsub.f32 %v816, 1.0
  %v897 = vsub.f32 %v818, 1.0
  %v898 = vsub.f32 %v820, 1.0
  %v899 = vsub.f32 %v822, 1.0
  %v900 = vsub.f32 %v824, 1.0
  %v901 = vsub.f32 %v826, 1.0
  %v902 = vsub.f32 %v828, 1.0
  %v903 = vsub.f32 %v830, 1.0
  %v904 = vsub.f32 %v832, 1.0
  %v905 = vsub.f32 %v834, 1.0
  %v906 = vsub.f32 %v836, 1.0
  %v907 = vsub.f32 %v838, 1.0
  %v908 = vsub.f32 %v840, 1.0
  %v909 = vsub.f32 %v842, 1.0
  %v910 = vsub.f32 %v844, 1.0
  %v911 = vsub.f32 %v846, 1.0
  %v912 = vsub.f32 %v848, 1.0
  %v913 = vsel %vm593, %v435, %v849
  %v914 = vsel %vm594, %v437, %v850
  %v915 = vsel %vm595, %v439, %v851
  %v916 = vsel %vm596, %v441, %v852
  %v917 = vsel %vm597, %v445, %v853
  %v918 = vsel %vm598, %v447, %v854
  %v919 = vsel %vm599, %v449, %v855
  %v920 = vsel %vm600, %v451, %v856
  %v921 = vsel %vm601, %v455, %v857
  %v922 = vsel %vm602, %v457, %v858
  %v923 = vsel %vm603, %v459, %v859
  %v924 = vsel %vm604, %v461, %v860
  %v925 = vsel %vm605, %v465, %v861
  %v926 = vsel %vm606, %v467, %v862
  %v927 = vsel %vm607, %v469, %v863
  %v928 = vsel %vm608, %v471, %v864
  %v929 = vsel %vm609, %v475, %v865
  %v930 = vsel %vm610, %v477, %v866
  %v931 = vsel %vm611, %v479, %v867
  %v932 = vsel %vm612, %v481, %v868
  %v933 = vsel %vm613, %v485, %v869
  %v934 = vsel %vm614, %v487, %v870
  %v935 = vsel %vm615, %v489, %v871
  %v936 = vsel %vm616, %v491, %v872
  %v937 = vsel %vm617, %v495, %v873
  %v938 = vsel %vm618, %v497, %v874
  %v939 = vsel %vm619, %v499, %v875
  %v940 = vsel %vm620, %v501, %v876
  %v941 = vsel %vm621, %v505, %v877
  %v942 = vsel %vm622, %v507, %v878
  %v943 = vsel %vm623, %v509, %v879
  %v944 = vsel %vm624, %v511, %v880
  %v945 = vsel %vm625, %v515, %v881
  %v946 = vsel %vm626, %v517, %v882
  %v947 = vsel %vm627, %v519, %v883
  %v948 = vsel %vm628, %v521, %v884
  %v949 = vsel %vm629, %v525, %v885
  %v950 = vsel %vm630, %v527, %v886
  %v951 = vsel %vm631, %v529, %v887
  %v952 = vsel %vm632, %v531, %v888
  %v953 = vsel %vm633, %v535, %v889
  %v954 = vsel %vm634, %v537, %v890
  %v955 = vsel %vm635, %v539, %v891
  %v956 = vsel %vm636, %v541, %v892
  %v957 = vsel %vm637, %v545, %v893
  %v958 = vsel %vm638, %v547, %v894
  %v959 = vsel %vm639, %v549, %v895
  %v960 = vsel %vm640, %v551, %v896
  %v961 = vsel %vm641, %v555, %v897
  %v962 = vsel %vm642, %v557, %v898
  %v963 = vsel %vm643, %v559, %v899
  %v964 = vsel %vm644, %v561, %v900
  %v965 = vsel %vm645, %v565, %v901
  %v966 = vsel %vm646, %v567, %v902
  %v967 = vsel %vm647, %v569, %v903
  %v968 = vsel %vm648, %v571, %v904
  %v969 = vsel %vm649, %v575, %v905
  %v970 = vsel %vm650, %v577, %v906
  %v971 = vsel %vm651, %v579, %v907
  %v972 = vsel %vm652, %v581, %v908
  %v973 = vsel %vm653, %v585, %v909
  %v974 = vsel %vm654, %v587, %v910
  %v975 = vsel %vm655, %v589, %v911
  %v976 = vsel %vm656, %v591, %v912
  %v977 = vld [vmem:[%s4] sm:$0xff]
  %v978 = vld [vmem:[%s4 + $0x8] sm:$0xff]
  %v979 = vld [vmem:[%s4 + $0x10] sm:$0xff]
  %v980 = vld [vmem:[%s4 + $0x18] sm:$0xff]
  %v981 = vld [vmem:[%s4 + $0x20] sm:$0xff]
  %v982 = vld [vmem:[%s4 + $0x28] sm:$0xff]
  %v983 = vld [vmem:[%s4 + $0x30] sm:$0xff]
  %v984 = vld [vmem:[%s4 + $0x38] sm:$0xff]
  %v985 = vld [vmem:[%s4 + $0x40] sm:$0xff]
  %v986 = vld [vmem:[%s4 + $0x48] sm:$0xff]
  %v987 = vld [vmem:[%s4 + $0x50] sm:$0xff]
  %v988 = vld [vmem:[%s4 + $0x58] sm:$0xff]
  %v989 = vld [vmem:[%s4 + $0x60] sm:$0xff]
  %v990 = vld [vmem:[%s4 + $0x68] sm:$0xff]
  %v991 = vld [vmem:[%s4 + $0x70] sm:$0xff]
  %v992 = vld [vmem:[%s4 + $0x78] sm:$0xff]
  %v993 = vld [vmem:[%s4 + $0x80] sm:$0xff]
  %v994 = vld [vmem:[%s4 + $0x88] sm:$0xff]
  %v995 = vld [vmem:[%s4 + $0x90] sm:$0xff]
  %v996 = vld [vmem:[%s4 + $0x98] sm:$0xff]
  %v997 = vld [vmem:[%s4 + $0xa0] sm:$0xff]
  %v998 = vld [vmem:[%s4 + $0xa8] sm:$0xff]
  %v999 = vld [vmem:[%s4 + $0xb0] sm:$0xff]
  %v1000 = vld [vmem:[%s4 + $0xb8] sm:$0xff]
  %v1001 = vld [vmem:[%s4 + $0xc0] sm:$0xff]
  %v1002 = vld [vmem:[%s4 + $0xc8] sm:$0xff]
  %v1003 = vld [vmem:[%s4 + $0xd0] sm:$0xff]
  %v1004 = vld [vmem:[%s4 + $0xd8] sm:$0xff]
  %v1005 = vld [vmem:[%s4 + $0xe0] sm:$0xff]
  %v1006 = vld [vmem:[%s4 + $0xe8] sm:$0xff]
  %v1007 = vld [vmem:[%s4 + $0xf0] sm:$0xff]
  %v1008 = vld [vmem:[%s4 + $0xf8] sm:$0xff]
  %v1009 = vpack.c.bf16 %v915, %v913
  %v1010 = vpack.c.bf16 %v916, %v914
  %v1011 = vpack.c.bf16 %v919, %v917
  %v1012 = vpack.c.bf16 %v920, %v918
  %v1013 = vpack.c.bf16 %v923, %v921
  %v1014 = vpack.c.bf16 %v924, %v922
  %v1015 = vpack.c.bf16 %v927, %v925
  %v1016 = vpack.c.bf16 %v928, %v926
  %v1017 = vpack.c.bf16 %v931, %v929
  %v1018 = vpack.c.bf16 %v932, %v930
  %v1019 = vpack.c.bf16 %v935, %v933
  %v1020 = vpack.c.bf16 %v936, %v934
  %v1021 = vpack.c.bf16 %v939, %v937
  %v1022 = vpack.c.bf16 %v940, %v938
  %v1023 = vpack.c.bf16 %v943, %v941
  %v1024 = vpack.c.bf16 %v944, %v942
  %v1025 = vpack.c.bf16 %v947, %v945
  %v1026 = vpack.c.bf16 %v948, %v946
  %v1027 = vpack.c.bf16 %v951, %v949
  %v1028 = vpack.c.bf16 %v952, %v950
  %v1029 = vpack.c.bf16 %v955, %v953
  %v1030 = vpack.c.bf16 %v956, %v954
  %v1031 = vpack.c.bf16 %v959, %v957
  %v1032 = vpack.c.bf16 %v960, %v958
  %v1033 = vpack.c.bf16 %v963, %v961
  %v1034 = vpack.c.bf16 %v964, %v962
  %v1035 = vpack.c.bf16 %v967, %v965
  %v1036 = vpack.c.bf16 %v968, %v966
  %v1037 = vpack.c.bf16 %v971, %v969
  %v1038 = vpack.c.bf16 %v972, %v970
  %v1039 = vpack.c.bf16 %v975, %v973
  %v1040 = vpack.c.bf16 %v976, %v974
  %v1041 = vld [vmem:[%s5] sm:$0xff]
  %v1042 = vld [vmem:[%s5 + $0x8] sm:$0xff]
  %v1043 = vld [vmem:[%s5 + $0x10] sm:$0xff]
  %v1044 = vld [vmem:[%s5 + $0x18] sm:$0xff]
  %v1045 = vld [vmem:[%s5 + $0x20] sm:$0xff]
  %v1046 = vld [vmem:[%s5 + $0x28] sm:$0xff]
  %v1047 = vld [vmem:[%s5 + $0x30] sm:$0xff]
  %v1048 = vld [vmem:[%s5 + $0x38] sm:$0xff]
  %v1049 = vld [vmem:[%s5 + $0x40] sm:$0xff]
  %v1050 = vld [vmem:[%s5 + $0x48] sm:$0xff]
  %v1051 = vld [vmem:[%s5 + $0x50] sm:$0xff]
  %v1052 = vld [vmem:[%s5 + $0x58] sm:$0xff]
  %v1053 = vld [vmem:[%s5 + $0x60] sm:$0xff]
  %v1054 = vld [vmem:[%s5 + $0x68] sm:$0xff]
  %v1055 = vld [vmem:[%s5 + $0x70] sm:$0xff]
  %v1056 = vld [vmem:[%s5 + $0x78] sm:$0xff]
  %v1057 = vld [vmem:[%s5 + $0x80] sm:$0xff]
  %v1058 = vld [vmem:[%s5 + $0x88] sm:$0xff]
  %v1059 = vld [vmem:[%s5 + $0x90] sm:$0xff]
  %v1060 = vld [vmem:[%s5 + $0x98] sm:$0xff]
  %v1061 = vld [vmem:[%s5 + $0xa0] sm:$0xff]
  %v1062 = vld [vmem:[%s5 + $0xa8] sm:$0xff]
  %v1063 = vld [vmem:[%s5 + $0xb0] sm:$0xff]
  %v1064 = vld [vmem:[%s5 + $0xb8] sm:$0xff]
  %v1065 = vld [vmem:[%s5 + $0xc0] sm:$0xff]
  %v1066 = vld [vmem:[%s5 + $0xc8] sm:$0xff]
  %v1067 = vld [vmem:[%s5 + $0xd0] sm:$0xff]
  %v1068 = vld [vmem:[%s5 + $0xd8] sm:$0xff]
  %v1069 = vld [vmem:[%s5 + $0xe0] sm:$0xff]
  %v1070 = vld [vmem:[%s5 + $0xe8] sm:$0xff]
  %v1071 = vld [vmem:[%s5 + $0xf0] sm:$0xff]
  %v1072 = vld [vmem:[%s5 + $0xf8] sm:$0xff]
  %1074 = vset.pattern.permute.xlu0 0
  %1075 = vperm.xlu0 %1074, %v1041
  %v1076 = vpop.permute.xlu0 %1075
  %1079 = vset.pattern.permute.xlu0 0
  %1080 = vperm.xlu0 %1079, %v1042
  %v1081 = vpop.permute.xlu0 %1080
  %1084 = vset.pattern.permute.xlu0 0
  %1085 = vperm.xlu0 %1084, %v1043
  %v1086 = vpop.permute.xlu0 %1085
  %1089 = vset.pattern.permute.xlu0 0
  %1090 = vperm.xlu0 %1089, %v1044
  %v1091 = vpop.permute.xlu0 %1090
  %1094 = vset.pattern.permute.xlu0 0
  %1095 = vperm.xlu0 %1094, %v1045
  %v1096 = vpop.permute.xlu0 %1095
  %1099 = vset.pattern.permute.xlu0 0
  %1100 = vperm.xlu0 %1099, %v1046
  %v1101 = vpop.permute.xlu0 %1100
  %1104 = vset.pattern.permute.xlu0 0
  %1105 = vperm.xlu0 %1104, %v1047
  %v1106 = vpop.permute.xlu0 %1105
  %1109 = vset.pattern.permute.xlu0 0
  %1110 = vperm.xlu0 %1109, %v1048
  %v1111 = vpop.permute.xlu0 %1110
  %1114 = vset.pattern.permute.xlu0 0
  %1115 = vperm.xlu0 %1114, %v1049
  %v1116 = vpop.permute.xlu0 %1115
  %1119 = vset.pattern.permute.xlu0 0
  %1120 = vperm.xlu0 %1119, %v1050
  %v1121 = vpop.permute.xlu0 %1120
  %1124 = vset.pattern.permute.xlu0 0
  %1125 = vperm.xlu0 %1124, %v1051
  %v1126 = vpop.permute.xlu0 %1125
  %1129 = vset.pattern.permute.xlu0 0
  %1130 = vperm.xlu0 %1129, %v1052
  %v1131 = vpop.permute.xlu0 %1130
  %1134 = vset.pattern.permute.xlu0 0
  %1135 = vperm.xlu0 %1134, %v1053
  %v1136 = vpop.permute.xlu0 %1135
  %1139 = vset.pattern.permute.xlu0 0
  %1140 = vperm.xlu0 %1139, %v1054
  %v1141 = vpop.permute.xlu0 %1140
  %1144 = vset.pattern.permute.xlu0 0
  %1145 = vperm.xlu0 %1144, %v1055
  %v1146 = vpop.permute.xlu0 %1145
  %1149 = vset.pattern.permute.xlu0 0
  %1150 = vperm.xlu0 %1149, %v1056
  %v1151 = vpop.permute.xlu0 %1150
  %1154 = vset.pattern.permute.xlu0 0
  %1155 = vperm.xlu0 %1154, %v1057
  %v1156 = vpop.permute.xlu0 %1155
  %1159 = vset.pattern.permute.xlu0 0
  %1160 = vperm.xlu0 %1159, %v1058
  %v1161 = vpop.permute.xlu0 %1160
  %1164 = vset.pattern.permute.xlu0 0
  %1165 = vperm.xlu0 %1164, %v1059
  %v1166 = vpop.permute.xlu0 %1165
  %1169 = vset.pattern.permute.xlu0 0
  %1170 = vperm.xlu0 %1169, %v1060
  %v1171 = vpop.permute.xlu0 %1170
  %1174 = vset.pattern.permute.xlu0 0
  %1175 = vperm.xlu0 %1174, %v1061
  %v1176 = vpop.permute.xlu0 %1175
  %1179 = vset.pattern.permute.xlu0 0
  %1180 = vperm.xlu0 %1179, %v1062
  %v1181 = vpop.permute.xlu0 %1180
  %1184 = vset.pattern.permute.xlu0 0
  %1185 = vperm.xlu0 %1184, %v1063
  %v1186 = vpop.permute.xlu0 %1185
  %1189 = vset.pattern.permute.xlu0 0
  %1190 = vperm.xlu0 %1189, %v1064
  %v1191 = vpop.permute.xlu0 %1190
  %1194 = vset.pattern.permute.xlu0 0
  %1195 = vperm.xlu0 %1194, %v1065
  %v1196 = vpop.permute.xlu0 %1195
  %1199 = vset.pattern.permute.xlu0 0
  %1200 = vperm.xlu0 %1199, %v1066
  %v1201 = vpop.permute.xlu0 %1200
  %1204 = vset.pattern.permute.xlu0 0
  %1205 = vperm.xlu0 %1204, %v1067
  %v1206 = vpop.permute.xlu0 %1205
  %1209 = vset.pattern.permute.xlu0 0
  %1210 = vperm.xlu0 %1209, %v1068
  %v1211 = vpop.permute.xlu0 %1210
  %1214 = vset.pattern.permute.xlu0 0
  %1215 = vperm.xlu0 %1214, %v1069
  %v1216 = vpop.permute.xlu0 %1215
  %1219 = vset.pattern.permute.xlu0 0
  %1220 = vperm.xlu0 %1219, %v1070
  %v1221 = vpop.permute.xlu0 %1220
  %1224 = vset.pattern.permute.xlu0 0
  %1225 = vperm.xlu0 %1224, %v1071
  %v1226 = vpop.permute.xlu0 %1225
  %1229 = vset.pattern.permute.xlu0 0
  %1230 = vperm.xlu0 %1229, %v1072
  %v1231 = vpop.permute.xlu0 %1230
  %v1265 = vunpack.c.l.b16 %v977
  %v1266 = vunpack.c.h.b16 %v977
  %v1267 = vunpack.c.l.b16 %v978
  %v1268 = vunpack.c.h.b16 %v978
  %v1269 = vunpack.c.l.b16 %v979
  %v1270 = vunpack.c.h.b16 %v979
  %v1271 = vunpack.c.l.b16 %v980
  %v1272 = vunpack.c.h.b16 %v980
  %v1273 = vunpack.c.l.b16 %v981
  %v1274 = vunpack.c.h.b16 %v981
  %v1275 = vunpack.c.l.b16 %v982
  %v1276 = vunpack.c.h.b16 %v982
  %v1277 = vunpack.c.l.b16 %v983
  %v1278 = vunpack.c.h.b16 %v983
  %v1279 = vunpack.c.l.b16 %v984
  %v1280 = vunpack.c.h.b16 %v984
  %v1281 = vunpack.c.l.b16 %v985
  %v1282 = vunpack.c.h.b16 %v985
  %v1283 = vunpack.c.l.b16 %v986
  %v1284 = vunpack.c.h.b16 %v986
  %v1285 = vunpack.c.l.b16 %v987
  %v1286 = vunpack.c.h.b16 %v987
  %v1287 = vunpack.c.l.b16 %v988
  %v1288 = vunpack.c.h.b16 %v988
  %v1289 = vunpack.c.l.b16 %v989
  %v1290 = vunpack.c.h.b16 %v989
  %v1291 = vunpack.c.l.b16 %v990
  %v1292 = vunpack.c.h.b16 %v990
  %v1293 = vunpack.c.l.b16 %v991
  %v1294 = vunpack.c.h.b16 %v991
  %v1295 = vunpack.c.l.b16 %v992
  %v1296 = vunpack.c.h.b16 %v992
  %v1297 = vunpack.c.l.b16 %v993
  %v1298 = vunpack.c.h.b16 %v993
  %v1299 = vunpack.c.l.b16 %v994
  %v1300 = vunpack.c.h.b16 %v994
  %v1301 = vunpack.c.l.b16 %v995
  %v1302 = vunpack.c.h.b16 %v995
  %v1303 = vunpack.c.l.b16 %v996
  %v1304 = vunpack.c.h.b16 %v996
  %v1305 = vunpack.c.l.b16 %v997
  %v1306 = vunpack.c.h.b16 %v997
  %v1307 = vunpack.c.l.b16 %v998
  %v1308 = vunpack.c.h.b16 %v998
  %v1309 = vunpack.c.l.b16 %v999
  %v1310 = vunpack.c.h.b16 %v999
  %v1311 = vunpack.c.l.b16 %v1000
  %v1312 = vunpack.c.h.b16 %v1000
  %v1313 = vunpack.c.l.b16 %v1001
  %v1314 = vunpack.c.h.b16 %v1001
  %v1315 = vunpack.c.l.b16 %v1002
  %v1316 = vunpack.c.h.b16 %v1002
  %v1317 = vunpack.c.l.b16 %v1003
  %v1318 = vunpack.c.h.b16 %v1003
  %v1319 = vunpack.c.l.b16 %v1004
  %v1320 = vunpack.c.h.b16 %v1004
  %v1321 = vunpack.c.l.b16 %v1005
  %v1322 = vunpack.c.h.b16 %v1005
  %v1323 = vunpack.c.l.b16 %v1006
  %v1324 = vunpack.c.h.b16 %v1006
  %v1325 = vunpack.c.l.b16 %v1007
  %v1326 = vunpack.c.h.b16 %v1007
  %v1327 = vunpack.c.l.b16 %v1008
  %v1328 = vunpack.c.h.b16 %v1008
  %v1329 = vpack.c.b16 %v1267, %v1265
  %v1330 = vpack.c.b16 %v1268, %v1266
  %v1331 = vpack.c.b16 %v1271, %v1269
  %v1332 = vpack.c.b16 %v1272, %v1270
  %v1333 = vpack.c.b16 %v1275, %v1273
  %v1334 = vpack.c.b16 %v1276, %v1274
  %v1335 = vpack.c.b16 %v1279, %v1277
  %v1336 = vpack.c.b16 %v1280, %v1278
  %v1337 = vpack.c.b16 %v1283, %v1281
  %v1338 = vpack.c.b16 %v1284, %v1282
  %v1339 = vpack.c.b16 %v1287, %v1285
  %v1340 = vpack.c.b16 %v1288, %v1286
  %v1341 = vpack.c.b16 %v1291, %v1289
  %v1342 = vpack.c.b16 %v1292, %v1290
  %v1343 = vpack.c.b16 %v1295, %v1293
  %v1344 = vpack.c.b16 %v1296, %v1294
  %v1345 = vpack.c.b16 %v1299, %v1297
  %v1346 = vpack.c.b16 %v1300, %v1298
  %v1347 = vpack.c.b16 %v1303, %v1301
  %v1348 = vpack.c.b16 %v1304, %v1302
  %v1349 = vpack.c.b16 %v1307, %v1305
  %v1350 = vpack.c.b16 %v1308, %v1306
  %v1351 = vpack.c.b16 %v1311, %v1309
  %v1352 = vpack.c.b16 %v1312, %v1310
  %v1353 = vpack.c.b16 %v1315, %v1313
  %v1354 = vpack.c.b16 %v1316, %v1314
  %v1355 = vpack.c.b16 %v1319, %v1317
  %v1356 = vpack.c.b16 %v1320, %v1318
  %v1357 = vpack.c.b16 %v1323, %v1321
  %v1358 = vpack.c.b16 %v1324, %v1322
  %v1359 = vpack.c.b16 %v1327, %v1325
  %v1360 = vpack.c.b16 %v1328, %v1326
  %1393 = vmatprep.subr.bf16.mxu0 %v1010
  %1394 = vmatpush1.bf16.msra.mxu0 %v1009
  %1395 = vmatprep.subr.bf16.mxu0 %v1012
  %1396 = vmatpush1.bf16.msra.mxu0 %v1011
  %1397 = vmatprep.subr.bf16.mxu0 %v1014
  %1398 = vmatpush1.bf16.msra.mxu0 %v1013
  %1399 = vmatprep.subr.bf16.mxu0 %v1016
  %1400 = vmatpush1.bf16.msra.mxu0 %v1015
  %1401 = vmatprep.subr.bf16.mxu0 %v1018
  %1402 = vmatpush1.bf16.msra.mxu0 %v1017
  %1403 = vmatprep.subr.bf16.mxu0 %v1020
  %1404 = vmatpush1.bf16.msra.mxu0 %v1019
  %1405 = vmatprep.subr.bf16.mxu0 %v1022
  %1406 = vmatpush1.bf16.msra.mxu0 %v1021
  %1407 = vmatprep.subr.bf16.mxu0 %v1024
  %1408 = vmatpush1.bf16.msra.mxu0 %v1023
  %1409 = vmatprep.subr.bf16.mxu0 %v1026
  %1410 = vmatpush1.bf16.msra.mxu0 %v1025
  %1411 = vmatprep.subr.bf16.mxu0 %v1028
  %1412 = vmatpush1.bf16.msra.mxu0 %v1027
  %1413 = vmatprep.subr.bf16.mxu0 %v1030
  %1414 = vmatpush1.bf16.msra.mxu0 %v1029
  %1415 = vmatprep.subr.bf16.mxu0 %v1032
  %1416 = vmatpush1.bf16.msra.mxu0 %v1031
  %1417 = vmatprep.subr.bf16.mxu0 %v1034
  %1418 = vmatpush1.bf16.msra.mxu0 %v1033
  %1419 = vmatprep.subr.bf16.mxu0 %v1036
  %1420 = vmatpush1.bf16.msra.mxu0 %v1035
  %1421 = vmatprep.subr.bf16.mxu0 %v1038
  %1422 = vmatpush1.bf16.msra.mxu0 %v1037
  %1423 = vmatprep.subr.bf16.mxu0 %v1040
  %1424 = vmatpush1.bf16.msra.mxu0 %v1039
  %1425 = vmatprep.mubr.bf16.mxu0 %v1330
  %1426 = vmatmul.mubr.bf16.gmra.mrb[0].mxu0 %v1329
  %v1427 = vpop.f32.mrb[0].mxu0
  %v1428 = vadd.f32 %v1076, %v1427
  %v1429 = vpop.f32.mrb[0].mxu0
  %v1430 = vadd.f32 %v1076, %v1429
  %v1431 = vpop.f32.mrb[0].mxu0
  %v1432 = vadd.f32 %v1081, %v1431
  %v1433 = vpop.f32.mrb[0].mxu0
  %v1434 = vadd.f32 %v1081, %v1433
  %1435 = vmatprep.mubr.bf16.mxu0 %v1332
  %1436 = vmatmul.mubr.bf16.gmra.mrb[0].mxu0 %v1331
  %v1437 = vpop.f32.mrb[0].mxu0
  %v1438 = vadd.f32 %v1086, %v1437
  %v1439 = vpop.f32.mrb[0].mxu0
  %v1440 = vadd.f32 %v1086, %v1439
  %v1441 = vpop.f32.mrb[0].mxu0
  %v1442 = vadd.f32 %v1091, %v1441
  %v1443 = vpop.f32.mrb[0].mxu0
  %v1444 = vadd.f32 %v1091, %v1443
  %1445 = vmatprep.mubr.bf16.mxu0 %v1334
  %1446 = vmatmul.mubr.bf16.gmra.mrb[0].mxu0 %v1333
  %v1447 = vpop.f32.mrb[0].mxu0
  %v1448 = vadd.f32 %v1096, %v1447
  %v1449 = vpop.f32.mrb[0].mxu0
  %v1450 = vadd.f32 %v1096, %v1449
  %v1451 = vpop.f32.mrb[0].mxu0
  %v1452 = vadd.f32 %v1101, %v1451
  %v1453 = vpop.f32.mrb[0].mxu0
  %v1454 = vadd.f32 %v1101, %v1453
  %1455 = vmatprep.mubr.bf16.mxu0 %v1336
  %1456 = vmatmul.mubr.bf16.gmra.mrb[0].mxu0 %v1335
  %v1457 = vpop.f32.mrb[0].mxu0
  %v1458 = vadd.f32 %v1106, %v1457
  %v1459 = vpop.f32.mrb[0].mxu0
  %v1460 = vadd.f32 %v1106, %v1459
  %v1461 = vpop.f32.mrb[0].mxu0
  %v1462 = vadd.f32 %v1111, %v1461
  %v1463 = vpop.f32.mrb[0].mxu0
  %v1464 = vadd.f32 %v1111, %v1463
  %1465 = vmatprep.mubr.bf16.mxu0 %v1338
  %1466 = vmatmul.mubr.bf16.gmra.mrb[0].mxu0 %v1337
  %v1467 = vpop.f32.mrb[0].mxu0
  %v1468 = vadd.f32 %v1116, %v1467
  %v1469 = vpop.f32.mrb[0].mxu0
  %v1470 = vadd.f32 %v1116, %v1469
  %v1471 = vpop.f32.mrb[0].mxu0
  %v1472 = vadd.f32 %v1121, %v1471
  %v1473 = vpop.f32.mrb[0].mxu0
  %v1474 = vadd.f32 %v1121, %v1473
  %1475 = vmatprep.mubr.bf16.mxu0 %v1340
  %1476 = vmatmul.mubr.bf16.gmra.mrb[0].mxu0 %v1339
  %v1477 = vpop.f32.mrb[0].mxu0
  %v1478 = vadd.f32 %v1126, %v1477
  %v1479 = vpop.f32.mrb[0].mxu0
  %v1480 = vadd.f32 %v1126, %v1479
  %v1481 = vpop.f32.mrb[0].mxu0
  %v1482 = vadd.f32 %v1131, %v1481
  %v1483 = vpop.f32.mrb[0].mxu0
  %v1484 = vadd.f32 %v1131, %v1483
  %1485 = vmatprep.mubr.bf16.mxu0 %v1342
  %1486 = vmatmul.mubr.bf16.gmra.mrb[0].mxu0 %v1341
  %v1487 = vpop.f32.mrb[0].mxu0
  %v1488 = vadd.f32 %v1136, %v1487
  %v1489 = vpop.f32.mrb[0].mxu0
  %v1490 = vadd.f32 %v1136, %v1489
  %v1491 = vpop.f32.mrb[0].mxu0
  %v1492 = vadd.f32 %v1141, %v1491
  %v1493 = vpop.f32.mrb[0].mxu0
  %v1494 = vadd.f32 %v1141, %v1493
  %1495 = vmatprep.mubr.bf16.mxu0 %v1344
  %1496 = vmatmul.mubr.bf16.gmra.mrb[0].mxu0 %v1343
  %v1497 = vpop.f32.mrb[0].mxu0
  %v1498 = vadd.f32 %v1146, %v1497
  %v1499 = vpop.f32.mrb[0].mxu0
  %v1500 = vadd.f32 %v1146, %v1499
  %v1501 = vpop.f32.mrb[0].mxu0
  %v1502 = vadd.f32 %v1151, %v1501
  %v1503 = vpop.f32.mrb[0].mxu0
  %v1504 = vadd.f32 %v1151, %v1503
  %1505 = vmatprep.mubr.bf16.mxu0 %v1346
  %1506 = vmatmul.mubr.bf16.gmra.mrb[0].mxu0 %v1345
  %v1507 = vpop.f32.mrb[0].mxu0
  %v1508 = vadd.f32 %v1156, %v1507
  %v1509 = vpop.f32.mrb[0].mxu0
  %v1510 = vadd.f32 %v1156, %v1509
  %v1511 = vpop.f32.mrb[0].mxu0
  %v1512 = vadd.f32 %v1161, %v1511
  %v1513 = vpop.f32.mrb[0].mxu0
  %v1514 = vadd.f32 %v1161, %v1513
  %1515 = vmatprep.mubr.bf16.mxu0 %v1348
  %1516 = vmatmul.mubr.bf16.gmra.mrb[0].mxu0 %v1347
  %v1517 = vpop.f32.mrb[0].mxu0
  %v1518 = vadd.f32 %v1166, %v1517
  %v1519 = vpop.f32.mrb[0].mxu0
  %v1520 = vadd.f32 %v1166, %v1519
  %v1521 = vpop.f32.mrb[0].mxu0
  %v1522 = vadd.f32 %v1171, %v1521
  %v1523 = vpop.f32.mrb[0].mxu0
  %v1524 = vadd.f32 %v1171, %v1523
  %1525 = vmatprep.mubr.bf16.mxu0 %v1350
  %1526 = vmatmul.mubr.bf16.gmra.mrb[0].mxu0 %v1349
  %v1527 = vpop.f32.mrb[0].mxu0
  %v1528 = vadd.f32 %v1176, %v1527
  %v1529 = vpop.f32.mrb[0].mxu0
  %v1530 = vadd.f32 %v1176, %v1529
  %v1531 = vpop.f32.mrb[0].mxu0
  %v1532 = vadd.f32 %v1181, %v1531
  %v1533 = vpop.f32.mrb[0].mxu0
  %v1534 = vadd.f32 %v1181, %v1533
  %1535 = vmatprep.mubr.bf16.mxu0 %v1352
  %1536 = vmatmul.mubr.bf16.gmra.mrb[0].mxu0 %v1351
  %v1537 = vpop.f32.mrb[0].mxu0
  %v1538 = vadd.f32 %v1186, %v1537
  %v1539 = vpop.f32.mrb[0].mxu0
  %v1540 = vadd.f32 %v1186, %v1539
  %v1541 = vpop.f32.mrb[0].mxu0
  %v1542 = vadd.f32 %v1191, %v1541
  %v1543 = vpop.f32.mrb[0].mxu0
  %v1544 = vadd.f32 %v1191, %v1543
  %1545 = vmatprep.mubr.bf16.mxu0 %v1354
  %1546 = vmatmul.mubr.bf16.gmra.mrb[0].mxu0 %v1353
  %v1547 = vpop.f32.mrb[0].mxu0
  %v1548 = vadd.f32 %v1196, %v1547
  %v1549 = vpop.f32.mrb[0].mxu0
  %v1550 = vadd.f32 %v1196, %v1549
  %v1551 = vpop.f32.mrb[0].mxu0
  %v1552 = vadd.f32 %v1201, %v1551
  %v1553 = vpop.f32.mrb[0].mxu0
  %v1554 = vadd.f32 %v1201, %v1553
  %1555 = vmatprep.mubr.bf16.mxu0 %v1356
  %1556 = vmatmul.mubr.bf16.gmra.mrb[0].mxu0 %v1355
  %v1557 = vpop.f32.mrb[0].mxu0
  %v1558 = vadd.f32 %v1206, %v1557
  %v1559 = vpop.f32.mrb[0].mxu0
  %v1560 = vadd.f32 %v1206, %v1559
  %v1561 = vpop.f32.mrb[0].mxu0
  %v1562 = vadd.f32 %v1211, %v1561
  %v1563 = vpop.f32.mrb[0].mxu0
  %v1564 = vadd.f32 %v1211, %v1563
  %1565 = vmatprep.mubr.bf16.mxu0 %v1358
  %1566 = vmatmul.mubr.bf16.gmra.mrb[0].mxu0 %v1357
  %v1567 = vpop.f32.mrb[0].mxu0
  %v1568 = vadd.f32 %v1216, %v1567
  %v1569 = vpop.f32.mrb[0].mxu0
  %v1570 = vadd.f32 %v1216, %v1569
  %v1571 = vpop.f32.mrb[0].mxu0
  %v1572 = vadd.f32 %v1221, %v1571
  %v1573 = vpop.f32.mrb[0].mxu0
  %v1574 = vadd.f32 %v1221, %v1573
  %1575 = vmatprep.mubr.bf16.mxu0 %v1360
  %1576 = vmatmul.mubr.bf16.gmra.mrb[0].mxu0 %v1359
  %v1577 = vpop.f32.mrb[0].mxu0
  %v1578 = vadd.f32 %v1226, %v1577
  %v1579 = vpop.f32.mrb[0].mxu0
  %v1580 = vadd.f32 %v1226, %v1579
  %v1581 = vpop.f32.mrb[0].mxu0
  %v1582 = vadd.f32 %v1231, %v1581
  %v1583 = vpop.f32.mrb[0].mxu0
  %v1584 = vadd.f32 %v1231, %v1583
  %1585 = vdwg.mxu0
  %vm1586 = vcmp.gt.f32.partialorder %v1428, 0.0
  %vm1587 = vcmp.gt.f32.partialorder %v1430, 0.0
  %vm1588 = vcmp.gt.f32.partialorder %v1432, 0.0
  %vm1589 = vcmp.gt.f32.partialorder %v1434, 0.0
  %vm1590 = vcmp.gt.f32.partialorder %v1438, 0.0
  %vm1591 = vcmp.gt.f32.partialorder %v1440, 0.0
  %vm1592 = vcmp.gt.f32.partialorder %v1442, 0.0
  %vm1593 = vcmp.gt.f32.partialorder %v1444, 0.0
  %vm1594 = vcmp.gt.f32.partialorder %v1448, 0.0
  %vm1595 = vcmp.gt.f32.partialorder %v1450, 0.0
  %vm1596 = vcmp.gt.f32.partialorder %v1452, 0.0
  %vm1597 = vcmp.gt.f32.partialorder %v1454, 0.0
  %vm1598 = vcmp.gt.f32.partialorder %v1458, 0.0
  %vm1599 = vcmp.gt.f32.partialorder %v1460, 0.0
  %vm1600 = vcmp.gt.f32.partialorder %v1462, 0.0
  %vm1601 = vcmp.gt.f32.partialorder %v1464, 0.0
  %vm1602 = vcmp.gt.f32.partialorder %v1468, 0.0
  %vm1603 = vcmp.gt.f32.partialorder %v1470, 0.0
  %vm1604 = vcmp.gt.f32.partialorder %v1472, 0.0
  %vm1605 = vcmp.gt.f32.partialorder %v1474, 0.0
  %vm1606 = vcmp.gt.f32.partialorder %v1478, 0.0
  %vm1607 = vcmp.gt.f32.partialorder %v1480, 0.0
  %vm1608 = vcmp.gt.f32.partialorder %v1482, 0.0
  %vm1609 = vcmp.gt.f32.partialorder %v1484, 0.0
  %vm1610 = vcmp.gt.f32.partialorder %v1488, 0.0
  %vm1611 = vcmp.gt.f32.partialorder %v1490, 0.0
  %vm1612 = vcmp.gt.f32.partialorder %v1492, 0.0
  %vm1613 = vcmp.gt.f32.partialorder %v1494, 0.0
  %vm1614 = vcmp.gt.f32.partialorder %v1498, 0.0
  %vm1615 = vcmp.gt.f32.partialorder %v1500, 0.0
  %vm1616 = vcmp.gt.f32.partialorder %v1502, 0.0
  %vm1617 = vcmp.gt.f32.partialorder %v1504, 0.0
  %vm1618 = vcmp.gt.f32.partialorder %v1508, 0.0
  %vm1619 = vcmp.gt.f32.partialorder %v1510, 0.0
  %vm1620 = vcmp.gt.f32.partialorder %v1512, 0.0
  %vm1621 = vcmp.gt.f32.partialorder %v1514, 0.0
  %vm1622 = vcmp.gt.f32.partialorder %v1518, 0.0
  %vm1623 = vcmp.gt.f32.partialorder %v1520, 0.0
  %vm1624 = vcmp.gt.f32.partialorder %v1522, 0.0
  %vm1625 = vcmp.gt.f32.partialorder %v1524, 0.0
  %vm1626 = vcmp.gt.f32.partialorder %v1528, 0.0
  %vm1627 = vcmp.gt.f32.partialorder %v1530, 0.0
  %vm1628 = vcmp.gt.f32.partialorder %v1532, 0.0
  %vm1629 = vcmp.gt.f32.partialorder %v1534, 0.0
  %vm1630 = vcmp.gt.f32.partialorder %v1538, 0.0
  %vm1631 = vcmp.gt.f32.partialorder %v1540, 0.0
  %vm1632 = vcmp.gt.f32.partialorder %v1542, 0.0
  %vm1633 = vcmp.gt.f32.partialorder %v1544, 0.0
  %vm1634 = vcmp.gt.f32.partialorder %v1548, 0.0
  %vm1635 = vcmp.gt.f32.partialorder %v1550, 0.0
  %vm1636 = vcmp.gt.f32.partialorder %v1552, 0.0
  %vm1637 = vcmp.gt.f32.partialorder %v1554, 0.0
  %vm1638 = vcmp.gt.f32.partialorder %v1558, 0.0
  %vm1639 = vcmp.gt.f32.partialorder %v1560, 0.0
  %vm1640 = vcmp.gt.f32.partialorder %v1562, 0.0
  %vm1641 = vcmp.gt.f32.partialorder %v1564, 0.0
  %vm1642 = vcmp.gt.f32.partialorder %v1568, 0.0
  %vm1643 = vcmp.gt.f32.partialorder %v1570, 0.0
  %vm1644 = vcmp.gt.f32.partialorder %v1572, 0.0
  %vm1645 = vcmp.gt.f32.partialorder %v1574, 0.0
  %vm1646 = vcmp.gt.f32.partialorder %v1578, 0.0
  %vm1647 = vcmp.gt.f32.partialorder %v1580, 0.0
  %vm1648 = vcmp.gt.f32.partialorder %v1582, 0.0
  %vm1649 = vcmp.gt.f32.partialorder %v1584, 0.0
  %v1650 = vmin.f32 %v1428, 0.0
  %v1651 = vmin.f32 %v1430, 0.0
  %v1652 = vmin.f32 %v1432, 0.0
  %v1653 = vmin.f32 %v1434, 0.0
  %v1654 = vmin.f32 %v1438, 0.0
  %v1655 = vmin.f32 %v1440, 0.0
  %v1656 = vmin.f32 %v1442, 0.0
  %v1657 = vmin.f32 %v1444, 0.0
  %v1658 = vmin.f32 %v1448, 0.0
  %v1659 = vmin.f32 %v1450, 0.0
  %v1660 = vmin.f32 %v1452, 0.0
  %v1661 = vmin.f32 %v1454, 0.0
  %v1662 = vmin.f32 %v1458, 0.0
  %v1663 = vmin.f32 %v1460, 0.0
  %v1664 = vmin.f32 %v1462, 0.0
  %v1665 = vmin.f32 %v1464, 0.0
  %v1666 = vmin.f32 %v1468, 0.0
  %v1667 = vmin.f32 %v1470, 0.0
  %v1668 = vmin.f32 %v1472, 0.0
  %v1669 = vmin.f32 %v1474, 0.0
  %v1670 = vmin.f32 %v1478, 0.0
  %v1671 = vmin.f32 %v1480, 0.0
  %v1672 = vmin.f32 %v1482, 0.0
  %v1673 = vmin.f32 %v1484, 0.0
  %v1674 = vmin.f32 %v1488, 0.0
  %v1675 = vmin.f32 %v1490, 0.0
  %v1676 = vmin.f32 %v1492, 0.0
  %v1677 = vmin.f32 %v1494, 0.0
  %v1678 = vmin.f32 %v1498, 0.0
  %v1679 = vmin.f32 %v1500, 0.0
  %v1680 = vmin.f32 %v1502, 0.0
  %v1681 = vmin.f32 %v1504, 0.0
  %v1682 = vmin.f32 %v1508, 0.0
  %v1683 = vmin.f32 %v1510, 0.0
  %v1684 = vmin.f32 %v1512, 0.0
  %v1685 = vmin.f32 %v1514, 0.0
  %v1686 = vmin.f32 %v1518, 0.0
  %v1687 = vmin.f32 %v1520, 0.0
  %v1688 = vmin.f32 %v1522, 0.0
  %v1689 = vmin.f32 %v1524, 0.0
  %v1690 = vmin.f32 %v1528, 0.0
  %v1691 = vmin.f32 %v1530, 0.0
  %v1692 = vmin.f32 %v1532, 0.0
  %v1693 = vmin.f32 %v1534, 0.0
  %v1694 = vmin.f32 %v1538, 0.0
  %v1695 = vmin.f32 %v1540, 0.0
  %v1696 = vmin.f32 %v1542, 0.0
  %v1697 = vmin.f32 %v1544, 0.0
  %v1698 = vmin.f32 %v1548, 0.0
  %v1699 = vmin.f32 %v1550, 0.0
  %v1700 = vmin.f32 %v1552, 0.0
  %v1701 = vmin.f32 %v1554, 0.0
  %v1702 = vmin.f32 %v1558, 0.0
  %v1703 = vmin.f32 %v1560, 0.0
  %v1704 = vmin.f32 %v1562, 0.0
  %v1705 = vmin.f32 %v1564, 0.0
  %v1706 = vmin.f32 %v1568, 0.0
  %v1707 = vmin.f32 %v1570, 0.0
  %v1708 = vmin.f32 %v1572, 0.0
  %v1709 = vmin.f32 %v1574, 0.0
  %v1710 = vmin.f32 %v1578, 0.0
  %v1711 = vmin.f32 %v1580, 0.0
  %v1712 = vmin.f32 %v1582, 0.0
  %v1713 = vmin.f32 %v1584, 0.0
  %v1714 = vmul.f32 %v1650, 1.442695
  %v1715 = vpow.pop %v1714
  %v1716 = vmul.f32 %v1651, 1.442695
  %v1717 = vpow.pop %v1716
  %v1718 = vmul.f32 %v1652, 1.442695
  %v1719 = vpow.pop %v1718
  %v1720 = vmul.f32 %v1653, 1.442695
  %v1721 = vpow.pop %v1720
  %v1722 = vmul.f32 %v1654, 1.442695
  %v1723 = vpow.pop %v1722
  %v1724 = vmul.f32 %v1655, 1.442695
  %v1725 = vpow.pop %v1724
  %v1726 = vmul.f32 %v1656, 1.442695
  %v1727 = vpow.pop %v1726
  %v1728 = vmul.f32 %v1657, 1.442695
  %v1729 = vpow.pop %v1728
  %v1730 = vmul.f32 %v1658, 1.442695
  %v1731 = vpow.pop %v1730
  %v1732 = vmul.f32 %v1659, 1.442695
  %v1733 = vpow.pop %v1732
  %v1734 = vmul.f32 %v1660, 1.442695
  %v1735 = vpow.pop %v1734
  %v1736 = vmul.f32 %v1661, 1.442695
  %v1737 = vpow.pop %v1736
  %v1738 = vmul.f32 %v1662, 1.442695
  %v1739 = vpow.pop %v1738
  %v1740 = vmul.f32 %v1663, 1.442695
  %v1741 = vpow.pop %v1740
  %v1742 = vmul.f32 %v1664, 1.442695
  %v1743 = vpow.pop %v1742
  %v1744 = vmul.f32 %v1665, 1.442695
  %v1745 = vpow.pop %v1744
  %v1746 = vmul.f32 %v1666, 1.442695
  %v1747 = vpow.pop %v1746
  %v1748 = vmul.f32 %v1667, 1.442695
  %v1749 = vpow.pop %v1748
  %v1750 = vmul.f32 %v1668, 1.442695
  %v1751 = vpow.pop %v1750
  %v1752 = vmul.f32 %v1669, 1.442695
  %v1753 = vpow.pop %v1752
  %v1754 = vmul.f32 %v1670, 1.442695
  %v1755 = vpow.pop %v1754
  %v1756 = vmul.f32 %v1671, 1.442695
  %v1757 = vpow.pop %v1756
  %v1758 = vmul.f32 %v1672, 1.442695
  %v1759 = vpow.pop %v1758
  %v1760 = vmul.f32 %v1673, 1.442695
  %v1761 = vpow.pop %v1760
  %v1762 = vmul.f32 %v1674, 1.442695
  %v1763 = vpow.pop %v1762
  %v1764 = vmul.f32 %v1675, 1.442695
  %v1765 = vpow.pop %v1764
  %v1766 = vmul.f32 %v1676, 1.442695
  %v1767 = vpow.pop %v1766
  %v1768 = vmul.f32 %v1677, 1.442695
  %v1769 = vpow.pop %v1768
  %v1770 = vmul.f32 %v1678, 1.442695
  %v1771 = vpow.pop %v1770
  %v1772 = vmul.f32 %v1679, 1.442695
  %v1773 = vpow.pop %v1772
  %v1774 = vmul.f32 %v1680, 1.442695
  %v1775 = vpow.pop %v1774
  %v1776 = vmul.f32 %v1681, 1.442695
  %v1777 = vpow.pop %v1776
  %v1778 = vmul.f32 %v1682, 1.442695
  %v1779 = vpow.pop %v1778
  %v1780 = vmul.f32 %v1683, 1.442695
  %v1781 = vpow.pop %v1780
  %v1782 = vmul.f32 %v1684, 1.442695
  %v1783 = vpow.pop %v1782
  %v1784 = vmul.f32 %v1685, 1.442695
  %v1785 = vpow.pop %v1784
  %v1786 = vmul.f32 %v1686, 1.442695
  %v1787 = vpow.pop %v1786
  %v1788 = vmul.f32 %v1687, 1.442695
  %v1789 = vpow.pop %v1788
  %v1790 = vmul.f32 %v1688, 1.442695
  %v1791 = vpow.pop %v1790
  %v1792 = vmul.f32 %v1689, 1.442695
  %v1793 = vpow.pop %v1792
  %v1794 = vmul.f32 %v1690, 1.442695
  %v1795 = vpow.pop %v1794
  %v1796 = vmul.f32 %v1691, 1.442695
  %v1797 = vpow.pop %v1796
  %v1798 = vmul.f32 %v1692, 1.442695
  %v1799 = vpow.pop %v1798
  %v1800 = vmul.f32 %v1693, 1.442695
  %v1801 = vpow.pop %v1800
  %v1802 = vmul.f32 %v1694, 1.442695
  %v1803 = vpow.pop %v1802
  %v1804 = vmul.f32 %v1695, 1.442695
  %v1805 = vpow.pop %v1804
  %v1806 = vmul.f32 %v1696, 1.442695
  %v1807 = vpow.pop %v1806
  %v1808 = vmul.f32 %v1697, 1.442695
  %v1809 = vpow.pop %v1808
  %v1810 = vmul.f32 %v1698, 1.442695
  %v1811 = vpow.pop %v1810
  %v1812 = vmul.f32 %v1699, 1.442695
  %v1813 = vpow.pop %v1812
  %v1814 = vmul.f32 %v1700, 1.442695
  %v1815 = vpow.pop %v1814
  %v1816 = vmul.f32 %v1701, 1.442695
  %v1817 = vpow.pop %v1816
  %v1818 = vmul.f32 %v1702, 1.442695
  %v1819 = vpow.pop %v1818
  %v1820 = vmul.f32 %v1703, 1.442695
  %v1821 = vpow.pop %v1820
  %v1822 = vmul.f32 %v1704, 1.442695
  %v1823 = vpow.pop %v1822
  %v1824 = vmul.f32 %v1705, 1.442695
  %v1825 = vpow.pop %v1824
  %v1826 = vmul.f32 %v1706, 1.442695
  %v1827 = vpow.pop %v1826
  %v1828 = vmul.f32 %v1707, 1.442695
  %v1829 = vpow.pop %v1828
  %v1830 = vmul.f32 %v1708, 1.442695
  %v1831 = vpow.pop %v1830
  %v1832 = vmul.f32 %v1709, 1.442695
  %v1833 = vpow.pop %v1832
  %v1834 = vmul.f32 %v1710, 1.442695
  %v1835 = vpow.pop %v1834
  %v1836 = vmul.f32 %v1711, 1.442695
  %v1837 = vpow.pop %v1836
  %v1838 = vmul.f32 %v1712, 1.442695
  %v1839 = vpow.pop %v1838
  %v1840 = vmul.f32 %v1713, 1.442695
  %v1841 = vpow.pop %v1840
  %v1842 = vsub.f32 %v1715, 1.0
  %v1843 = vsub.f32 %v1717, 1.0
  %v1844 = vsub.f32 %v1719, 1.0
  %v1845 = vsub.f32 %v1721, 1.0
  %v1846 = vsub.f32 %v1723, 1.0
  %v1847 = vsub.f32 %v1725, 1.0
  %v1848 = vsub.f32 %v1727, 1.0
  %v1849 = vsub.f32 %v1729, 1.0
  %v1850 = vsub.f32 %v1731, 1.0
  %v1851 = vsub.f32 %v1733, 1.0
  %v1852 = vsub.f32 %v1735, 1.0
  %v1853 = vsub.f32 %v1737, 1.0
  %v1854 = vsub.f32 %v1739, 1.0
  %v1855 = vsub.f32 %v1741, 1.0
  %v1856 = vsub.f32 %v1743, 1.0
  %v1857 = vsub.f32 %v1745, 1.0
  %v1858 = vsub.f32 %v1747, 1.0
  %v1859 = vsub.f32 %v1749, 1.0
  %v1860 = vsub.f32 %v1751, 1.0
  %v1861 = vsub.f32 %v1753, 1.0
  %v1862 = vsub.f32 %v1755, 1.0
  %v1863 = vsub.f32 %v1757, 1.0
  %v1864 = vsub.f32 %v1759, 1.0
  %v1865 = vsub.f32 %v1761, 1.0
  %v1866 = vsub.f32 %v1763, 1.0
  %v1867 = vsub.f32 %v1765, 1.0
  %v1868 = vsub.f32 %v1767, 1.0
  %v1869 = vsub.f32 %v1769, 1.0
  %v1870 = vsub.f32 %v1771, 1.0
  %v1871 = vsub.f32 %v1773, 1.0
  %v1872 = vsub.f32 %v1775, 1.0
  %v1873 = vsub.f32 %v1777, 1.0
  %v1874 = vsub.f32 %v1779, 1.0
  %v1875 = vsub.f32 %v1781, 1.0
  %v1876 = vsub.f32 %v1783, 1.0
  %v1877 = vsub.f32 %v1785, 1.0
  %v1878 = vsub.f32 %v1787, 1.0
  %v1879 = vsub.f32 %v1789, 1.0
  %v1880 = vsub.f32 %v1791, 1.0
  %v1881 = vsub.f32 %v1793, 1.0
  %v1882 = vsub.f32 %v1795, 1.0
  %v1883 = vsub.f32 %v1797, 1.0
  %v1884 = vsub.f32 %v1799, 1.0
  %v1885 = vsub.f32 %v1801, 1.0
  %v1886 = vsub.f32 %v1803, 1.0
  %v1887 = vsub.f32 %v1805, 1.0
  %v1888 = vsub.f32 %v1807, 1.0
  %v1889 = vsub.f32 %v1809, 1.0
  %v1890 = vsub.f32 %v1811, 1.0
  %v1891 = vsub.f32 %v1813, 1.0
  %v1892 = vsub.f32 %v1815, 1.0
  %v1893 = vsub.f32 %v1817, 1.0
  %v1894 = vsub.f32 %v1819, 1.0
  %v1895 = vsub.f32 %v1821, 1.0
  %v1896 = vsub.f32 %v1823, 1.0
  %v1897 = vsub.f32 %v1825, 1.0
  %v1898 = vsub.f32 %v1827, 1.0
  %v1899 = vsub.f32 %v1829, 1.0
  %v1900 = vsub.f32 %v1831, 1.0
  %v1901 = vsub.f32 %v1833, 1.0
  %v1902 = vsub.f32 %v1835, 1.0
  %v1903 = vsub.f32 %v1837, 1.0
  %v1904 = vsub.f32 %v1839, 1.0
  %v1905 = vsub.f32 %v1841, 1.0
  %v1906 = vsel %vm1586, %v1428, %v1842
  %v1907 = vsel %vm1587, %v1430, %v1843
  %v1908 = vsel %vm1588, %v1432, %v1844
  %v1909 = vsel %vm1589, %v1434, %v1845
  %v1910 = vsel %vm1590, %v1438, %v1846
  %v1911 = vsel %vm1591, %v1440, %v1847
  %v1912 = vsel %vm1592, %v1442, %v1848
  %v1913 = vsel %vm1593, %v1444, %v1849
  %v1914 = vsel %vm1594, %v1448, %v1850
  %v1915 = vsel %vm1595, %v1450, %v1851
  %v1916 = vsel %vm1596, %v1452, %v1852
  %v1917 = vsel %vm1597, %v1454, %v1853
  %v1918 = vsel %vm1598, %v1458, %v1854
  %v1919 = vsel %vm1599, %v1460, %v1855
  %v1920 = vsel %vm1600, %v1462, %v1856
  %v1921 = vsel %vm1601, %v1464, %v1857
  %v1922 = vsel %vm1602, %v1468, %v1858
  %v1923 = vsel %vm1603, %v1470, %v1859
  %v1924 = vsel %vm1604, %v1472, %v1860
  %v1925 = vsel %vm1605, %v1474, %v1861
  %v1926 = vsel %vm1606, %v1478, %v1862
  %v1927 = vsel %vm1607, %v1480, %v1863
  %v1928 = vsel %vm1608, %v1482, %v1864
  %v1929 = vsel %vm1609, %v1484, %v1865
  %v1930 = vsel %vm1610, %v1488, %v1866
  %v1931 = vsel %vm1611, %v1490, %v1867
  %v1932 = vsel %vm1612, %v1492, %v1868
  %v1933 = vsel %vm1613, %v1494, %v1869
  %v1934 = vsel %vm1614, %v1498, %v1870
  %v1935 = vsel %vm1615, %v1500, %v1871
  %v1936 = vsel %vm1616, %v1502, %v1872
  %v1937 = vsel %vm1617, %v1504, %v1873
  %v1938 = vsel %vm1618, %v1508, %v1874
  %v1939 = vsel %vm1619, %v1510, %v1875
  %v1940 = vsel %vm1620, %v1512, %v1876
  %v1941 = vsel %vm1621, %v1514, %v1877
  %v1942 = vsel %vm1622, %v1518, %v1878
  %v1943 = vsel %vm1623, %v1520, %v1879
  %v1944 = vsel %vm1624, %v1522, %v1880
  %v1945 = vsel %vm1625, %v1524, %v1881
  %v1946 = vsel %vm1626, %v1528, %v1882
  %v1947 = vsel %vm1627, %v1530, %v1883
  %v1948 = vsel %vm1628, %v1532, %v1884
  %v1949 = vsel %vm1629, %v1534, %v1885
  %v1950 = vsel %vm1630, %v1538, %v1886
  %v1951 = vsel %vm1631, %v1540, %v1887
  %v1952 = vsel %vm1632, %v1542, %v1888
  %v1953 = vsel %vm1633, %v1544, %v1889
  %v1954 = vsel %vm1634, %v1548, %v1890
  %v1955 = vsel %vm1635, %v1550, %v1891
  %v1956 = vsel %vm1636, %v1552, %v1892
  %v1957 = vsel %vm1637, %v1554, %v1893
  %v1958 = vsel %vm1638, %v1558, %v1894
  %v1959 = vsel %vm1639, %v1560, %v1895
  %v1960 = vsel %vm1640, %v1562, %v1896
  %v1961 = vsel %vm1641, %v1564, %v1897
  %v1962 = vsel %vm1642, %v1568, %v1898
  %v1963 = vsel %vm1643, %v1570, %v1899
  %v1964 = vsel %vm1644, %v1572, %v1900
  %v1965 = vsel %vm1645, %v1574, %v1901
  %v1966 = vsel %vm1646, %v1578, %v1902
  %v1967 = vsel %vm1647, %v1580, %v1903
  %v1968 = vsel %vm1648, %v1582, %v1904
  %v1969 = vsel %vm1649, %v1584, %v1905
  %v1970 = vld [vmem:[%s6] sm:$0xff]
  %v1971 = vld [vmem:[%s6 + $0x8] sm:$0xff]
  %v1972 = vpack.c.bf16 %v1908, %v1906
  %v1973 = vpack.c.bf16 %v1909, %v1907
  %v1974 = vpack.c.bf16 %v1912, %v1910
  %v1975 = vpack.c.bf16 %v1913, %v1911
  %v1976 = vpack.c.bf16 %v1916, %v1914
  %v1977 = vpack.c.bf16 %v1917, %v1915
  %v1978 = vpack.c.bf16 %v1920, %v1918
  %v1979 = vpack.c.bf16 %v1921, %v1919
  %v1980 = vpack.c.bf16 %v1924, %v1922
  %v1981 = vpack.c.bf16 %v1925, %v1923
  %v1982 = vpack.c.bf16 %v1928, %v1926
  %v1983 = vpack.c.bf16 %v1929, %v1927
  %v1984 = vpack.c.bf16 %v1932, %v1930
  %v1985 = vpack.c.bf16 %v1933, %v1931
  %v1986 = vpack.c.bf16 %v1936, %v1934
  %v1987 = vpack.c.bf16 %v1937, %v1935
  %v1988 = vpack.c.bf16 %v1940, %v1938
  %v1989 = vpack.c.bf16 %v1941, %v1939
  %v1990 = vpack.c.bf16 %v1944, %v1942
  %v1991 = vpack.c.bf16 %v1945, %v1943
  %v1992 = vpack.c.bf16 %v1948, %v1946
  %v1993 = vpack.c.bf16 %v1949, %v1947
  %v1994 = vpack.c.bf16 %v1952, %v1950
  %v1995 = vpack.c.bf16 %v1953, %v1951
  %v1996 = vpack.c.bf16 %v1956, %v1954
  %v1997 = vpack.c.bf16 %v1957, %v1955
  %v1998 = vpack.c.bf16 %v1960, %v1958
  %v1999 = vpack.c.bf16 %v1961, %v1959
  %v2000 = vpack.c.bf16 %v1964, %v1962
  %v2001 = vpack.c.bf16 %v1965, %v1963
  %v2002 = vpack.c.bf16 %v1968, %v1966
  %v2003 = vpack.c.bf16 %v1969, %v1967
  %v2004 = vld [vmem:[%s7] sm:$0xff]
  %v2005 = vld [vmem:[%s7 + $0x8] sm:$0xff]
  %2007 = vset.pattern.permute.xlu0 0
  %2008 = vperm.xlu0 %2007, %v2004
  %v2009 = vpop.permute.xlu0 %2008
  %2012 = vset.pattern.permute.xlu0 0
  %2013 = vperm.xlu0 %2012, %v2005
  %v2014 = vpop.permute.xlu0 %2013
  %v2018 = vunpack.c.l.b16 %v1970
  %v2019 = vunpack.c.h.b16 %v1970
  %v2020 = vunpack.c.l.b16 %v1971
  %v2021 = vunpack.c.h.b16 %v1971
  %v2022 = vpack.c.b16 %v2020, %v2018
  %v2023 = vpack.c.b16 %v2021, %v2019
  %2026 = vmatprep.subr.bf16.mxu0 %v1973
  %2027 = vmatpush1.bf16.msra.mxu0 %v1972
  %2028 = vmatprep.subr.bf16.mxu0 %v1975
  %2029 = vmatpush1.bf16.msra.mxu0 %v1974
  %2030 = vmatprep.subr.bf16.mxu0 %v1977
  %2031 = vmatpush1.bf16.msra.mxu0 %v1976
  %2032 = vmatprep.subr.bf16.mxu0 %v1979
  %2033 = vmatpush1.bf16.msra.mxu0 %v1978
  %2034 = vmatprep.subr.bf16.mxu0 %v1981
  %2035 = vmatpush1.bf16.msra.mxu0 %v1980
  %2036 = vmatprep.subr.bf16.mxu0 %v1983
  %2037 = vmatpush1.bf16.msra.mxu0 %v1982
  %2038 = vmatprep.subr.bf16.mxu0 %v1985
  %2039 = vmatpush1.bf16.msra.mxu0 %v1984
  %2040 = vmatprep.subr.bf16.mxu0 %v1987
  %2041 = vmatpush1.bf16.msra.mxu0 %v1986
  %2042 = vmatprep.subr.bf16.mxu0 %v1989
  %2043 = vmatpush1.bf16.msra.mxu0 %v1988
  %2044 = vmatprep.subr.bf16.mxu0 %v1991
  %2045 = vmatpush1.bf16.msra.mxu0 %v1990
  %2046 = vmatprep.subr.bf16.mxu0 %v1993
  %2047 = vmatpush1.bf16.msra.mxu0 %v1992
  %2048 = vmatprep.subr.bf16.mxu0 %v1995
  %2049 = vmatpush1.bf16.msra.mxu0 %v1994
  %2050 = vmatprep.subr.bf16.mxu0 %v1997
  %2051 = vmatpush1.bf16.msra.mxu0 %v1996
  %2052 = vmatprep.subr.bf16.mxu0 %v1999
  %2053 = vmatpush1.bf16.msra.mxu0 %v1998
  %2054 = vmatprep.subr.bf16.mxu0 %v2001
  %2055 = vmatpush1.bf16.msra.mxu0 %v2000
  %2056 = vmatprep.subr.bf16.mxu0 %v2003
  %2057 = vmatpush1.bf16.msra.mxu0 %v2002
  %2058 = vmatprep.mubr.bf16.mxu0 %v2023
  %2059 = vmatmul.mubr.bf16.gmra.mrb[0].mxu0 %v2022
  %v2060 = vpop.f32.mrb[0].mxu0
  %v2061 = vadd.f32 %v2009, %v2060
  %v2062 = vpop.f32.mrb[0].mxu0
  %v2063 = vadd.f32 %v2009, %v2062
  %v2064 = vpop.f32.mrb[0].mxu0
  %v2065 = vadd.f32 %v2014, %v2064
  %v2066 = vpop.f32.mrb[0].mxu0
  %v2067 = vadd.f32 %v2014, %v2066
  %2068 = vdwg.mxu0
  %v2069 = vxor.u32 %v2061, 2147483648
  %v2070 = vxor.u32 %v2063, 2147483648
  %v2071 = vxor.u32 %v2065, 2147483648
  %v2072 = vxor.u32 %v2067, 2147483648
  %v2073 = vmul.f32 %v2069, 1.442695
  %v2074 = vpow.pop %v2073
  %v2075 = vmul.f32 %v2070, 1.442695
  %v2076 = vpow.pop %v2075
  %v2077 = vmul.f32 %v2071, 1.442695
  %v2078 = vpow.pop %v2077
  %v2079 = vmul.f32 %v2072, 1.442695
  %v2080 = vpow.pop %v2079
  %v2081 = vadd.f32 %v2074, 1.0
  %v2082 = vadd.f32 %v2076, 1.0
  %v2083 = vadd.f32 %v2078, 1.0
  %v2084 = vadd.f32 %v2080, 1.0
  %v2085 = vrcp.pop %v2081
  %v2086 = vmul.f32 1.0, %v2085
  %v2087 = vrcp.pop %v2082
  %v2088 = vmul.f32 1.0, %v2087
  %v2089 = vrcp.pop %v2083
  %v2090 = vmul.f32 1.0, %v2089
  %v2091 = vrcp.pop %v2084
  %v2092 = vmul.f32 1.0, %v2091
  %v2093 = vld [vmem:[%s8] sm:$0xf]
  %v2094 = vpack.c.bf16 %v2090, %v2086
  %v2095 = vpack.c.bf16 %v2092, %v2088
  %v2096 = vld [vmem:[%s9] sm:$0xff]
  %2098 = vset.pattern.permute.xlu0 0
  %2099 = vperm.xlu0 %2098, %v2096
  %v2100 = vpop.permute.xlu0 %2099
  %vm2102 = vcmask 130048
  %v2104 = vsel %vm2102, %v2093, 0
  %2106 = vmatprep.subr.bf16.mxu0 %v2095
  %2107 = vmatpush1.bf16.msra.mxu0 %v2094
  %2108 = vmatprep.subr.bf16.mxu0 0
  %2109 = vmatpush1.bf16.msra.mxu0 0
  %2110 = vmatprep.subr.bf16.mxu0 0
  %2111 = vmatpush1.bf16.msra.mxu0 0
  %2112 = vmatprep.subr.bf16.mxu0 0
  %2113 = vmatpush1.bf16.msra.mxu0 0
  %2114 = vmatprep.subr.bf16.mxu0 0
  %2115 = vmatpush1.bf16.msra.mxu0 0
  %2116 = vmatprep.subr.bf16.mxu0 0
  %2117 = vmatpush1.bf16.msra.mxu0 0
  %2118 = vmatprep.subr.bf16.mxu0 0
  %2119 = vmatpush1.bf16.msra.mxu0 0
  %2120 = vmatprep.subr.bf16.mxu0 0
  %2121 = vmatpush1.bf16.msra.mxu0 0
  %2122 = vmatprep.subr.bf16.mxu0 0
  %2123 = vmatpush1.bf16.msra.mxu0 0
  %2124 = vmatprep.subr.bf16.mxu0 0
  %2125 = vmatpush1.bf16.msra.mxu0 0
  %2126 = vmatprep.subr.bf16.mxu0 0
  %2127 = vmatpush1.bf16.msra.mxu0 0
  %2128 = vmatprep.subr.bf16.mxu0 0
  %2129 = vmatpush1.bf16.msra.mxu0 0
  %2130 = vmatprep.subr.bf16.mxu0 0
  %2131 = vmatpush1.bf16.msra.mxu0 0
  %2132 = vmatprep.subr.bf16.mxu0 0
  %2133 = vmatpush1.bf16.msra.mxu0 0
  %2134 = vmatprep.subr.bf16.mxu0 0
  %2135 = vmatpush1.bf16.msra.mxu0 0
  %2136 = vmatprep.subr.bf16.mxu0 0
  %2137 = vmatpush1.bf16.msra.mxu0 0
  %2138 = vmatprep.mubr.bf16.mxu0 0
  %2139 = vmatmul.mubr.bf16.gmra.mrb[0].mxu0 %v2104
  %v2140 = vpop.f32.mrb[0].mxu0
  %v2141 = vadd.f32 %v2100, %v2140
  %v2142 = vpop.f32.mrb[0].mxu0
  %v2143 = vadd.f32 %v2100, %v2142
  %v2144 = vpop.f32.mrb[0].mxu0
  %v2145 = vpop.f32.mrb[0].mxu0
  %2146 = vdwg.mxu0
  %v2147 = vld [vmem:[%s1] sm:$0xff]
  %v2148 = vld [vmem:[%s1 + $0x8] sm:$0xff]
  %v2149 = vsub.f32 %v2141, %v2147
  %v2150 = vsub.f32 %v2143, %v2148
  %v2151 = vmul.f32 %v36, %v36
  %v2152 = vmul.f32 %v37, %v37
  %v2153 = vrot.slane %v2151, 4
  %v2154 = vadd.f32 %v2151, %v2153
  %v2155 = vrot.slane %v2154, 2
  %v2156 = vadd.f32 %v2154, %v2155
  %v2157 = vrot.slane %v2156, 1
  %v2158 = vadd.f32 %v2156, %v2157
  %v2159 = vrot.slane %v2152, 4
  %v2160 = vadd.f32 %v2152, %v2159
  %v2161 = vrot.slane %v2160, 2
  %v2162 = vadd.f32 %v2160, %v2161
  %v2163 = vrot.slane %v2162, 1
  %v2164 = vadd.f32 %v2162, %v2163
  %v2165 = vadd.f32 %v2158, 1e-12
  %v2166 = vadd.f32 %v2164, 1e-12
  %v2167 = vrsqrt.pop %v2165
  %v2168 = vrsqrt.pop %v2166
  %v2169 = vmul.f32 %v2149, %v36
  %v2170 = vmul.f32 %v2150, %v37
  %v2171 = vrot.slane %v2169, 4
  %v2172 = vadd.f32 %v2169, %v2171
  %v2173 = vrot.slane %v2172, 2
  %v2174 = vadd.f32 %v2172, %v2173
  %v2175 = vrot.slane %v2174, 1
  %v2176 = vadd.f32 %v2174, %v2175
  %v2177 = vrot.slane %v2170, 4
  %v2178 = vadd.f32 %v2170, %v2177
  %v2179 = vrot.slane %v2178, 2
  %v2180 = vadd.f32 %v2178, %v2179
  %v2181 = vrot.slane %v2180, 1
  %v2182 = vadd.f32 %v2180, %v2181
  %v2183 = vmul.f32 %v2176, %v2167
  %v2184 = vmul.f32 %v2182, %v2168
  %v2185 = vmul.f32 %v2183, %v2167
  %v2186 = vmul.f32 %v2184, %v2168
  %v2187 = vmul.f32 %v2185, %v36
  %v2188 = vmul.f32 %v2186, %v37
  %v2189 = vsub.f32 %v2149, %v2187
  %v2190 = vsub.f32 %v2150, %v2188
  %v2191 = vmul.f32 %v2189, %v2189
  %v2192 = vmul.f32 %v2190, %v2190
  %v2193 = vrot.slane %v2191, 4
  %v2194 = vadd.f32 %v2191, %v2193
  %v2195 = vrot.slane %v2194, 2
  %v2196 = vadd.f32 %v2194, %v2195
  %v2197 = vrot.slane %v2196, 1
  %v2198 = vadd.f32 %v2196, %v2197
  %v2199 = vrot.slane %v2192, 4
  %v2200 = vadd.f32 %v2192, %v2199
  %v2201 = vrot.slane %v2200, 2
  %v2202 = vadd.f32 %v2200, %v2201
  %v2203 = vrot.slane %v2202, 1
  %v2204 = vadd.f32 %v2202, %v2203
  %v2205 = vrsqrt.pop %v2198
  %v2206 = vmul.f32 %v2198, %v2205
  %vm2207 = vcmp.eq.f32.partialorder %v2198, inf
  %v2208 = vsel %vm2207, %v2198, %v2206
  %vm2209 = vcmp.eq.f32.partialorder %v2198, 0.0
  %v2210 = vand.u32 %v2198, 2147483648
  %v2211 = vsel %vm2209, %v2210, %v2208
  %v2212 = vrsqrt.pop %v2204
  %v2213 = vmul.f32 %v2204, %v2212
  %vm2214 = vcmp.eq.f32.partialorder %v2204, inf
  %v2215 = vsel %vm2214, %v2204, %v2213
  %vm2216 = vcmp.eq.f32.partialorder %v2204, 0.0
  %v2217 = vand.u32 %v2204, 2147483648
  %v2218 = vsel %vm2216, %v2217, %v2215
  %v2219 = vmul.f32 %v2211, 0.1
  %v2220 = vmul.f32 %v2218, 0.1
  %v2221 = vadd.f32 %v2183, %v2219
  %v2222 = vadd.f32 %v2184, %v2220
  %v2225 = vcombine.low %v2221, %v2222
  %v2227 = vunpack.c.l.s4 1966171168
  %v2228 = vunpack.c.0.s8 %v2227
  %v2229 = vlaneseq
  %v2230 = vshrl.u32 %v2229, 7
  %v2231 = vsub.s32 %v2228, %v2230
  %v2232 = vrot.slane %v2225, %v2231
  %v2234 = vunpack.c.l.s4 1966171168
  %v2235 = vunpack.c.0.s8 %v2234
  %v2236 = vlaneseq
  %v2237 = vshrl.u32 %v2236, 7
  %v2238 = vsub.s32 %v2235, %v2237
  %v2239 = vrot.slane %v2232, %v2238
  %v2241 = vlaneseq
  %vm2242 = vcmp.ge.s32.totalorder %v2241, 0
  %vm2243 = vcmp.lt.s32.totalorder %v2241, 256
  %vm2244 = vmand %vm2242, %vm2243
  %2245 = vst.msk [vmem:[%s10] sm:$0x3] %vm2244, %v2239
  // Predicated region
  $region42: #{closed_call.11} parent=0 // pred_check
    _
  $region43: #{closed_call.11} parent=0 // pred_check_branch
    %2247 = sbr.rel (0) target = $region45
  $region44: #{closed_call.11} parent=0 // pred_region
    _
  $region45: #{closed_call.11} parent=0 // pred_fallthru
    _
  // Predicated region
  $region46: #{closed_call.11} parent=0 // pred_check
    _
  $region47: #{closed_call.11} parent=0 // pred_check_branch
    %2249 = sbr.rel (0) target = $region49
  $region48: #{closed_call.11} parent=0 // pred_region
    _
  $region49: #{closed_call.11} parent=0 // pred_fallthru
    _

// kernel: dcem_forward.1
$region0: #{dcem_forward.1}
  #allocation0 [shape = 'u32[]', space=smem, size = 0x4, offset = 0x4, fixed_abs, tag = 'smem constant byte address 0x4 - core index']
  #allocation1 [shape = 'u32[144,128]{1,0:T(1,128)}', space=vmem, size = 0x12000, scoped, tag = 'internal scratch']
  %s0 = inlined_call_operand.vmem [shape: f32[8,128], index: 0, kind: input, shape index: {}]
  %s1 = inlined_call_operand.vmem [shape: f32[8,128], index: 1, kind: input, shape index: {}]
  %s2 = inlined_call_operand.vmem [shape: bf16[256,8], index: 2, kind: input, shape index: {}]
  %s3 = inlined_call_operand.vmem [shape: f32[256,1], index: 3, kind: input, shape index: {}]
  %s4 = inlined_call_operand.vmem [shape: bf16[256,256], index: 4, kind: input, shape index: {}]
  %s5 = inlined_call_operand.vmem [shape: f32[256,1], index: 5, kind: input, shape index: {}]
  %s6 = inlined_call_operand.vmem [shape: bf16[16,256], index: 6, kind: input, shape index: {}]
  %s7 = inlined_call_operand.vmem [shape: f32[16,1], index: 7, kind: input, shape index: {}]
  %s8 = inlined_call_operand.vmem [shape: bf16[8,16], index: 8, kind: input, shape index: {}]
  %s9 = inlined_call_operand.vmem [shape: f32[8,1], index: 9, kind: input, shape index: {}]
  %s10 = inlined_call_operand.hbm [shape: f32[1,128], index: 10, kind: output, shape index: {0}]
  %s11 = inlined_call_operand.vmem [shape: f32[16,128], index: 11, kind: output, shape index: {1}]
  %s12 = inlined_call_operand.vmem [shape: f32[8,128], index: 12, kind: output, shape index: {2}]
  %13 = xla_tuple %s10, %s11, %s12
  %s14 = sld [smem:[#allocation0]]
  $region66: #{dcem_forward.1} parent=0
    _
  %s16 = ssub.s32 1, %s14
  %s17 = scalar_select 0, %s16, %s14
  $region1: #{dcem_forward.1} parent=0
    #allocation2 [shape = 'u8[512]{0}', space=vmem, size = 0x400, scoped, tag = 'output window, operand 0, single buffered']
    #allocation3 [shape = 's32[1]{0}', space=sflag, size = 0x4, scoped, tag = 'scoped memory for dcem_forward.1']
    %18 = vsyncpa [#allocation3], 0
    // Predicated region
    $region2: #{dcem_forward.1} parent=1 // pred_check
      _
    $region3: #{dcem_forward.1} parent=1 // pred_check_branch
      %20 = sbr.rel (0) target = $region5
    $region4: #{dcem_forward.1} parent=1 // pred_region
      _
    $region5: #{dcem_forward.1} parent=1 // pred_fallthru
      _
    // Predicated region
    $region6: #{dcem_forward.1} parent=1 // pred_check
      _
    $region7: #{dcem_forward.1} parent=1 // pred_check_branch
      %22 = sbr.rel (0) target = $region9
    $region8: #{dcem_forward.1} parent=1 // pred_region
      _
    $region9: #{dcem_forward.1} parent=1 // pred_fallthru
      _
    // Predicated region
    $region10: #{dcem_forward.1} parent=1 // pred_check
      _
    $region11: #{dcem_forward.1} parent=1 // pred_check_branch
      %24 = sbr.rel (0) target = $region13
    $region12: #{dcem_forward.1} parent=1 // pred_region
      _
    $region13: #{dcem_forward.1} parent=1 // pred_fallthru
      _
    // Predicated region
    $region14: #{dcem_forward.1} parent=1 // pred_check
      _
    $region15: #{dcem_forward.1} parent=1 // pred_check_branch
      %26 = sbr.rel (0) target = $region17
    $region16: #{dcem_forward.1} parent=1 // pred_region
      _
    $region17: #{dcem_forward.1} parent=1 // pred_fallthru
      _
    // Predicated region
    $region18: #{dcem_forward.1} parent=1 // pred_check
      _
    $region19: #{dcem_forward.1} parent=1 // pred_check_branch
      %28 = sbr.rel (0) target = $region21
    $region20: #{dcem_forward.1} parent=1 // pred_region
      _
    $region21: #{dcem_forward.1} parent=1 // pred_fallthru
      _
    // Predicated region
    $region22: #{dcem_forward.1} parent=1 // pred_check
      _
    $region23: #{dcem_forward.1} parent=1 // pred_check_branch
      %30 = sbr.rel (0) target = $region25
    $region24: #{dcem_forward.1} parent=1 // pred_region
      _
    $region25: #{dcem_forward.1} parent=1 // pred_fallthru
      _
    // Predicated region
    $region26: #{dcem_forward.1} parent=1 // pred_check
      _
    $region27: #{dcem_forward.1} parent=1 // pred_check_branch
      %32 = sbr.rel (0) target = $region29
    $region28: #{dcem_forward.1} parent=1 // pred_region
      _
    $region29: #{dcem_forward.1} parent=1 // pred_fallthru
      _
    // Predicated region
    $region30: #{dcem_forward.1} parent=1 // pred_check
      _
    $region31: #{dcem_forward.1} parent=1 // pred_check_branch
      %34 = sbr.rel (0) target = $region33
    $region32: #{dcem_forward.1} parent=1 // pred_region
      _
    $region33: #{dcem_forward.1} parent=1 // pred_fallthru
      _
    // Predicated region
    $region34: #{dcem_forward.1} parent=1 // pred_check
      _
    $region35: #{dcem_forward.1} parent=1 // pred_check_branch
      %36 = sbr.rel (0) target = $region37
    $region36: #{dcem_forward.1} parent=1 // pred_region
      _
    $region37: #{dcem_forward.1} parent=1 // pred_fallthru
      _
    // Predicated region
    $region38: #{dcem_forward.1} parent=1 // pred_check
      _
    $region39: #{dcem_forward.1} parent=1 // pred_check_branch
      %38 = sbr.rel (0) target = $region41
    $region40: #{dcem_forward.1} parent=1 // pred_region
      _
    $region41: #{dcem_forward.1} parent=1 // pred_fallthru
      _
    %v40 = vld [vmem:[%s0] sm:$0xff]
    %v41 = vpack.c.bf16 %v40, %v40
    %v42 = vld [vmem:[%s2] sm:$0xf]
    %v43 = vld [vmem:[%s2 + $0x4] sm:$0xf]
    %v44 = vld [vmem:[%s2 + $0x8] sm:$0xf]
    %v45 = vld [vmem:[%s2 + $0xc] sm:$0xf]
    %v46 = vld [vmem:[%s2 + $0x10] sm:$0xf]
    %v47 = vld [vmem:[%s2 + $0x14] sm:$0xf]
    %v48 = vld [vmem:[%s2 + $0x18] sm:$0xf]
    %v49 = vld [vmem:[%s2 + $0x1c] sm:$0xf]
    %v50 = vld [vmem:[%s2 + $0x20] sm:$0xf]
    %v51 = vld [vmem:[%s2 + $0x24] sm:$0xf]
    %v52 = vld [vmem:[%s2 + $0x28] sm:$0xf]
    %v53 = vld [vmem:[%s2 + $0x2c] sm:$0xf]
    %v54 = vld [vmem:[%s2 + $0x30] sm:$0xf]
    %v55 = vld [vmem:[%s2 + $0x34] sm:$0xf]
    %v56 = vld [vmem:[%s2 + $0x38] sm:$0xf]
    %v57 = vld [vmem:[%s2 + $0x3c] sm:$0xf]
    %v58 = vld [vmem:[%s2 + $0x40] sm:$0xf]
    %v59 = vld [vmem:[%s2 + $0x44] sm:$0xf]
    %v60 = vld [vmem:[%s2 + $0x48] sm:$0xf]
    %v61 = vld [vmem:[%s2 + $0x4c] sm:$0xf]
    %v62 = vld [vmem:[%s2 + $0x50] sm:$0xf]
    %v63 = vld [vmem:[%s2 + $0x54] sm:$0xf]
    %v64 = vld [vmem:[%s2 + $0x58] sm:$0xf]
    %v65 = vld [vmem:[%s2 + $0x5c] sm:$0xf]
    %v66 = vld [vmem:[%s2 + $0x60] sm:$0xf]
    %v67 = vld [vmem:[%s2 + $0x64] sm:$0xf]
    %v68 = vld [vmem:[%s2 + $0x68] sm:$0xf]
    %v69 = vld [vmem:[%s2 + $0x6c] sm:$0xf]
    %v70 = vld [vmem:[%s2 + $0x70] sm:$0xf]
    %v71 = vld [vmem:[%s2 + $0x74] sm:$0xf]
    %v72 = vld [vmem:[%s2 + $0x78] sm:$0xf]
    %v73 = vld [vmem:[%s2 + $0x7c] sm:$0xf]
    %v74 = vld [vmem:[%s3] sm:$0xff]
    %v75 = vld [vmem:[%s3 + $0x8] sm:$0xff]
    %v76 = vld [vmem:[%s3 + $0x10] sm:$0xff]
    %v77 = vld [vmem:[%s3 + $0x18] sm:$0xff]
    %v78 = vld [vmem:[%s3 + $0x20] sm:$0xff]
    %v79 = vld [vmem:[%s3 + $0x28] sm:$0xff]
    %v80 = vld [vmem:[%s3 + $0x30] sm:$0xff]
    %v81 = vld [vmem:[%s3 + $0x38] sm:$0xff]
    %v82 = vld [vmem:[%s3 + $0x40] sm:$0xff]
    %v83 = vld [vmem:[%s3 + $0x48] sm:$0xff]
    %v84 = vld [vmem:[%s3 + $0x50] sm:$0xff]
    %v85 = vld [vmem:[%s3 + $0x58] sm:$0xff]
    %v86 = vld [vmem:[%s3 + $0x60] sm:$0xff]
    %v87 = vld [vmem:[%s3 + $0x68] sm:$0xff]
    %v88 = vld [vmem:[%s3 + $0x70] sm:$0xff]
    %v89 = vld [vmem:[%s3 + $0x78] sm:$0xff]
    %v90 = vld [vmem:[%s3 + $0x80] sm:$0xff]
    %v91 = vld [vmem:[%s3 + $0x88] sm:$0xff]
    %v92 = vld [vmem:[%s3 + $0x90] sm:$0xff]
    %v93 = vld [vmem:[%s3 + $0x98] sm:$0xff]
    %v94 = vld [vmem:[%s3 + $0xa0] sm:$0xff]
    %v95 = vld [vmem:[%s3 + $0xa8] sm:$0xff]
    %v96 = vld [vmem:[%s3 + $0xb0] sm:$0xff]
    %v97 = vld [vmem:[%s3 + $0xb8] sm:$0xff]
    %v98 = vld [vmem:[%s3 + $0xc0] sm:$0xff]
    %v99 = vld [vmem:[%s3 + $0xc8] sm:$0xff]
    %v100 = vld [vmem:[%s3 + $0xd0] sm:$0xff]
    %v101 = vld [vmem:[%s3 + $0xd8] sm:$0xff]
    %v102 = vld [vmem:[%s3 + $0xe0] sm:$0xff]
    %v103 = vld [vmem:[%s3 + $0xe8] sm:$0xff]
    %v104 = vld [vmem:[%s3 + $0xf0] sm:$0xff]
    %v105 = vld [vmem:[%s3 + $0xf8] sm:$0xff]
    %107 = vset.pattern.permute.xlu0 0
    %108 = vperm.xlu0 %107, %v74
    %v109 = vpop.permute.xlu0 %108
    %112 = vset.pattern.permute.xlu0 0
    %113 = vperm.xlu0 %112, %v75
    %v114 = vpop.permute.xlu0 %113
    %117 = vset.pattern.permute.xlu0 0
    %118 = vperm.xlu0 %117, %v76
    %v119 = vpop.permute.xlu0 %118
    %122 = vset.pattern.permute.xlu0 0
    %123 = vperm.xlu0 %122, %v77
    %v124 = vpop.permute.xlu0 %123
    %127 = vset.pattern.permute.xlu0 0
    %128 = vperm.xlu0 %127, %v78
    %v129 = vpop.permute.xlu0 %128
    %132 = vset.pattern.permute.xlu0 0
    %133 = vperm.xlu0 %132, %v79
    %v134 = vpop.permute.xlu0 %133
    %137 = vset.pattern.permute.xlu0 0
    %138 = vperm.xlu0 %137, %v80
    %v139 = vpop.permute.xlu0 %138
    %142 = vset.pattern.permute.xlu0 0
    %143 = vperm.xlu0 %142, %v81
    %v144 = vpop.permute.xlu0 %143
    %147 = vset.pattern.permute.xlu0 0
    %148 = vperm.xlu0 %147, %v82
    %v149 = vpop.permute.xlu0 %148
    %152 = vset.pattern.permute.xlu0 0
    %153 = vperm.xlu0 %152, %v83
    %v154 = vpop.permute.xlu0 %153
    %157 = vset.pattern.permute.xlu0 0
    %158 = vperm.xlu0 %157, %v84
    %v159 = vpop.permute.xlu0 %158
    %162 = vset.pattern.permute.xlu0 0
    %163 = vperm.xlu0 %162, %v85
    %v164 = vpop.permute.xlu0 %163
    %167 = vset.pattern.permute.xlu0 0
    %168 = vperm.xlu0 %167, %v86
    %v169 = vpop.permute.xlu0 %168
    %172 = vset.pattern.permute.xlu0 0
    %173 = vperm.xlu0 %172, %v87
    %v174 = vpop.permute.xlu0 %173
    %177 = vset.pattern.permute.xlu0 0
    %178 = vperm.xlu0 %177, %v88
    %v179 = vpop.permute.xlu0 %178
    %182 = vset.pattern.permute.xlu0 0
    %183 = vperm.xlu0 %182, %v89
    %v184 = vpop.permute.xlu0 %183
    %187 = vset.pattern.permute.xlu0 0
    %188 = vperm.xlu0 %187, %v90
    %v189 = vpop.permute.xlu0 %188
    %192 = vset.pattern.permute.xlu0 0
    %193 = vperm.xlu0 %192, %v91
    %v194 = vpop.permute.xlu0 %193
    %197 = vset.pattern.permute.xlu0 0
    %198 = vperm.xlu0 %197, %v92
    %v199 = vpop.permute.xlu0 %198
    %202 = vset.pattern.permute.xlu0 0
    %203 = vperm.xlu0 %202, %v93
    %v204 = vpop.permute.xlu0 %203
    %207 = vset.pattern.permute.xlu0 0
    %208 = vperm.xlu0 %207, %v94
    %v209 = vpop.permute.xlu0 %208
    %212 = vset.pattern.permute.xlu0 0
    %213 = vperm.xlu0 %212, %v95
    %v214 = vpop.permute.xlu0 %213
    %217 = vset.pattern.permute.xlu0 0
    %218 = vperm.xlu0 %217, %v96
    %v219 = vpop.permute.xlu0 %218
    %222 = vset.pattern.permute.xlu0 0
    %223 = vperm.xlu0 %222, %v97
    %v224 = vpop.permute.xlu0 %223
    %227 = vset.pattern.permute.xlu0 0
    %228 = vperm.xlu0 %227, %v98
    %v229 = vpop.permute.xlu0 %228
    %232 = vset.pattern.permute.xlu0 0
    %233 = vperm.xlu0 %232, %v99
    %v234 = vpop.permute.xlu0 %233
    %237 = vset.pattern.permute.xlu0 0
    %238 = vperm.xlu0 %237, %v100
    %v239 = vpop.permute.xlu0 %238
    %242 = vset.pattern.permute.xlu0 0
    %243 = vperm.xlu0 %242, %v101
    %v244 = vpop.permute.xlu0 %243
    %247 = vset.pattern.permute.xlu0 0
    %248 = vperm.xlu0 %247, %v102
    %v249 = vpop.permute.xlu0 %248
    %252 = vset.pattern.permute.xlu0 0
    %253 = vperm.xlu0 %252, %v103
    %v254 = vpop.permute.xlu0 %253
    %257 = vset.pattern.permute.xlu0 0
    %258 = vperm.xlu0 %257, %v104
    %v259 = vpop.permute.xlu0 %258
    %262 = vset.pattern.permute.xlu0 0
    %263 = vperm.xlu0 %262, %v105
    %v264 = vpop.permute.xlu0 %263
    %v298 = vunpack.c.l.b16 %v42
    %v299 = vunpack.c.l.b16 %v43
    %v300 = vunpack.c.l.b16 %v44
    %v301 = vunpack.c.l.b16 %v45
    %v302 = vunpack.c.l.b16 %v46
    %v303 = vunpack.c.l.b16 %v47
    %v304 = vunpack.c.l.b16 %v48
    %v305 = vunpack.c.l.b16 %v49
    %v306 = vunpack.c.l.b16 %v50
    %v307 = vunpack.c.l.b16 %v51
    %v308 = vunpack.c.l.b16 %v52
    %v309 = vunpack.c.l.b16 %v53
    %v310 = vunpack.c.l.b16 %v54
    %v311 = vunpack.c.l.b16 %v55
    %v312 = vunpack.c.l.b16 %v56
    %v313 = vunpack.c.l.b16 %v57
    %v314 = vunpack.c.l.b16 %v58
    %v315 = vunpack.c.l.b16 %v59
    %v316 = vunpack.c.l.b16 %v60
    %v317 = vunpack.c.l.b16 %v61
    %v318 = vunpack.c.l.b16 %v62
    %v319 = vunpack.c.l.b16 %v63
    %v320 = vunpack.c.l.b16 %v64
    %v321 = vunpack.c.l.b16 %v65
    %v322 = vunpack.c.l.b16 %v66
    %v323 = vunpack.c.l.b16 %v67
    %v324 = vunpack.c.l.b16 %v68
    %v325 = vunpack.c.l.b16 %v69
    %v326 = vunpack.c.l.b16 %v70
    %v327 = vunpack.c.l.b16 %v71
    %v328 = vunpack.c.l.b16 %v72
    %v329 = vunpack.c.l.b16 %v73
    %v330 = vpack.c.b16 %v299, %v298
    %v331 = vpack.c.b16 %v301, %v300
    %v332 = vpack.c.b16 %v303, %v302
    %v333 = vpack.c.b16 %v305, %v304
    %v334 = vpack.c.b16 %v307, %v306
    %v335 = vpack.c.b16 %v309, %v308
    %v336 = vpack.c.b16 %v311, %v310
    %v337 = vpack.c.b16 %v313, %v312
    %v338 = vpack.c.b16 %v315, %v314
    %v339 = vpack.c.b16 %v317, %v316
    %v340 = vpack.c.b16 %v319, %v318
    %v341 = vpack.c.b16 %v321, %v320
    %v342 = vpack.c.b16 %v323, %v322
    %v343 = vpack.c.b16 %v325, %v324
    %v344 = vpack.c.b16 %v327, %v326
    %v345 = vpack.c.b16 %v329, %v328
    %vm346 = vcmask 64512
    %v348 = vsel %vm346, %v330, 0
    %v351 = vsel %vm346, %v331, 0
    %v354 = vsel %vm346, %v332, 0
    %v357 = vsel %vm346, %v333, 0
    %v360 = vsel %vm346, %v334, 0
    %v363 = vsel %vm346, %v335, 0
    %v366 = vsel %vm346, %v336, 0
    %v369 = vsel %vm346, %v337, 0
    %v372 = vsel %vm346, %v338, 0
    %v375 = vsel %vm346, %v339, 0
    %v378 = vsel %vm346, %v340, 0
    %v381 = vsel %vm346, %v341, 0
    %v384 = vsel %vm346, %v342, 0
    %v387 = vsel %vm346, %v343, 0
    %v390 = vsel %vm346, %v344, 0
    %v393 = vsel %vm346, %v345, 0
    %vm395 = vcmask 1043456
    %v397 = vsel %vm395, %v41, 0
    %399 = vmatprep.subr.bf16.mxu0 0
    %400 = vmatpush1.bf16.msra.mxu0 %v397
    %401 = vmatprep.subr.bf16.mxu0 0
    %402 = vmatpush1.bf16.msra.mxu0 0
    %403 = vmatprep.subr.bf16.mxu0 0
    %404 = vmatpush1.bf16.msra.mxu0 0
    %405 = vmatprep.subr.bf16.mxu0 0
    %406 = vmatpush1.bf16.msra.mxu0 0
    %407 = vmatprep.subr.bf16.mxu0 0
    %408 = vmatpush1.bf16.msra.mxu0 0
    %409 = vmatprep.subr.bf16.mxu0 0
    %410 = vmatpush1.bf16.msra.mxu0 0
    %411 = vmatprep.subr.bf16.mxu0 0
    %412 = vmatpush1.bf16.msra.mxu0 0
    %413 = vmatprep.subr.bf16.mxu0 0
    %414 = vmatpush1.bf16.msra.mxu0 0
    %415 = vmatprep.subr.bf16.mxu0 0
    %416 = vmatpush1.bf16.msra.mxu0 0
    %417 = vmatprep.subr.bf16.mxu0 0
    %418 = vmatpush1.bf16.msra.mxu0 0
    %419 = vmatprep.subr.bf16.mxu0 0
    %420 = vmatpush1.bf16.msra.mxu0 0
    %421 = vmatprep.subr.bf16.mxu0 0
    %422 = vmatpush1.bf16.msra.mxu0 0
    %423 = vmatprep.subr.bf16.mxu0 0
    %424 = vmatpush1.bf16.msra.mxu0 0
    %425 = vmatprep.subr.bf16.mxu0 0
    %426 = vmatpush1.bf16.msra.mxu0 0
    %427 = vmatprep.subr.bf16.mxu0 0
    %428 = vmatpush1.bf16.msra.mxu0 0
    %429 = vmatprep.subr.bf16.mxu0 0
    %430 = vmatpush1.bf16.msra.mxu0 0
    %431 = vmatprep.mubr.bf16.mxu0 0
    %432 = vmatmul.mubr.bf16.gmra.mrb[0].mxu0 %v348
    %v433 = vpop.f32.mrb[0].mxu0
    %v434 = vadd.f32 %v109, %v433
    %v435 = vpop.f32.mrb[0].mxu0
    %v436 = vpop.f32.mrb[0].mxu0
    %v437 = vadd.f32 %v114, %v436
    %v438 = vpop.f32.mrb[0].mxu0
    %439 = vmatprep.mubr.bf16.mxu0 0
    %440 = vmatmul.mubr.bf16.gmra.mrb[0].mxu0 %v351
    %v441 = vpop.f32.mrb[0].mxu0
    %v442 = vadd.f32 %v119, %v441
    %v443 = vpop.f32.mrb[0].mxu0
    %v444 = vpop.f32.mrb[0].mxu0
    %v445 = vadd.f32 %v124, %v444
    %v446 = vpop.f32.mrb[0].mxu0
    %447 = vmatprep.mubr.bf16.mxu0 0
    %448 = vmatmul.mubr.bf16.gmra.mrb[0].mxu0 %v354
    %v449 = vpop.f32.mrb[0].mxu0
    %v450 = vadd.f32 %v129, %v449
    %v451 = vpop.f32.mrb[0].mxu0
    %v452 = vpop.f32.mrb[0].mxu0
    %v453 = vadd.f32 %v134, %v452
    %v454 = vpop.f32.mrb[0].mxu0
    %455 = vmatprep.mubr.bf16.mxu0 0
    %456 = vmatmul.mubr.bf16.gmra.mrb[0].mxu0 %v357
    %v457 = vpop.f32.mrb[0].mxu0
    %v458 = vadd.f32 %v139, %v457
    %v459 = vpop.f32.mrb[0].mxu0
    %v460 = vpop.f32.mrb[0].mxu0
    %v461 = vadd.f32 %v144, %v460
    %v462 = vpop.f32.mrb[0].mxu0
    %463 = vmatprep.mubr.bf16.mxu0 0
    %464 = vmatmul.mubr.bf16.gmra.mrb[0].mxu0 %v360
    %v465 = vpop.f32.mrb[0].mxu0
    %v466 = vadd.f32 %v149, %v465
    %v467 = vpop.f32.mrb[0].mxu0
    %v468 = vpop.f32.mrb[0].mxu0
    %v469 = vadd.f32 %v154, %v468
    %v470 = vpop.f32.mrb[0].mxu0
    %471 = vmatprep.mubr.bf16.mxu0 0
    %472 = vmatmul.mubr.bf16.gmra.mrb[0].mxu0 %v363
    %v473 = vpop.f32.mrb[0].mxu0
    %v474 = vadd.f32 %v159, %v473
    %v475 = vpop.f32.mrb[0].mxu0
    %v476 = vpop.f32.mrb[0].mxu0
    %v477 = vadd.f32 %v164, %v476
    %v478 = vpop.f32.mrb[0].mxu0
    %479 = vmatprep.mubr.bf16.mxu0 0
    %480 = vmatmul.mubr.bf16.gmra.mrb[0].mxu0 %v366
    %v481 = vpop.f32.mrb[0].mxu0
    %v482 = vadd.f32 %v169, %v481
    %v483 = vpop.f32.mrb[0].mxu0
    %v484 = vpop.f32.mrb[0].mxu0
    %v485 = vadd.f32 %v174, %v484
    %v486 = vpop.f32.mrb[0].mxu0
    %487 = vmatprep.mubr.bf16.mxu0 0
    %488 = vmatmul.mubr.bf16.gmra.mrb[0].mxu0 %v369
    %v489 = vpop.f32.mrb[0].mxu0
    %v490 = vadd.f32 %v179, %v489
    %v491 = vpop.f32.mrb[0].mxu0
    %v492 = vpop.f32.mrb[0].mxu0
    %v493 = vadd.f32 %v184, %v492
    %v494 = vpop.f32.mrb[0].mxu0
    %495 = vmatprep.mubr.bf16.mxu0 0
    %496 = vmatmul.mubr.bf16.gmra.mrb[0].mxu0 %v372
    %v497 = vpop.f32.mrb[0].mxu0
    %v498 = vadd.f32 %v189, %v497
    %v499 = vpop.f32.mrb[0].mxu0
    %v500 = vpop.f32.mrb[0].mxu0
    %v501 = vadd.f32 %v194, %v500
    %v502 = vpop.f32.mrb[0].mxu0
    %503 = vmatprep.mubr.bf16.mxu0 0
    %504 = vmatmul.mubr.bf16.gmra.mrb[0].mxu0 %v375
    %v505 = vpop.f32.mrb[0].mxu0
    %v506 = vadd.f32 %v199, %v505
    %v507 = vpop.f32.mrb[0].mxu0
    %v508 = vpop.f32.mrb[0].mxu0
    %v509 = vadd.f32 %v204, %v508
    %v510 = vpop.f32.mrb[0].mxu0
    %511 = vmatprep.mubr.bf16.mxu0 0
    %512 = vmatmul.mubr.bf16.gmra.mrb[0].mxu0 %v378
    %v513 = vpop.f32.mrb[0].mxu0
    %v514 = vadd.f32 %v209, %v513
    %v515 = vpop.f32.mrb[0].mxu0
    %v516 = vpop.f32.mrb[0].mxu0
    %v517 = vadd.f32 %v214, %v516
    %v518 = vpop.f32.mrb[0].mxu0
    %519 = vmatprep.mubr.bf16.mxu0 0
    %520 = vmatmul.mubr.bf16.gmra.mrb[0].mxu0 %v381
    %v521 = vpop.f32.mrb[0].mxu0
    %v522 = vadd.f32 %v219, %v521
    %v523 = vpop.f32.mrb[0].mxu0
    %v524 = vpop.f32.mrb[0].mxu0
    %v525 = vadd.f32 %v224, %v524
    %v526 = vpop.f32.mrb[0].mxu0
    %527 = vmatprep.mubr.bf16.mxu0 0
    %528 = vmatmul.mubr.bf16.gmra.mrb[0].mxu0 %v384
    %v529 = vpop.f32.mrb[0].mxu0
    %v530 = vadd.f32 %v229, %v529
    %v531 = vpop.f32.mrb[0].mxu0
    %v532 = vpop.f32.mrb[0].mxu0
    %v533 = vadd.f32 %v234, %v532
    %v534 = vpop.f32.mrb[0].mxu0
    %535 = vmatprep.mubr.bf16.mxu0 0
    %536 = vmatmul.mubr.bf16.gmra.mrb[0].mxu0 %v387
    %v537 = vpop.f32.mrb[0].mxu0
    %v538 = vadd.f32 %v239, %v537
    %v539 = vpop.f32.mrb[0].mxu0
    %v540 = vpop.f32.mrb[0].mxu0
    %v541 = vadd.f32 %v244, %v540
    %v542 = vpop.f32.mrb[0].mxu0
    %543 = vmatprep.mubr.bf16.mxu0 0
    %544 = vmatmul.mubr.bf16.gmra.mrb[0].mxu0 %v390
    %v545 = vpop.f32.mrb[0].mxu0
    %v546 = vadd.f32 %v249, %v545
    %v547 = vpop.f32.mrb[0].mxu0
    %v548 = vpop.f32.mrb[0].mxu0
    %v549 = vadd.f32 %v254, %v548
    %v550 = vpop.f32.mrb[0].mxu0
    %551 = vmatprep.mubr.bf16.mxu0 0
    %552 = vmatmul.mubr.bf16.gmra.mrb[0].mxu0 %v393
    %v553 = vpop.f32.mrb[0].mxu0
    %v554 = vadd.f32 %v259, %v553
    %v555 = vpop.f32.mrb[0].mxu0
    %v556 = vpop.f32.mrb[0].mxu0
    %v557 = vadd.f32 %v264, %v556
    %v558 = vpop.f32.mrb[0].mxu0
    %559 = vdwg.mxu0
    %vm560 = vcmp.gt.f32.partialorder %v434, 0.0
    %vm561 = vcmp.gt.f32.partialorder %v437, 0.0
    %vm562 = vcmp.gt.f32.partialorder %v442, 0.0
    %vm563 = vcmp.gt.f32.partialorder %v445, 0.0
    %vm564 = vcmp.gt.f32.partialorder %v450, 0.0
    %vm565 = vcmp.gt.f32.partialorder %v453, 0.0
    %vm566 = vcmp.gt.f32.partialorder %v458, 0.0
    %vm567 = vcmp.gt.f32.partialorder %v461, 0.0
    %vm568 = vcmp.gt.f32.partialorder %v466, 0.0
    %vm569 = vcmp.gt.f32.partialorder %v469, 0.0
    %vm570 = vcmp.gt.f32.partialorder %v474, 0.0
    %vm571 = vcmp.gt.f32.partialorder %v477, 0.0
    %vm572 = vcmp.gt.f32.partialorder %v482, 0.0
    %vm573 = vcmp.gt.f32.partialorder %v485, 0.0
    %vm574 = vcmp.gt.f32.partialorder %v490, 0.0
    %vm575 = vcmp.gt.f32.partialorder %v493, 0.0
    %vm576 = vcmp.gt.f32.partialorder %v498, 0.0
    %vm577 = vcmp.gt.f32.partialorder %v501, 0.0
    %vm578 = vcmp.gt.f32.partialorder %v506, 0.0
    %vm579 = vcmp.gt.f32.partialorder %v509, 0.0
    %vm580 = vcmp.gt.f32.partialorder %v514, 0.0
    %vm581 = vcmp.gt.f32.partialorder %v517, 0.0
    %vm582 = vcmp.gt.f32.partialorder %v522, 0.0
    %vm583 = vcmp.gt.f32.partialorder %v525, 0.0
    %vm584 = vcmp.gt.f32.partialorder %v530, 0.0
    %vm585 = vcmp.gt.f32.partialorder %v533, 0.0
    %vm586 = vcmp.gt.f32.partialorder %v538, 0.0
    %vm587 = vcmp.gt.f32.partialorder %v541, 0.0
    %vm588 = vcmp.gt.f32.partialorder %v546, 0.0
    %vm589 = vcmp.gt.f32.partialorder %v549, 0.0
    %vm590 = vcmp.gt.f32.partialorder %v554, 0.0
    %vm591 = vcmp.gt.f32.partialorder %v557, 0.0
    %v592 = vmin.f32 %v434, 0.0
    %v593 = vmin.f32 %v437, 0.0
    %v594 = vmin.f32 %v442, 0.0
    %v595 = vmin.f32 %v445, 0.0
    %v596 = vmin.f32 %v450, 0.0
    %v597 = vmin.f32 %v453, 0.0
    %v598 = vmin.f32 %v458, 0.0
    %v599 = vmin.f32 %v461, 0.0
    %v600 = vmin.f32 %v466, 0.0
    %v601 = vmin.f32 %v469, 0.0
    %v602 = vmin.f32 %v474, 0.0
    %v603 = vmin.f32 %v477, 0.0
    %v604 = vmin.f32 %v482, 0.0
    %v605 = vmin.f32 %v485, 0.0
    %v606 = vmin.f32 %v490, 0.0
    %v607 = vmin.f32 %v493, 0.0
    %v608 = vmin.f32 %v498, 0.0
    %v609 = vmin.f32 %v501, 0.0
    %v610 = vmin.f32 %v506, 0.0
    %v611 = vmin.f32 %v509, 0.0
    %v612 = vmin.f32 %v514, 0.0
    %v613 = vmin.f32 %v517, 0.0
    %v614 = vmin.f32 %v522, 0.0
    %v615 = vmin.f32 %v525, 0.0
    %v616 = vmin.f32 %v530, 0.0
    %v617 = vmin.f32 %v533, 0.0
    %v618 = vmin.f32 %v538, 0.0
    %v619 = vmin.f32 %v541, 0.0
    %v620 = vmin.f32 %v546, 0.0
    %v621 = vmin.f32 %v549, 0.0
    %v622 = vmin.f32 %v554, 0.0
    %v623 = vmin.f32 %v557, 0.0
    %v624 = vmul.f32 %v592, 1.442695
    %v625 = vpow.pop %v624
    %v626 = vmul.f32 %v593, 1.442695
    %v627 = vpow.pop %v626
    %v628 = vmul.f32 %v594, 1.442695
    %v629 = vpow.pop %v628
    %v630 = vmul.f32 %v595, 1.442695
    %v631 = vpow.pop %v630
    %v632 = vmul.f32 %v596, 1.442695
    %v633 = vpow.pop %v632
    %v634 = vmul.f32 %v597, 1.442695
    %v635 = vpow.pop %v634
    %v636 = vmul.f32 %v598, 1.442695
    %v637 = vpow.pop %v636
    %v638 = vmul.f32 %v599, 1.442695
    %v639 = vpow.pop %v638
    %v640 = vmul.f32 %v600, 1.442695
    %v641 = vpow.pop %v640
    %v642 = vmul.f32 %v601, 1.442695
    %v643 = vpow.pop %v642
    %v644 = vmul.f32 %v602, 1.442695
    %v645 = vpow.pop %v644
    %v646 = vmul.f32 %v603, 1.442695
    %v647 = vpow.pop %v646
    %v648 = vmul.f32 %v604, 1.442695
    %v649 = vpow.pop %v648
    %v650 = vmul.f32 %v605, 1.442695
    %v651 = vpow.pop %v650
    %v652 = vmul.f32 %v606, 1.442695
    %v653 = vpow.pop %v652
    %v654 = vmul.f32 %v607, 1.442695
    %v655 = vpow.pop %v654
    %v656 = vmul.f32 %v608, 1.442695
    %v657 = vpow.pop %v656
    %v658 = vmul.f32 %v609, 1.442695
    %v659 = vpow.pop %v658
    %v660 = vmul.f32 %v610, 1.442695
    %v661 = vpow.pop %v660
    %v662 = vmul.f32 %v611, 1.442695
    %v663 = vpow.pop %v662
    %v664 = vmul.f32 %v612, 1.442695
    %v665 = vpow.pop %v664
    %v666 = vmul.f32 %v613, 1.442695
    %v667 = vpow.pop %v666
    %v668 = vmul.f32 %v614, 1.442695
    %v669 = vpow.pop %v668
    %v670 = vmul.f32 %v615, 1.442695
    %v671 = vpow.pop %v670
    %v672 = vmul.f32 %v616, 1.442695
    %v673 = vpow.pop %v672
    %v674 = vmul.f32 %v617, 1.442695
    %v675 = vpow.pop %v674
    %v676 = vmul.f32 %v618, 1.442695
    %v677 = vpow.pop %v676
    %v678 = vmul.f32 %v619, 1.442695
    %v679 = vpow.pop %v678
    %v680 = vmul.f32 %v620, 1.442695
    %v681 = vpow.pop %v680
    %v682 = vmul.f32 %v621, 1.442695
    %v683 = vpow.pop %v682
    %v684 = vmul.f32 %v622, 1.442695
    %v685 = vpow.pop %v684
    %v686 = vmul.f32 %v623, 1.442695
    %v687 = vpow.pop %v686
    %v688 = vsub.f32 %v625, 1.0
    %v689 = vsub.f32 %v627, 1.0
    %v690 = vsub.f32 %v629, 1.0
    %v691 = vsub.f32 %v631, 1.0
    %v692 = vsub.f32 %v633, 1.0
    %v693 = vsub.f32 %v635, 1.0
    %v694 = vsub.f32 %v637, 1.0
    %v695 = vsub.f32 %v639, 1.0
    %v696 = vsub.f32 %v641, 1.0
    %v697 = vsub.f32 %v643, 1.0
    %v698 = vsub.f32 %v645, 1.0
    %v699 = vsub.f32 %v647, 1.0
    %v700 = vsub.f32 %v649, 1.0
    %v701 = vsub.f32 %v651, 1.0
    %v702 = vsub.f32 %v653, 1.0
    %v703 = vsub.f32 %v655, 1.0
    %v704 = vsub.f32 %v657, 1.0
    %v705 = vsub.f32 %v659, 1.0
    %v706 = vsub.f32 %v661, 1.0
    %v707 = vsub.f32 %v663, 1.0
    %v708 = vsub.f32 %v665, 1.0
    %v709 = vsub.f32 %v667, 1.0
    %v710 = vsub.f32 %v669, 1.0
    %v711 = vsub.f32 %v671, 1.0
    %v712 = vsub.f32 %v673, 1.0
    %v713 = vsub.f32 %v675, 1.0
    %v714 = vsub.f32 %v677, 1.0
    %v715 = vsub.f32 %v679, 1.0
    %v716 = vsub.f32 %v681, 1.0
    %v717 = vsub.f32 %v683, 1.0
    %v718 = vsub.f32 %v685, 1.0
    %v719 = vsub.f32 %v687, 1.0
    %v720 = vsel %vm560, %v434, %v688
    %v721 = vsel %vm561, %v437, %v689
    %v722 = vsel %vm562, %v442, %v690
    %v723 = vsel %vm563, %v445, %v691
    %v724 = vsel %vm564, %v450, %v692
    %v725 = vsel %vm565, %v453, %v693
    %v726 = vsel %vm566, %v458, %v694
    %v727 = vsel %vm567, %v461, %v695
    %v728 = vsel %vm568, %v466, %v696
    %v729 = vsel %vm569, %v469, %v697
    %v730 = vsel %vm570, %v474, %v698
    %v731 = vsel %vm571, %v477, %v699
    %v732 = vsel %vm572, %v482, %v700
    %v733 = vsel %vm573, %v485, %v701
    %v734 = vsel %vm574, %v490, %v702
    %v735 = vsel %vm575, %v493, %v703
    %v736 = vsel %vm576, %v498, %v704
    %v737 = vsel %vm577, %v501, %v705
    %v738 = vsel %vm578, %v506, %v706
    %v739 = vsel %vm579, %v509, %v707
    %v740 = vsel %vm580, %v514, %v708
    %v741 = vsel %vm581, %v517, %v709
    %v742 = vsel %vm582, %v522, %v710
    %v743 = vsel %vm583, %v525, %v711
    %v744 = vsel %vm584, %v530, %v712
    %v745 = vsel %vm585, %v533, %v713
    %v746 = vsel %vm586, %v538, %v714
    %v747 = vsel %vm587, %v541, %v715
    %v748 = vsel %vm588, %v546, %v716
    %v749 = vsel %vm589, %v549, %v717
    %v750 = vsel %vm590, %v554, %v718
    %v751 = vsel %vm591, %v557, %v719
    %v752 = vld [vmem:[%s4] sm:$0xff]
    %v753 = vld [vmem:[%s4 + $0x8] sm:$0xff]
    %v754 = vld [vmem:[%s4 + $0x10] sm:$0xff]
    %v755 = vld [vmem:[%s4 + $0x18] sm:$0xff]
    %v756 = vld [vmem:[%s4 + $0x20] sm:$0xff]
    %v757 = vld [vmem:[%s4 + $0x28] sm:$0xff]
    %v758 = vld [vmem:[%s4 + $0x30] sm:$0xff]
    %v759 = vld [vmem:[%s4 + $0x38] sm:$0xff]
    %v760 = vld [vmem:[%s4 + $0x40] sm:$0xff]
    %v761 = vld [vmem:[%s4 + $0x48] sm:$0xff]
    %v762 = vld [vmem:[%s4 + $0x50] sm:$0xff]
    %v763 = vld [vmem:[%s4 + $0x58] sm:$0xff]
    %v764 = vld [vmem:[%s4 + $0x60] sm:$0xff]
    %v765 = vld [vmem:[%s4 + $0x68] sm:$0xff]
    %v766 = vld [vmem:[%s4 + $0x70] sm:$0xff]
    %v767 = vld [vmem:[%s4 + $0x78] sm:$0xff]
    %v768 = vld [vmem:[%s4 + $0x80] sm:$0xff]
    %v769 = vld [vmem:[%s4 + $0x88] sm:$0xff]
    %v770 = vld [vmem:[%s4 + $0x90] sm:$0xff]
    %v771 = vld [vmem:[%s4 + $0x98] sm:$0xff]
    %v772 = vld [vmem:[%s4 + $0xa0] sm:$0xff]
    %v773 = vld [vmem:[%s4 + $0xa8] sm:$0xff]
    %v774 = vld [vmem:[%s4 + $0xb0] sm:$0xff]
    %v775 = vld [vmem:[%s4 + $0xb8] sm:$0xff]
    %v776 = vld [vmem:[%s4 + $0xc0] sm:$0xff]
    %v777 = vld [vmem:[%s4 + $0xc8] sm:$0xff]
    %v778 = vld [vmem:[%s4 + $0xd0] sm:$0xff]
    %v779 = vld [vmem:[%s4 + $0xd8] sm:$0xff]
    %v780 = vld [vmem:[%s4 + $0xe0] sm:$0xff]
    %v781 = vld [vmem:[%s4 + $0xe8] sm:$0xff]
    %v782 = vld [vmem:[%s4 + $0xf0] sm:$0xff]
    %v783 = vld [vmem:[%s4 + $0xf8] sm:$0xff]
    %v784 = vpack.c.bf16 %v721, %v720
    %v785 = vpack.c.bf16 %v723, %v722
    %v786 = vpack.c.bf16 %v725, %v724
    %v787 = vpack.c.bf16 %v727, %v726
    %v788 = vpack.c.bf16 %v729, %v728
    %v789 = vpack.c.bf16 %v731, %v730
    %v790 = vpack.c.bf16 %v733, %v732
    %v791 = vpack.c.bf16 %v735, %v734
    %v792 = vpack.c.bf16 %v737, %v736
    %v793 = vpack.c.bf16 %v739, %v738
    %v794 = vpack.c.bf16 %v741, %v740
    %v795 = vpack.c.bf16 %v743, %v742
    %v796 = vpack.c.bf16 %v745, %v744
    %v797 = vpack.c.bf16 %v747, %v746
    %v798 = vpack.c.bf16 %v749, %v748
    %v799 = vpack.c.bf16 %v751, %v750
    %v800 = vld [vmem:[%s5] sm:$0xff]
    %v801 = vld [vmem:[%s5 + $0x8] sm:$0xff]
    %v802 = vld [vmem:[%s5 + $0x10] sm:$0xff]
    %v803 = vld [vmem:[%s5 + $0x18] sm:$0xff]
    %v804 = vld [vmem:[%s5 + $0x20] sm:$0xff]
    %v805 = vld [vmem:[%s5 + $0x28] sm:$0xff]
    %v806 = vld [vmem:[%s5 + $0x30] sm:$0xff]
    %v807 = vld [vmem:[%s5 + $0x38] sm:$0xff]
    %v808 = vld [vmem:[%s5 + $0x40] sm:$0xff]
    %v809 = vld [vmem:[%s5 + $0x48] sm:$0xff]
    %v810 = vld [vmem:[%s5 + $0x50] sm:$0xff]
    %v811 = vld [vmem:[%s5 + $0x58] sm:$0xff]
    %v812 = vld [vmem:[%s5 + $0x60] sm:$0xff]
    %v813 = vld [vmem:[%s5 + $0x68] sm:$0xff]
    %v814 = vld [vmem:[%s5 + $0x70] sm:$0xff]
    %v815 = vld [vmem:[%s5 + $0x78] sm:$0xff]
    %v816 = vld [vmem:[%s5 + $0x80] sm:$0xff]
    %v817 = vld [vmem:[%s5 + $0x88] sm:$0xff]
    %v818 = vld [vmem:[%s5 + $0x90] sm:$0xff]
    %v819 = vld [vmem:[%s5 + $0x98] sm:$0xff]
    %v820 = vld [vmem:[%s5 + $0xa0] sm:$0xff]
    %v821 = vld [vmem:[%s5 + $0xa8] sm:$0xff]
    %v822 = vld [vmem:[%s5 + $0xb0] sm:$0xff]
    %v823 = vld [vmem:[%s5 + $0xb8] sm:$0xff]
    %v824 = vld [vmem:[%s5 + $0xc0] sm:$0xff]
    %v825 = vld [vmem:[%s5 + $0xc8] sm:$0xff]
    %v826 = vld [vmem:[%s5 + $0xd0] sm:$0xff]
    %v827 = vld [vmem:[%s5 + $0xd8] sm:$0xff]
    %v828 = vld [vmem:[%s5 + $0xe0] sm:$0xff]
    %v829 = vld [vmem:[%s5 + $0xe8] sm:$0xff]
    %v830 = vld [vmem:[%s5 + $0xf0] sm:$0xff]
    %v831 = vld [vmem:[%s5 + $0xf8] sm:$0xff]
    %833 = vset.pattern.permute.xlu0 0
    %834 = vperm.xlu0 %833, %v800
    %v835 = vpop.permute.xlu0 %834
    %838 = vset.pattern.permute.xlu0 0
    %839 = vperm.xlu0 %838, %v801
    %v840 = vpop.permute.xlu0 %839
    %843 = vset.pattern.permute.xlu0 0
    %844 = vperm.xlu0 %843, %v802
    %v845 = vpop.permute.xlu0 %844
    %848 = vset.pattern.permute.xlu0 0
    %849 = vperm.xlu0 %848, %v803
    %v850 = vpop.permute.xlu0 %849
    %853 = vset.pattern.permute.xlu0 0
    %854 = vperm.xlu0 %853, %v804
    %v855 = vpop.permute.xlu0 %854
    %858 = vset.pattern.permute.xlu0 0
    %859 = vperm.xlu0 %858, %v805
    %v860 = vpop.permute.xlu0 %859
    %863 = vset.pattern.permute.xlu0 0
    %864 = vperm.xlu0 %863, %v806
    %v865 = vpop.permute.xlu0 %864
    %868 = vset.pattern.permute.xlu0 0
    %869 = vperm.xlu0 %868, %v807
    %v870 = vpop.permute.xlu0 %869
    %873 = vset.pattern.permute.xlu0 0
    %874 = vperm.xlu0 %873, %v808
    %v875 = vpop.permute.xlu0 %874
    %878 = vset.pattern.permute.xlu0 0
    %879 = vperm.xlu0 %878, %v809
    %v880 = vpop.permute.xlu0 %879
    %883 = vset.pattern.permute.xlu0 0
    %884 = vperm.xlu0 %883, %v810
    %v885 = vpop.permute.xlu0 %884
    %888 = vset.pattern.permute.xlu0 0
    %889 = vperm.xlu0 %888, %v811
    %v890 = vpop.permute.xlu0 %889
    %893 = vset.pattern.permute.xlu0 0
    %894 = vperm.xlu0 %893, %v812
    %v895 = vpop.permute.xlu0 %894
    %898 = vset.pattern.permute.xlu0 0
    %899 = vperm.xlu0 %898, %v813
    %v900 = vpop.permute.xlu0 %899
    %903 = vset.pattern.permute.xlu0 0
    %904 = vperm.xlu0 %903, %v814
    %v905 = vpop.permute.xlu0 %904
    %908 = vset.pattern.permute.xlu0 0
    %909 = vperm.xlu0 %908, %v815
    %v910 = vpop.permute.xlu0 %909
    %913 = vset.pattern.permute.xlu0 0
    %914 = vperm.xlu0 %913, %v816
    %v915 = vpop.permute.xlu0 %914
    %918 = vset.pattern.permute.xlu0 0
    %919 = vperm.xlu0 %918, %v817
    %v920 = vpop.permute.xlu0 %919
    %923 = vset.pattern.permute.xlu0 0
    %924 = vperm.xlu0 %923, %v818
    %v925 = vpop.permute.xlu0 %924
    %928 = vset.pattern.permute.xlu0 0
    %929 = vperm.xlu0 %928, %v819
    %v930 = vpop.permute.xlu0 %929
    %933 = vset.pattern.permute.xlu0 0
    %934 = vperm.xlu0 %933, %v820
    %v935 = vpop.permute.xlu0 %934
    %938 = vset.pattern.permute.xlu0 0
    %939 = vperm.xlu0 %938, %v821
    %v940 = vpop.permute.xlu0 %939
    %943 = vset.pattern.permute.xlu0 0
    %944 = vperm.xlu0 %943, %v822
    %v945 = vpop.permute.xlu0 %944
    %948 = vset.pattern.permute.xlu0 0
    %949 = vperm.xlu0 %948, %v823
    %v950 = vpop.permute.xlu0 %949
    %953 = vset.pattern.permute.xlu0 0
    %954 = vperm.xlu0 %953, %v824
    %v955 = vpop.permute.xlu0 %954
    %958 = vset.pattern.permute.xlu0 0
    %959 = vperm.xlu0 %958, %v825
    %v960 = vpop.permute.xlu0 %959
    %963 = vset.pattern.permute.xlu0 0
    %964 = vperm.xlu0 %963, %v826
    %v965 = vpop.permute.xlu0 %964
    %968 = vset.pattern.permute.xlu0 0
    %969 = vperm.xlu0 %968, %v827
    %v970 = vpop.permute.xlu0 %969
    %973 = vset.pattern.permute.xlu0 0
    %974 = vperm.xlu0 %973, %v828
    %v975 = vpop.permute.xlu0 %974
    %978 = vset.pattern.permute.xlu0 0
    %979 = vperm.xlu0 %978, %v829
    %v980 = vpop.permute.xlu0 %979
    %983 = vset.pattern.permute.xlu0 0
    %984 = vperm.xlu0 %983, %v830
    %v985 = vpop.permute.xlu0 %984
    %988 = vset.pattern.permute.xlu0 0
    %989 = vperm.xlu0 %988, %v831
    %v990 = vpop.permute.xlu0 %989
    %v1024 = vunpack.c.l.b16 %v752
    %v1025 = vunpack.c.h.b16 %v752
    %v1026 = vunpack.c.l.b16 %v753
    %v1027 = vunpack.c.h.b16 %v753
    %v1028 = vunpack.c.l.b16 %v754
    %v1029 = vunpack.c.h.b16 %v754
    %v1030 = vunpack.c.l.b16 %v755
    %v1031 = vunpack.c.h.b16 %v755
    %v1032 = vunpack.c.l.b16 %v756
    %v1033 = vunpack.c.h.b16 %v756
    %v1034 = vunpack.c.l.b16 %v757
    %v1035 = vunpack.c.h.b16 %v757
    %v1036 = vunpack.c.l.b16 %v758
    %v1037 = vunpack.c.h.b16 %v758
    %v1038 = vunpack.c.l.b16 %v759
    %v1039 = vunpack.c.h.b16 %v759
    %v1040 = vunpack.c.l.b16 %v760
    %v1041 = vunpack.c.h.b16 %v760
    %v1042 = vunpack.c.l.b16 %v761
    %v1043 = vunpack.c.h.b16 %v761
    %v1044 = vunpack.c.l.b16 %v762
    %v1045 = vunpack.c.h.b16 %v762
    %v1046 = vunpack.c.l.b16 %v763
    %v1047 = vunpack.c.h.b16 %v763
    %v1048 = vunpack.c.l.b16 %v764
    %v1049 = vunpack.c.h.b16 %v764
    %v1050 = vunpack.c.l.b16 %v765
    %v1051 = vunpack.c.h.b16 %v765
    %v1052 = vunpack.c.l.b16 %v766
    %v1053 = vunpack.c.h.b16 %v766
    %v1054 = vunpack.c.l.b16 %v767
    %v1055 = vunpack.c.h.b16 %v767
    %v1056 = vunpack.c.l.b16 %v768
    %v1057 = vunpack.c.h.b16 %v768
    %v1058 = vunpack.c.l.b16 %v769
    %v1059 = vunpack.c.h.b16 %v769
    %v1060 = vunpack.c.l.b16 %v770
    %v1061 = vunpack.c.h.b16 %v770
    %v1062 = vunpack.c.l.b16 %v771
    %v1063 = vunpack.c.h.b16 %v771
    %v1064 = vunpack.c.l.b16 %v772
    %v1065 = vunpack.c.h.b16 %v772
    %v1066 = vunpack.c.l.b16 %v773
    %v1067 = vunpack.c.h.b16 %v773
    %v1068 = vunpack.c.l.b16 %v774
    %v1069 = vunpack.c.h.b16 %v774
    %v1070 = vunpack.c.l.b16 %v775
    %v1071 = vunpack.c.h.b16 %v775
    %v1072 = vunpack.c.l.b16 %v776
    %v1073 = vunpack.c.h.b16 %v776
    %v1074 = vunpack.c.l.b16 %v777
    %v1075 = vunpack.c.h.b16 %v777
    %v1076 = vunpack.c.l.b16 %v778
    %v1077 = vunpack.c.h.b16 %v778
    %v1078 = vunpack.c.l.b16 %v779
    %v1079 = vunpack.c.h.b16 %v779
    %v1080 = vunpack.c.l.b16 %v780
    %v1081 = vunpack.c.h.b16 %v780
    %v1082 = vunpack.c.l.b16 %v781
    %v1083 = vunpack.c.h.b16 %v781
    %v1084 = vunpack.c.l.b16 %v782
    %v1085 = vunpack.c.h.b16 %v782
    %v1086 = vunpack.c.l.b16 %v783
    %v1087 = vunpack.c.h.b16 %v783
    %v1088 = vpack.c.b16 %v1026, %v1024
    %v1089 = vpack.c.b16 %v1027, %v1025
    %v1090 = vpack.c.b16 %v1030, %v1028
    %v1091 = vpack.c.b16 %v1031, %v1029
    %v1092 = vpack.c.b16 %v1034, %v1032
    %v1093 = vpack.c.b16 %v1035, %v1033
    %v1094 = vpack.c.b16 %v1038, %v1036
    %v1095 = vpack.c.b16 %v1039, %v1037
    %v1096 = vpack.c.b16 %v1042, %v1040
    %v1097 = vpack.c.b16 %v1043, %v1041
    %v1098 = vpack.c.b16 %v1046, %v1044
    %v1099 = vpack.c.b16 %v1047, %v1045
    %v1100 = vpack.c.b16 %v1050, %v1048
    %v1101 = vpack.c.b16 %v1051, %v1049
    %v1102 = vpack.c.b16 %v1054, %v1052
    %v1103 = vpack.c.b16 %v1055, %v1053
    %v1104 = vpack.c.b16 %v1058, %v1056
    %v1105 = vpack.c.b16 %v1059, %v1057
    %v1106 = vpack.c.b16 %v1062, %v1060
    %v1107 = vpack.c.b16 %v1063, %v1061
    %v1108 = vpack.c.b16 %v1066, %v1064
    %v1109 = vpack.c.b16 %v1067, %v1065
    %v1110 = vpack.c.b16 %v1070, %v1068
    %v1111 = vpack.c.b16 %v1071, %v1069
    %v1112 = vpack.c.b16 %v1074, %v1072
    %v1113 = vpack.c.b16 %v1075, %v1073
    %v1114 = vpack.c.b16 %v1078, %v1076
    %v1115 = vpack.c.b16 %v1079, %v1077
    %v1116 = vpack.c.b16 %v1082, %v1080
    %v1117 = vpack.c.b16 %v1083, %v1081
    %v1118 = vpack.c.b16 %v1086, %v1084
    %v1119 = vpack.c.b16 %v1087, %v1085
    %1152 = vmatprep.subr.bf16.mxu0 0
    %1153 = vmatpush1.bf16.msra.mxu0 %v784
    %1154 = vmatprep.subr.bf16.mxu0 0
    %1155 = vmatpush1.bf16.msra.mxu0 %v785
    %1156 = vmatprep.subr.bf16.mxu0 0
    %1157 = vmatpush1.bf16.msra.mxu0 %v786
    %1158 = vmatprep.subr.bf16.mxu0 0
    %1159 = vmatpush1.bf16.msra.mxu0 %v787
    %1160 = vmatprep.subr.bf16.mxu0 0
    %1161 = vmatpush1.bf16.msra.mxu0 %v788
    %1162 = vmatprep.subr.bf16.mxu0 0
    %1163 = vmatpush1.bf16.msra.mxu0 %v789
    %1164 = vmatprep.subr.bf16.mxu0 0
    %1165 = vmatpush1.bf16.msra.mxu0 %v790
    %1166 = vmatprep.subr.bf16.mxu0 0
    %1167 = vmatpush1.bf16.msra.mxu0 %v791
    %1168 = vmatprep.subr.bf16.mxu0 0
    %1169 = vmatpush1.bf16.msra.mxu0 %v792
    %1170 = vmatprep.subr.bf16.mxu0 0
    %1171 = vmatpush1.bf16.msra.mxu0 %v793
    %1172 = vmatprep.subr.bf16.mxu0 0
    %1173 = vmatpush1.bf16.msra.mxu0 %v794
    %1174 = vmatprep.subr.bf16.mxu0 0
    %1175 = vmatpush1.bf16.msra.mxu0 %v795
    %1176 = vmatprep.subr.bf16.mxu0 0
    %1177 = vmatpush1.bf16.msra.mxu0 %v796
    %1178 = vmatprep.subr.bf16.mxu0 0
    %1179 = vmatpush1.bf16.msra.mxu0 %v797
    %1180 = vmatprep.subr.bf16.mxu0 0
    %1181 = vmatpush1.bf16.msra.mxu0 %v798
    %1182 = vmatprep.subr.bf16.mxu0 0
    %1183 = vmatpush1.bf16.msra.mxu0 %v799
    %1184 = vmatprep.mubr.bf16.mxu0 %v1089
    %1185 = vmatmul.mubr.bf16.gmra.mrb[0].mxu0 %v1088
    %v1186 = vpop.f32.mrb[0].mxu0
    %v1187 = vadd.f32 %v835, %v1186
    %v1188 = vpop.f32.mrb[0].mxu0
    %v1189 = vpop.f32.mrb[0].mxu0
    %v1190 = vadd.f32 %v840, %v1189
    %v1191 = vpop.f32.mrb[0].mxu0
    %1192 = vmatprep.mubr.bf16.mxu0 %v1091
    %1193 = vmatmul.mubr.bf16.gmra.mrb[0].mxu0 %v1090
    %v1194 = vpop.f32.mrb[0].mxu0
    %v1195 = vadd.f32 %v845, %v1194
    %v1196 = vpop.f32.mrb[0].mxu0
    %v1197 = vpop.f32.mrb[0].mxu0
    %v1198 = vadd.f32 %v850, %v1197
    %v1199 = vpop.f32.mrb[0].mxu0
    %1200 = vmatprep.mubr.bf16.mxu0 %v1093
    %1201 = vmatmul.mubr.bf16.gmra.mrb[0].mxu0 %v1092
    %v1202 = vpop.f32.mrb[0].mxu0
    %v1203 = vadd.f32 %v855, %v1202
    %v1204 = vpop.f32.mrb[0].mxu0
    %v1205 = vpop.f32.mrb[0].mxu0
    %v1206 = vadd.f32 %v860, %v1205
    %v1207 = vpop.f32.mrb[0].mxu0
    %1208 = vmatprep.mubr.bf16.mxu0 %v1095
    %1209 = vmatmul.mubr.bf16.gmra.mrb[0].mxu0 %v1094
    %v1210 = vpop.f32.mrb[0].mxu0
    %v1211 = vadd.f32 %v865, %v1210
    %v1212 = vpop.f32.mrb[0].mxu0
    %v1213 = vpop.f32.mrb[0].mxu0
    %v1214 = vadd.f32 %v870, %v1213
    %v1215 = vpop.f32.mrb[0].mxu0
    %1216 = vmatprep.mubr.bf16.mxu0 %v1097
    %1217 = vmatmul.mubr.bf16.gmra.mrb[0].mxu0 %v1096
    %v1218 = vpop.f32.mrb[0].mxu0
    %v1219 = vadd.f32 %v875, %v1218
    %v1220 = vpop.f32.mrb[0].mxu0
    %v1221 = vpop.f32.mrb[0].mxu0
    %v1222 = vadd.f32 %v880, %v1221
    %v1223 = vpop.f32.mrb[0].mxu0
    %1224 = vmatprep.mubr.bf16.mxu0 %v1099
    %1225 = vmatmul.mubr.bf16.gmra.mrb[0].mxu0 %v1098
    %v1226 = vpop.f32.mrb[0].mxu0
    %v1227 = vadd.f32 %v885, %v1226
    %v1228 = vpop.f32.mrb[0].mxu0
    %v1229 = vpop.f32.mrb[0].mxu0
    %v1230 = vadd.f32 %v890, %v1229
    %v1231 = vpop.f32.mrb[0].mxu0
    %1232 = vmatprep.mubr.bf16.mxu0 %v1101
    %1233 = vmatmul.mubr.bf16.gmra.mrb[0].mxu0 %v1100
    %v1234 = vpop.f32.mrb[0].mxu0
    %v1235 = vadd.f32 %v895, %v1234
    %v1236 = vpop.f32.mrb[0].mxu0
    %v1237 = vpop.f32.mrb[0].mxu0
    %v1238 = vadd.f32 %v900, %v1237
    %v1239 = vpop.f32.mrb[0].mxu0
    %1240 = vmatprep.mubr.bf16.mxu0 %v1103
    %1241 = vmatmul.mubr.bf16.gmra.mrb[0].mxu0 %v1102
    %v1242 = vpop.f32.mrb[0].mxu0
    %v1243 = vadd.f32 %v905, %v1242
    %v1244 = vpop.f32.mrb[0].mxu0
    %v1245 = vpop.f32.mrb[0].mxu0
    %v1246 = vadd.f32 %v910, %v1245
    %v1247 = vpop.f32.mrb[0].mxu0
    %1248 = vmatprep.mubr.bf16.mxu0 %v1105
    %1249 = vmatmul.mubr.bf16.gmra.mrb[0].mxu0 %v1104
    %v1250 = vpop.f32.mrb[0].mxu0
    %v1251 = vadd.f32 %v915, %v1250
    %v1252 = vpop.f32.mrb[0].mxu0
    %v1253 = vpop.f32.mrb[0].mxu0
    %v1254 = vadd.f32 %v920, %v1253
    %v1255 = vpop.f32.mrb[0].mxu0
    %1256 = vmatprep.mubr.bf16.mxu0 %v1107
    %1257 = vmatmul.mubr.bf16.gmra.mrb[0].mxu0 %v1106
    %v1258 = vpop.f32.mrb[0].mxu0
    %v1259 = vadd.f32 %v925, %v1258
    %v1260 = vpop.f32.mrb[0].mxu0
    %v1261 = vpop.f32.mrb[0].mxu0
    %v1262 = vadd.f32 %v930, %v1261
    %v1263 = vpop.f32.mrb[0].mxu0
    %1264 = vmatprep.mubr.bf16.mxu0 %v1109
    %1265 = vmatmul.mubr.bf16.gmra.mrb[0].mxu0 %v1108
    %v1266 = vpop.f32.mrb[0].mxu0
    %v1267 = vadd.f32 %v935, %v1266
    %v1268 = vpop.f32.mrb[0].mxu0
    %v1269 = vpop.f32.mrb[0].mxu0
    %v1270 = vadd.f32 %v940, %v1269
    %v1271 = vpop.f32.mrb[0].mxu0
    %1272 = vmatprep.mubr.bf16.mxu0 %v1111
    %1273 = vmatmul.mubr.bf16.gmra.mrb[0].mxu0 %v1110
    %v1274 = vpop.f32.mrb[0].mxu0
    %v1275 = vadd.f32 %v945, %v1274
    %v1276 = vpop.f32.mrb[0].mxu0
    %v1277 = vpop.f32.mrb[0].mxu0
    %v1278 = vadd.f32 %v950, %v1277
    %v1279 = vpop.f32.mrb[0].mxu0
    %1280 = vmatprep.mubr.bf16.mxu0 %v1113
    %1281 = vmatmul.mubr.bf16.gmra.mrb[0].mxu0 %v1112
    %v1282 = vpop.f32.mrb[0].mxu0
    %v1283 = vadd.f32 %v955, %v1282
    %v1284 = vpop.f32.mrb[0].mxu0
    %v1285 = vpop.f32.mrb[0].mxu0
    %v1286 = vadd.f32 %v960, %v1285
    %v1287 = vpop.f32.mrb[0].mxu0
    %1288 = vmatprep.mubr.bf16.mxu0 %v1115
    %1289 = vmatmul.mubr.bf16.gmra.mrb[0].mxu0 %v1114
    %v1290 = vpop.f32.mrb[0].mxu0
    %v1291 = vadd.f32 %v965, %v1290
    %v1292 = vpop.f32.mrb[0].mxu0
    %v1293 = vpop.f32.mrb[0].mxu0
    %v1294 = vadd.f32 %v970, %v1293
    %v1295 = vpop.f32.mrb[0].mxu0
    %1296 = vmatprep.mubr.bf16.mxu0 %v1117
    %1297 = vmatmul.mubr.bf16.gmra.mrb[0].mxu0 %v1116
    %v1298 = vpop.f32.mrb[0].mxu0
    %v1299 = vadd.f32 %v975, %v1298
    %v1300 = vpop.f32.mrb[0].mxu0
    %v1301 = vpop.f32.mrb[0].mxu0
    %v1302 = vadd.f32 %v980, %v1301
    %v1303 = vpop.f32.mrb[0].mxu0
    %1304 = vmatprep.mubr.bf16.mxu0 %v1119
    %1305 = vmatmul.mubr.bf16.gmra.mrb[0].mxu0 %v1118
    %v1306 = vpop.f32.mrb[0].mxu0
    %v1307 = vadd.f32 %v985, %v1306
    %v1308 = vpop.f32.mrb[0].mxu0
    %v1309 = vpop.f32.mrb[0].mxu0
    %v1310 = vadd.f32 %v990, %v1309
    %v1311 = vpop.f32.mrb[0].mxu0
    %1312 = vdwg.mxu0
    %vm1313 = vcmp.gt.f32.partialorder %v1187, 0.0
    %vm1314 = vcmp.gt.f32.partialorder %v1190, 0.0
    %vm1315 = vcmp.gt.f32.partialorder %v1195, 0.0
    %vm1316 = vcmp.gt.f32.partialorder %v1198, 0.0
    %vm1317 = vcmp.gt.f32.partialorder %v1203, 0.0
    %vm1318 = vcmp.gt.f32.partialorder %v1206, 0.0
    %vm1319 = vcmp.gt.f32.partialorder %v1211, 0.0
    %vm1320 = vcmp.gt.f32.partialorder %v1214, 0.0
    %vm1321 = vcmp.gt.f32.partialorder %v1219, 0.0
    %vm1322 = vcmp.gt.f32.partialorder %v1222, 0.0
    %vm1323 = vcmp.gt.f32.partialorder %v1227, 0.0
    %vm1324 = vcmp.gt.f32.partialorder %v1230, 0.0
    %vm1325 = vcmp.gt.f32.partialorder %v1235, 0.0
    %vm1326 = vcmp.gt.f32.partialorder %v1238, 0.0
    %vm1327 = vcmp.gt.f32.partialorder %v1243, 0.0
    %vm1328 = vcmp.gt.f32.partialorder %v1246, 0.0
    %vm1329 = vcmp.gt.f32.partialorder %v1251, 0.0
    %vm1330 = vcmp.gt.f32.partialorder %v1254, 0.0
    %vm1331 = vcmp.gt.f32.partialorder %v1259, 0.0
    %vm1332 = vcmp.gt.f32.partialorder %v1262, 0.0
    %vm1333 = vcmp.gt.f32.partialorder %v1267, 0.0
    %vm1334 = vcmp.gt.f32.partialorder %v1270, 0.0
    %vm1335 = vcmp.gt.f32.partialorder %v1275, 0.0
    %vm1336 = vcmp.gt.f32.partialorder %v1278, 0.0
    %vm1337 = vcmp.gt.f32.partialorder %v1283, 0.0
    %vm1338 = vcmp.gt.f32.partialorder %v1286, 0.0
    %vm1339 = vcmp.gt.f32.partialorder %v1291, 0.0
    %vm1340 = vcmp.gt.f32.partialorder %v1294, 0.0
    %vm1341 = vcmp.gt.f32.partialorder %v1299, 0.0
    %vm1342 = vcmp.gt.f32.partialorder %v1302, 0.0
    %vm1343 = vcmp.gt.f32.partialorder %v1307, 0.0
    %vm1344 = vcmp.gt.f32.partialorder %v1310, 0.0
    %v1345 = vmin.f32 %v1187, 0.0
    %v1346 = vmin.f32 %v1190, 0.0
    %v1347 = vmin.f32 %v1195, 0.0
    %v1348 = vmin.f32 %v1198, 0.0
    %v1349 = vmin.f32 %v1203, 0.0
    %v1350 = vmin.f32 %v1206, 0.0
    %v1351 = vmin.f32 %v1211, 0.0
    %v1352 = vmin.f32 %v1214, 0.0
    %v1353 = vmin.f32 %v1219, 0.0
    %v1354 = vmin.f32 %v1222, 0.0
    %v1355 = vmin.f32 %v1227, 0.0
    %v1356 = vmin.f32 %v1230, 0.0
    %v1357 = vmin.f32 %v1235, 0.0
    %v1358 = vmin.f32 %v1238, 0.0
    %v1359 = vmin.f32 %v1243, 0.0
    %v1360 = vmin.f32 %v1246, 0.0
    %v1361 = vmin.f32 %v1251, 0.0
    %v1362 = vmin.f32 %v1254, 0.0
    %v1363 = vmin.f32 %v1259, 0.0
    %v1364 = vmin.f32 %v1262, 0.0
    %v1365 = vmin.f32 %v1267, 0.0
    %v1366 = vmin.f32 %v1270, 0.0
    %v1367 = vmin.f32 %v1275, 0.0
    %v1368 = vmin.f32 %v1278, 0.0
    %v1369 = vmin.f32 %v1283, 0.0
    %v1370 = vmin.f32 %v1286, 0.0
    %v1371 = vmin.f32 %v1291, 0.0
    %v1372 = vmin.f32 %v1294, 0.0
    %v1373 = vmin.f32 %v1299, 0.0
    %v1374 = vmin.f32 %v1302, 0.0
    %v1375 = vmin.f32 %v1307, 0.0
    %v1376 = vmin.f32 %v1310, 0.0
    %v1377 = vmul.f32 %v1345, 1.442695
    %v1378 = vpow.pop %v1377
    %v1379 = vmul.f32 %v1346, 1.442695
    %v1380 = vpow.pop %v1379
    %v1381 = vmul.f32 %v1347, 1.442695
    %v1382 = vpow.pop %v1381
    %v1383 = vmul.f32 %v1348, 1.442695
    %v1384 = vpow.pop %v1383
    %v1385 = vmul.f32 %v1349, 1.442695
    %v1386 = vpow.pop %v1385
    %v1387 = vmul.f32 %v1350, 1.442695
    %v1388 = vpow.pop %v1387
    %v1389 = vmul.f32 %v1351, 1.442695
    %v1390 = vpow.pop %v1389
    %v1391 = vmul.f32 %v1352, 1.442695
    %v1392 = vpow.pop %v1391
    %v1393 = vmul.f32 %v1353, 1.442695
    %v1394 = vpow.pop %v1393
    %v1395 = vmul.f32 %v1354, 1.442695
    %v1396 = vpow.pop %v1395
    %v1397 = vmul.f32 %v1355, 1.442695
    %v1398 = vpow.pop %v1397
    %v1399 = vmul.f32 %v1356, 1.442695
    %v1400 = vpow.pop %v1399
    %v1401 = vmul.f32 %v1357, 1.442695
    %v1402 = vpow.pop %v1401
    %v1403 = vmul.f32 %v1358, 1.442695
    %v1404 = vpow.pop %v1403
    %v1405 = vmul.f32 %v1359, 1.442695
    %v1406 = vpow.pop %v1405
    %v1407 = vmul.f32 %v1360, 1.442695
    %v1408 = vpow.pop %v1407
    %v1409 = vmul.f32 %v1361, 1.442695
    %v1410 = vpow.pop %v1409
    %v1411 = vmul.f32 %v1362, 1.442695
    %v1412 = vpow.pop %v1411
    %v1413 = vmul.f32 %v1363, 1.442695
    %v1414 = vpow.pop %v1413
    %v1415 = vmul.f32 %v1364, 1.442695
    %v1416 = vpow.pop %v1415
    %v1417 = vmul.f32 %v1365, 1.442695
    %v1418 = vpow.pop %v1417
    %v1419 = vmul.f32 %v1366, 1.442695
    %v1420 = vpow.pop %v1419
    %v1421 = vmul.f32 %v1367, 1.442695
    %v1422 = vpow.pop %v1421
    %v1423 = vmul.f32 %v1368, 1.442695
    %v1424 = vpow.pop %v1423
    %v1425 = vmul.f32 %v1369, 1.442695
    %v1426 = vpow.pop %v1425
    %v1427 = vmul.f32 %v1370, 1.442695
    %v1428 = vpow.pop %v1427
    %v1429 = vmul.f32 %v1371, 1.442695
    %v1430 = vpow.pop %v1429
    %v1431 = vmul.f32 %v1372, 1.442695
    %v1432 = vpow.pop %v1431
    %v1433 = vmul.f32 %v1373, 1.442695
    %v1434 = vpow.pop %v1433
    %v1435 = vmul.f32 %v1374, 1.442695
    %v1436 = vpow.pop %v1435
    %v1437 = vmul.f32 %v1375, 1.442695
    %v1438 = vpow.pop %v1437
    %v1439 = vmul.f32 %v1376, 1.442695
    %v1440 = vpow.pop %v1439
    %v1441 = vsub.f32 %v1378, 1.0
    %v1442 = vsub.f32 %v1380, 1.0
    %v1443 = vsub.f32 %v1382, 1.0
    %v1444 = vsub.f32 %v1384, 1.0
    %v1445 = vsub.f32 %v1386, 1.0
    %v1446 = vsub.f32 %v1388, 1.0
    %v1447 = vsub.f32 %v1390, 1.0
    %v1448 = vsub.f32 %v1392, 1.0
    %v1449 = vsub.f32 %v1394, 1.0
    %v1450 = vsub.f32 %v1396, 1.0
    %v1451 = vsub.f32 %v1398, 1.0
    %v1452 = vsub.f32 %v1400, 1.0
    %v1453 = vsub.f32 %v1402, 1.0
    %v1454 = vsub.f32 %v1404, 1.0
    %v1455 = vsub.f32 %v1406, 1.0
    %v1456 = vsub.f32 %v1408, 1.0
    %v1457 = vsub.f32 %v1410, 1.0
    %v1458 = vsub.f32 %v1412, 1.0
    %v1459 = vsub.f32 %v1414, 1.0
    %v1460 = vsub.f32 %v1416, 1.0
    %v1461 = vsub.f32 %v1418, 1.0
    %v1462 = vsub.f32 %v1420, 1.0
    %v1463 = vsub.f32 %v1422, 1.0
    %v1464 = vsub.f32 %v1424, 1.0
    %v1465 = vsub.f32 %v1426, 1.0
    %v1466 = vsub.f32 %v1428, 1.0
    %v1467 = vsub.f32 %v1430, 1.0
    %v1468 = vsub.f32 %v1432, 1.0
    %v1469 = vsub.f32 %v1434, 1.0
    %v1470 = vsub.f32 %v1436, 1.0
    %v1471 = vsub.f32 %v1438, 1.0
    %v1472 = vsub.f32 %v1440, 1.0
    %v1473 = vsel %vm1313, %v1187, %v1441
    %v1474 = vsel %vm1314, %v1190, %v1442
    %v1475 = vsel %vm1315, %v1195, %v1443
    %v1476 = vsel %vm1316, %v1198, %v1444
    %v1477 = vsel %vm1317, %v1203, %v1445
    %v1478 = vsel %vm1318, %v1206, %v1446
    %v1479 = vsel %vm1319, %v1211, %v1447
    %v1480 = vsel %vm1320, %v1214, %v1448
    %v1481 = vsel %vm1321, %v1219, %v1449
    %v1482 = vsel %vm1322, %v1222, %v1450
    %v1483 = vsel %vm1323, %v1227, %v1451
    %v1484 = vsel %vm1324, %v1230, %v1452
    %v1485 = vsel %vm1325, %v1235, %v1453
    %v1486 = vsel %vm1326, %v1238, %v1454
    %v1487 = vsel %vm1327, %v1243, %v1455
    %v1488 = vsel %vm1328, %v1246, %v1456
    %v1489 = vsel %vm1329, %v1251, %v1457
    %v1490 = vsel %vm1330, %v1254, %v1458
    %v1491 = vsel %vm1331, %v1259, %v1459
    %v1492 = vsel %vm1332, %v1262, %v1460
    %v1493 = vsel %vm1333, %v1267, %v1461
    %v1494 = vsel %vm1334, %v1270, %v1462
    %v1495 = vsel %vm1335, %v1275, %v1463
    %v1496 = vsel %vm1336, %v1278, %v1464
    %v1497 = vsel %vm1337, %v1283, %v1465
    %v1498 = vsel %vm1338, %v1286, %v1466
    %v1499 = vsel %vm1339, %v1291, %v1467
    %v1500 = vsel %vm1340, %v1294, %v1468
    %v1501 = vsel %vm1341, %v1299, %v1469
    %v1502 = vsel %vm1342, %v1302, %v1470
    %v1503 = vsel %vm1343, %v1307, %v1471
    %v1504 = vsel %vm1344, %v1310, %v1472
    %v1505 = vld [vmem:[%s6] sm:$0xff]
    %v1506 = vld [vmem:[%s6 + $0x8] sm:$0xff]
    %v1507 = vpack.c.bf16 %v1474, %v1473
    %v1508 = vpack.c.bf16 %v1476, %v1475
    %v1509 = vpack.c.bf16 %v1478, %v1477
    %v1510 = vpack.c.bf16 %v1480, %v1479
    %v1511 = vpack.c.bf16 %v1482, %v1481
    %v1512 = vpack.c.bf16 %v1484, %v1483
    %v1513 = vpack.c.bf16 %v1486, %v1485
    %v1514 = vpack.c.bf16 %v1488, %v1487
    %v1515 = vpack.c.bf16 %v1490, %v1489
    %v1516 = vpack.c.bf16 %v1492, %v1491
    %v1517 = vpack.c.bf16 %v1494, %v1493
    %v1518 = vpack.c.bf16 %v1496, %v1495
    %v1519 = vpack.c.bf16 %v1498, %v1497
    %v1520 = vpack.c.bf16 %v1500, %v1499
    %v1521 = vpack.c.bf16 %v1502, %v1501
    %v1522 = vpack.c.bf16 %v1504, %v1503
    %v1523 = vld [vmem:[%s7] sm:$0xff]
    %v1524 = vld [vmem:[%s7 + $0x8] sm:$0xff]
    %1526 = vset.pattern.permute.xlu0 0
    %1527 = vperm.xlu0 %1526, %v1523
    %v1528 = vpop.permute.xlu0 %1527
    %1531 = vset.pattern.permute.xlu0 0
    %1532 = vperm.xlu0 %1531, %v1524
    %v1533 = vpop.permute.xlu0 %1532
    %v1537 = vunpack.c.l.b16 %v1505
    %v1538 = vunpack.c.h.b16 %v1505
    %v1539 = vunpack.c.l.b16 %v1506
    %v1540 = vunpack.c.h.b16 %v1506
    %v1541 = vpack.c.b16 %v1539, %v1537
    %v1542 = vpack.c.b16 %v1540, %v1538
    %1545 = vmatprep.subr.bf16.mxu0 0
    %1546 = vmatpush1.bf16.msra.mxu0 %v1507
    %1547 = vmatprep.subr.bf16.mxu0 0
    %1548 = vmatpush1.bf16.msra.mxu0 %v1508
    %1549 = vmatprep.subr.bf16.mxu0 0
    %1550 = vmatpush1.bf16.msra.mxu0 %v1509
    %1551 = vmatprep.subr.bf16.mxu0 0
    %1552 = vmatpush1.bf16.msra.mxu0 %v1510
    %1553 = vmatprep.subr.bf16.mxu0 0
    %1554 = vmatpush1.bf16.msra.mxu0 %v1511
    %1555 = vmatprep.subr.bf16.mxu0 0
    %1556 = vmatpush1.bf16.msra.mxu0 %v1512
    %1557 = vmatprep.subr.bf16.mxu0 0
    %1558 = vmatpush1.bf16.msra.mxu0 %v1513
    %1559 = vmatprep.subr.bf16.mxu0 0
    %1560 = vmatpush1.bf16.msra.mxu0 %v1514
    %1561 = vmatprep.subr.bf16.mxu0 0
    %1562 = vmatpush1.bf16.msra.mxu0 %v1515
    %1563 = vmatprep.subr.bf16.mxu0 0
    %1564 = vmatpush1.bf16.msra.mxu0 %v1516
    %1565 = vmatprep.subr.bf16.mxu0 0
    %1566 = vmatpush1.bf16.msra.mxu0 %v1517
    %1567 = vmatprep.subr.bf16.mxu0 0
    %1568 = vmatpush1.bf16.msra.mxu0 %v1518
    %1569 = vmatprep.subr.bf16.mxu0 0
    %1570 = vmatpush1.bf16.msra.mxu0 %v1519
    %1571 = vmatprep.subr.bf16.mxu0 0
    %1572 = vmatpush1.bf16.msra.mxu0 %v1520
    %1573 = vmatprep.subr.bf16.mxu0 0
    %1574 = vmatpush1.bf16.msra.mxu0 %v1521
    %1575 = vmatprep.subr.bf16.mxu0 0
    %1576 = vmatpush1.bf16.msra.mxu0 %v1522
    %1577 = vmatprep.mubr.bf16.mxu0 %v1542
    %1578 = vmatmul.mubr.bf16.gmra.mrb[0].mxu0 %v1541
    %v1579 = vpop.f32.mrb[0].mxu0
    %v1580 = vadd.f32 %v1528, %v1579
    %v1581 = vpop.f32.mrb[0].mxu0
    %v1582 = vpop.f32.mrb[0].mxu0
    %v1583 = vadd.f32 %v1533, %v1582
    %v1584 = vpop.f32.mrb[0].mxu0
    %1585 = vdwg.mxu0
    %v1586 = vxor.u32 %v1580, 2147483648
    %v1587 = vxor.u32 %v1583, 2147483648
    %v1588 = vmul.f32 %v1586, 1.442695
    %v1589 = vpow.pop %v1588
    %v1590 = vmul.f32 %v1587, 1.442695
    %v1591 = vpow.pop %v1590
    %v1592 = vadd.f32 %v1589, 1.0
    %v1593 = vadd.f32 %v1591, 1.0
    %v1594 = vrcp.pop %v1592
    %v1595 = vmul.f32 1.0, %v1594
    %v1596 = vrcp.pop %v1593
    %v1597 = vmul.f32 1.0, %v1596
    %v1598 = vld [vmem:[%s8] sm:$0xf]
    %v1599 = vpack.c.bf16 %v1597, %v1595
    %v1600 = vld [vmem:[%s9] sm:$0xff]
    %1602 = vset.pattern.permute.xlu0 0
    %1603 = vperm.xlu0 %1602, %v1600
    %v1604 = vpop.permute.xlu0 %1603
    %vm1606 = vcmask 130048
    %v1608 = vsel %vm1606, %v1598, 0
    %1610 = vmatprep.subr.bf16.mxu0 0
    %1611 = vmatpush1.bf16.msra.mxu0 %v1599
    %1612 = vmatprep.subr.bf16.mxu0 0
    %1613 = vmatpush1.bf16.msra.mxu0 0
    %1614 = vmatprep.subr.bf16.mxu0 0
    %1615 = vmatpush1.bf16.msra.mxu0 0
    %1616 = vmatprep.subr.bf16.mxu0 0
    %1617 = vmatpush1.bf16.msra.mxu0 0
    %1618 = vmatprep.subr.bf16.mxu0 0
    %1619 = vmatpush1.bf16.msra.mxu0 0
    %1620 = vmatprep.subr.bf16.mxu0 0
    %1621 = vmatpush1.bf16.msra.mxu0 0
    %1622 = vmatprep.subr.bf16.mxu0 0
    %1623 = vmatpush1.bf16.msra.mxu0 0
    %1624 = vmatprep.subr.bf16.mxu0 0
    %1625 = vmatpush1.bf16.msra.mxu0 0
    %1626 = vmatprep.subr.bf16.mxu0 0
    %1627 = vmatpush1.bf16.msra.mxu0 0
    %1628 = vmatprep.subr.bf16.mxu0 0
    %1629 = vmatpush1.bf16.msra.mxu0 0
    %1630 = vmatprep.subr.bf16.mxu0 0
    %1631 = vmatpush1.bf16.msra.mxu0 0
    %1632 = vmatprep.subr.bf16.mxu0 0
    %1633 = vmatpush1.bf16.msra.mxu0 0
    %1634 = vmatprep.subr.bf16.mxu0 0
    %1635 = vmatpush1.bf16.msra.mxu0 0
    %1636 = vmatprep.subr.bf16.mxu0 0
    %1637 = vmatpush1.bf16.msra.mxu0 0
    %1638 = vmatprep.subr.bf16.mxu0 0
    %1639 = vmatpush1.bf16.msra.mxu0 0
    %1640 = vmatprep.subr.bf16.mxu0 0
    %1641 = vmatpush1.bf16.msra.mxu0 0
    %1642 = vmatprep.mubr.bf16.mxu0 0
    %1643 = vmatmul.mubr.bf16.gmra.mrb[0].mxu0 %v1608
    %v1644 = vpop.f32.mrb[0].mxu0
    %v1645 = vadd.f32 %v1604, %v1644
    %v1646 = vpop.f32.mrb[0].mxu0
    %v1647 = vpop.f32.mrb[0].mxu0
    %v1648 = vpop.f32.mrb[0].mxu0
    %1649 = vdwg.mxu0
    %v1650 = vld [vmem:[%s1] sm:$0xff]
    %v1651 = vsub.f32 %v1645, %v1650
    %v1652 = vmul.f32 %v40, %v40
    %v1653 = vrot.slane %v1652, 4
    %v1654 = vadd.f32 %v1652, %v1653
    %v1655 = vrot.slane %v1654, 2
    %v1656 = vadd.f32 %v1654, %v1655
    %v1657 = vrot.slane %v1656, 1
    %v1658 = vadd.f32 %v1656, %v1657
    %v1659 = vadd.f32 %v1658, 1e-12
    %v1660 = vrsqrt.pop %v1659
    %v1661 = vmul.f32 %v1651, %v40
    %v1662 = vrot.slane %v1661, 4
    %v1663 = vadd.f32 %v1661, %v1662
    %v1664 = vrot.slane %v1663, 2
    %v1665 = vadd.f32 %v1663, %v1664
    %v1666 = vrot.slane %v1665, 1
    %v1667 = vadd.f32 %v1665, %v1666
    %v1668 = vmul.f32 %v1667, %v1660
    %v1669 = vmul.f32 %v1668, %v1660
    %v1670 = vmul.f32 %v1669, %v40
    %v1671 = vsub.f32 %v1651, %v1670
    %v1672 = vmul.f32 %v1671, %v1671
    %v1673 = vrot.slane %v1672, 4
    %v1674 = vadd.f32 %v1672, %v1673
    %v1675 = vrot.slane %v1674, 2
    %v1676 = vadd.f32 %v1674, %v1675
    %v1677 = vrot.slane %v1676, 1
    %v1678 = vadd.f32 %v1676, %v1677
    %v1679 = vrsqrt.pop %v1678
    %v1680 = vmul.f32 %v1678, %v1679
    %vm1681 = vcmp.eq.f32.partialorder %v1678, inf
    %v1682 = vsel %vm1681, %v1678, %v1680
    %vm1683 = vcmp.eq.f32.partialorder %v1678, 0.0
    %v1684 = vand.u32 %v1678, 2147483648
    %v1685 = vsel %vm1683, %v1684, %v1682
    %v1686 = vmul.f32 %v1685, 0.1
    %v1687 = vadd.f32 %v1668, %v1686
    %1688 = vst [vmem:[#allocation2] sm:$0x1] %v1687
    %1689 = vst [vmem:[%s11] sm:$0xff] %v1595
    %1690 = vst [vmem:[%s11 + $0x8] sm:$0xff] %v1597
    %1691 = vst [vmem:[%s12] sm:$0xff] %v1645
    // Predicated region
    $region42: #{dcem_forward.1} parent=1 // pred_check
      _
    $region43: #{dcem_forward.1} parent=1 // pred_check_branch
      %1693 = sbr.rel (0) target = $region45
    $region44: #{dcem_forward.1} parent=1 // pred_region
      %s1695 = ssub.s32 16, 16
      %1696 = vsyncadd [#allocation3], %s1695
      %s1698 = sshll.u32 [#allocation2], 4
      %s1699 = int_to_ptr.vmem [resolvable:$true] %s1698
      %1701 = dma.vmem_to_hbm [thread:$0]  %s1699, 16, %s10, [#allocation3]
    $region45: #{dcem_forward.1} parent=1 // pred_fallthru
      _
    // Predicated region
    $region46: #{dcem_forward.1} parent=1 // pred_check
      _
    $region47: #{dcem_forward.1} parent=1 // pred_check_branch
      %1703 = sbr.rel (0) target = $region49
    $region48: #{dcem_forward.1} parent=1 // pred_region
      _
    $region49: #{dcem_forward.1} parent=1 // pred_fallthru
      _
    // Predicated region
    $region50: #{dcem_forward.1} parent=1 // pred_check
      _
    $region51: #{dcem_forward.1} parent=1 // pred_check_branch
      %1705 = sbr.rel (0) target = $region53
    $region52: #{dcem_forward.1} parent=1 // pred_region
      _
    $region53: #{dcem_forward.1} parent=1 // pred_fallthru
      _
    // Predicated region
    $region54: #{dcem_forward.1} parent=1 // pred_check
      _
    $region55: #{dcem_forward.1} parent=1 // pred_check_branch
      %1707 = sbr.rel (0) target = $region57
    $region56: #{dcem_forward.1} parent=1 // pred_region
      %1708 = dma.done [#allocation3], 16
    $region57: #{dcem_forward.1} parent=1 // pred_fallthru
      _
    // Predicated region
    $region58: #{dcem_forward.1} parent=1 // pred_check
      _
    $region59: #{dcem_forward.1} parent=1 // pred_check_branch
      %1710 = sbr.rel (0) target = $region61
    $region60: #{dcem_forward.1} parent=1 // pred_region
      _
    $region61: #{dcem_forward.1} parent=1 // pred_fallthru
      _
    // Predicated region
    $region62: #{dcem_forward.1} parent=1 // pred_check
      _
    $region63: #{dcem_forward.1} parent=1 // pred_check_branch
      %1712 = sbr.rel (0) target = $region65
    $region64: #{dcem_forward.1} parent=1 // pred_region
      _
    $region65: #{dcem_forward.1} parent=1 // pred_fallthru
      _
    %1713 = vsyncpa [#allocation3], 1

</llo_original>
